<compile_context>
chip_gen: v5e
topology: v5e:2x2
jax: 0.10.0
libtpu: 0.0.40
codegen_flags: <defaults>
</compile_context>

<pallas_src>
import functools

import jax
import jax.numpy as jnp
from jax.experimental import pallas as pl
from jax.experimental.pallas import tpu as pltpu


def _mrconv_kernel(x_ref, e0_ref, e1_ref, wx_ref, wr_ref, b_ref, o_ref, sel_ref,
                   *, center_is_self):
    # x_ref:   (1, C, N)       f32  all vertex features (whole N needed for the gather rows)
    # e0_ref:  (1, K, Tn)      i32  "j" (neighbor) indices for this vertex tile
    # e1_ref:  (1, K, Tn)      i32  "i" (center)   indices for this vertex tile
    # wx_ref:  (Cout, C)       f32  de-interleaved grouped-conv weight hitting x channels
    # wr_ref:  (Cout, C)       f32  de-interleaved grouped-conv weight hitting rel channels
    # b_ref:   (Cout, 1)       f32  bias
    # o_ref:   (1, Cout, Tn)   f32
    # sel_ref: (N, K*Tn)       f32  VMEM scratch: signed one-hot gather selector
    x = x_ref[0]                                   # (C, N)
    N = x.shape[1]
    K = e0_ref.shape[1]
    Tn = o_ref.shape[2]

    # Tile-local column window of x for the output conv (and the identity fast path).
    if Tn == N:
        x_tile = x
    else:
        col0 = pl.multiple_of(pl.program_id(1) * Tn, Tn)
        x_tile = x_ref[0, :, pl.ds(col0, Tn)]      # (C, Tn)

    # Tile-local row iota only: (N, Tn), reused across all K neighbours.
    iota_m = jax.lax.broadcasted_iota(jnp.int32, (N, Tn), 0)

    # Build signed one-hot selectors for all K neighbours directly into the wide scratch
    # buffer at lane-aligned offsets (no intermediate parts list / concatenate copy).
    e0 = e0_ref[0]                                 # (K, Tn)
    e1 = None if center_is_self else e1_ref[0]     # (K, Tn)
    for k in range(K):
        idx_j = e0[k:k + 1, :]                     # (1, Tn)
        if center_is_self:
            part = (iota_m == idx_j).astype(jnp.float32)
        else:
            idx_i = e1[k:k + 1, :]
            # sel[m, n] = [m == j_k(n)] - [m == i_k(n)]  ->  (x @ sel)[c, n] = x_j - x_i
            part = ((iota_m == idx_j).astype(jnp.float32)
                    - (iota_m == idx_i).astype(jnp.float32))
        sel_ref[:, k * Tn:(k + 1) * Tn] = part

    # One wide MXU matmul for all K (fused j/i) gathers.
    d_all = jnp.dot(x, sel_ref[...], preferred_element_type=jnp.float32)   # (C, K*Tn)

    # Running max over the K lane-aligned slices.
    rel = d_all[:, 0:Tn]
    for k in range(1, K):
        rel = jnp.maximum(rel, d_all[:, k * Tn:(k + 1) * Tn])
    if center_is_self:
        rel = rel - x_tile                          # max_k(x_j) - x_i with x_i == x

    # Grouped 1x1x1 conv fused as two dense matmuls (block-diagonal weights folded in
    # the wrapper): y = Wx @ x + Wr @ rel + b, then ReLU.
    y = (jnp.dot(wx_ref[...], x_tile, preferred_element_type=jnp.float32)
         + jnp.dot(wr_ref[...], rel, preferred_element_type=jnp.float32)
         + b_ref[...])
    o_ref[0] = jnp.maximum(y, 0.0)


def _pick_tile_n(N, K):
    """Largest lane-dense vertex tile that divides N and keeps the selector small in VMEM."""
    if N <= 512:
        return N
    for cand in (512, 256, 128):
        # selector scratch f32 (N, K*cand) + iota/compare temps ~ 8*N*K*cand bytes
        if N % cand == 0 and 8 * N * K * cand <= (16 << 20):
            return cand
    for cand in (128, 256, 512):
        if N % cand == 0:
            return cand
    return N


def mrconv_forward(x, edge_index, weight, bias, groups=4, tile_n=None, center_is_self=False):
    """x: (B, C, N, 1) f32; edge_index: (2, B, N, K) int; weight: (Cout, 2C//groups); bias: (Cout,).

    center_is_self=True enables the fast path for graphs where edge_index[1][b, n, k] == n
    (the standard NexToU/ViG dense-knn construction); edge_index[1] is then ignored.
    """
    B, C, N, last = x.shape
    assert last == 1
    K = edge_index.shape[-1]
    Cout = weight.shape[0]
    Cin2 = 2 * C
    og, ig = Cout // groups, Cin2 // groups

    # Build the block-diagonal full weight of the grouped conv, de-interleave it
    # (the conv sees channel order [x_0, rel_0, x_1, rel_1, ...]) and split into
    # Wx / Wr so the kernel does two dense matmuls (no in-kernel concat / slicing).
    w_full = jnp.zeros((Cout, Cin2), jnp.float32)
    for g in range(groups):
        w_full = w_full.at[g * og:(g + 1) * og, g * ig:(g + 1) * ig].set(
            weight[g * og:(g + 1) * og, :].astype(jnp.float32))
    wx = w_full[:, 0::2]                               # (Cout, C)  hits x channels
    wr = w_full[:, 1::2]                               # (Cout, C)  hits rel channels

    xs = x[..., 0].astype(jnp.float32)                                   # (B, C, N)
    e0 = jnp.transpose(edge_index[0], (0, 2, 1)).astype(jnp.int32)       # (B, K, N)  "j"
    e1 = jnp.transpose(edge_index[1], (0, 2, 1)).astype(jnp.int32)       # (B, K, N)  "i"
    b2 = bias.reshape(Cout, 1).astype(jnp.float32)

    if tile_n is None:
        tile_n = _pick_tile_n(N, K)
    assert N % tile_n == 0 and (tile_n % 128 == 0 or tile_n == N), \
        "tile_n must divide N and be lane-dense (multiple of 128) or equal N"
    nt = N // tile_n

    kernel = functools.partial(_mrconv_kernel, center_is_self=center_is_self)

    out = pl.pallas_call(
        kernel,
        out_shape=jax.ShapeDtypeStruct((B, Cout, N), jnp.float32),
        grid_spec=pltpu.PrefetchScalarGridSpec(
            num_scalar_prefetch=0,
            grid=(B, nt),
            in_specs=[
                # x: full vertex axis resident; block index constant in t -> no re-DMA across tiles
                pl.BlockSpec((1, C, N), lambda b, t: (b, 0, 0)),
                pl.BlockSpec((1, K, tile_n), lambda b, t: (b, 0, t)),
                pl.BlockSpec((1, K, tile_n), lambda b, t: (b, 0, t)),
                # weights / bias: constant block index -> fetched once
                pl.BlockSpec((Cout, C), lambda b, t: (0, 0)),
                pl.BlockSpec((Cout, C), lambda b, t: (0, 0)),
                pl.BlockSpec((Cout, 1), lambda b, t: (0, 0)),
            ],
            out_specs=pl.BlockSpec((1, Cout, tile_n), lambda b, t: (b, 0, t)),
            scratch_shapes=[pltpu.VMEM((N, K * tile_n), jnp.float32)],
        ),
        compiler_params=pltpu.CompilerParams(
            dimension_semantics=("parallel", "parallel")),
    )(xs, e0, e1, wx, wr, b2)

    # nn.Conv3d branch: input was unsqueezed at dim 4 -> output is (B, Cout, N, 1, 1)
    return out.reshape(B, Cout, N, 1, 1)


def mrconv_ref(x, edge_index, weight, bias, groups=4):
    """Pure-JAX reference mirroring the PyTorch forward."""
    B, C, N, _ = x.shape
    Cout = weight.shape[0]
    xs = x[..., 0]
    gather = jax.vmap(lambda xb, ib: xb[:, ib])        # (C,N),(N,K)->(C,N,K)
    x_j = gather(xs, edge_index[0])
    x_i = gather(xs, edge_index[1])
    rel = jnp.max(x_j - x_i, axis=-1)                  # (B, C, N)
    z = jnp.stack([xs, rel], axis=2).reshape(B, 2 * C, N)   # interleaved channels
    og, ig = Cout // groups, 2 * C // groups
    zg = z.reshape(B, groups, ig, N)
    wg = weight.reshape(groups, og, ig)
    y = jnp.einsum('bgin,goi->bgon', zg, wg).reshape(B, Cout, N) + bias[None, :, None]
    y = jnp.maximum(y, 0.0)
    return y.reshape(B, Cout, N, 1, 1)


if __name__ == "__main__":
    B, C, N, K = 2, 8, 256, 8          # batch, in_channels, vertices, neighbors
    Cout, groups = 16, 4

    key = jax.random.PRNGKey(0)
    kx, ke0, ke1, kw, kb = jax.random.split(key, 5)
    x = jax.random.normal(kx, (B, C, N, 1), dtype=jnp.float32)
    e_j = jax.random.randint(ke0, (B, N, K), 0, N, dtype=jnp.int32)
    e_i = jax.random.randint(ke1, (B, N, K), 0, N, dtype=jnp.int32)
    edge_index = jnp.stack([e_j, e_i], axis=0)                      # (2, B, N, K)

    # Conv3d(2C, Cout, kernel_size=1, groups=4, bias=True) params (deterministic synthetic init)
    weight = 0.1 * jax.random.normal(kw, (Cout, 2 * C // groups), dtype=jnp.float32)
    bias = 0.1 * jax.random.normal(kb, (Cout,), dtype=jnp.float32)

    # General path (arbitrary center indices), with the vertex axis tiled (grid = (B, 2)).
    out = mrconv_forward(x, edge_index, weight, bias, groups=groups, tile_n=128)
    out = jax.block_until_ready(out)
    ref = mrconv_ref(x, edge_index, weight, bias, groups=groups)
    assert out.shape == (B, Cout, N, 1, 1)
    assert jnp.allclose(out, ref, atol=1e-4, rtol=1e-4), "mismatch vs reference (general path)"

    # Fast path: center index is the vertex itself (NexToU/ViG dense-knn graphs).
    e_i_id = jnp.broadcast_to(jnp.arange(N, dtype=jnp.int32)[None, :, None], (B, N, K))
    edge_index_id = jnp.stack([e_j, e_i_id], axis=0)
    out_id = mrconv_forward(x, edge_index_id, weight, bias, groups=groups,
                            tile_n=128, center_is_self=True)
    out_id = jax.block_until_ready(out_id)
    ref_id = mrconv_ref(x, edge_index_id, weight, bias, groups=groups)
    assert jnp.allclose(out_id, ref_id, atol=1e-4, rtol=1e-4), "mismatch vs reference (identity path)"

    print("KERNEL_OK")
</pallas_src>

<mosaic_0001>
module attributes {stable_mosaic.version = 11 : i64} {
  func.func @_mrconv_kernel(%arg0: i32, %arg1: i32, %arg2: memref<1x8x256xf32, #tpu.memory_space<vmem>>, %arg3: memref<1x8x128xi32, #tpu.memory_space<vmem>>, %arg4: memref<1x8x128xi32, #tpu.memory_space<vmem>>, %arg5: memref<16x8xf32, #tpu.memory_space<vmem>>, %arg6: memref<16x8xf32, #tpu.memory_space<vmem>>, %arg7: memref<16x1xf32, #tpu.memory_space<vmem>>, %arg8: memref<1x16x128xf32, #tpu.memory_space<vmem>>, %arg9: memref<256x1024xf32, #tpu.memory_space<vmem>>) attributes {dimension_semantics = [#tpu.dimension_semantics<parallel>, #tpu.dimension_semantics<parallel>], iteration_bounds = array<i64: 2, 2>, scalar_prefetch = 0 : i64, scratch_operands = 1 : i64, tpu.core_type = #tpu.core_type<tc>, window_params = [{transform_indices = @transform_0, window_bounds = array<i64: 1, 8, 256>}, {transform_indices = @transform_1, window_bounds = array<i64: 1, 8, 128>}, {transform_indices = @transform_2, window_bounds = array<i64: 1, 8, 128>}, {pipeline_mode = #tpu.pipeline_mode<synchronous>, transform_indices = @transform_3, window_bounds = array<i64: 16, 8>}, {pipeline_mode = #tpu.pipeline_mode<synchronous>, transform_indices = @transform_4, window_bounds = array<i64: 16, 8>}, {pipeline_mode = #tpu.pipeline_mode<synchronous>, transform_indices = @transform_5, window_bounds = array<i64: 16, 1>}, {transform_indices = @transform_6, window_bounds = array<i64: 1, 16, 128>}]} {
    %c0 = arith.constant 0 : index
    %c0_0 = arith.constant 0 : index
    %c0_1 = arith.constant 0 : index
    %0 = vector.load %arg2[%c0, %c0_0, %c0_1] : memref<1x8x256xf32, #tpu.memory_space<vmem>>, vector<1x8x256xf32>
    %1 = vector.shape_cast %0 : vector<1x8x256xf32> to vector<8x256xf32>
    %c128_i32 = arith.constant 128 : i32
    %2 = arith.muli %arg1, %c128_i32 : i32
    %3 = tpu.assume_multiple %2, 128 : i32
    %c0_2 = arith.constant 0 : index
    %c0_3 = arith.constant 0 : index
    %4 = arith.index_cast %3 : i32 to index
    %5 = vector.load %arg2[%c0_2, %c0_3, %4] : memref<1x8x256xf32, #tpu.memory_space<vmem>>, vector<1x8x128xf32>
    %6 = vector.shape_cast %5 : vector<1x8x128xf32> to vector<8x128xf32>
    %7 = tpu.iota {dimensions = array<i32: 0>} : vector<256x128xi32>
    %c0_4 = arith.constant 0 : index
    %c0_5 = arith.constant 0 : index
    %c0_6 = arith.constant 0 : index
    %8 = vector.load %arg3[%c0_4, %c0_5, %c0_6] : memref<1x8x128xi32, #tpu.memory_space<vmem>>, vector<1x8x128xi32>
    %9 = vector.shape_cast %8 : vector<1x8x128xi32> to vector<8x128xi32>
    %c0_7 = arith.constant 0 : index
    %c0_8 = arith.constant 0 : index
    %c0_9 = arith.constant 0 : index
    %10 = vector.load %arg4[%c0_7, %c0_8, %c0_9] : memref<1x8x128xi32, #tpu.memory_space<vmem>>, vector<1x8x128xi32>
    %11 = vector.shape_cast %10 : vector<1x8x128xi32> to vector<8x128xi32>
    %12 = vector.extract_strided_slice %9 {offsets = [0, 0], sizes = [1, 128], strides = [1, 1]} : vector<8x128xi32> to vector<1x128xi32>
    %13 = vector.extract_strided_slice %11 {offsets = [0, 0], sizes = [1, 128], strides = [1, 1]} : vector<8x128xi32> to vector<1x128xi32>
    %14 = vector.broadcast %12 : vector<1x128xi32> to vector<256x128xi32>
    %15 = arith.cmpi eq, %7, %14 : vector<256x128xi32>
    %16 = arith.extui %15 : vector<256x128xi1> to vector<256x128xi32>
    %17 = arith.sitofp %16 : vector<256x128xi32> to vector<256x128xf32>
    %18 = vector.broadcast %13 : vector<1x128xi32> to vector<256x128xi32>
    %19 = arith.cmpi eq, %7, %18 : vector<256x128xi32>
    %20 = arith.extui %19 : vector<256x128xi1> to vector<256x128xi32>
    %21 = arith.sitofp %20 : vector<256x128xi32> to vector<256x128xf32>
    %22 = arith.subf %17, %21 : vector<256x128xf32>
    %c0_10 = arith.constant 0 : index
    %c0_11 = arith.constant 0 : index
    %23 = vector.load %arg9[%c0_10, %c0_11] : memref<256x1024xf32, #tpu.memory_space<vmem>>, vector<256x128xf32>
    tpu.vector_store %arg9[%c0_10, %c0_11], %22 {strides = array<i32>} : memref<256x1024xf32, #tpu.memory_space<vmem>>, vector<256x128xf32>,
    %24 = vector.extract_strided_slice %9 {offsets = [1, 0], sizes = [1, 128], strides = [1, 1]} : vector<8x128xi32> to vector<1x128xi32>
    %25 = vector.extract_strided_slice %11 {offsets = [1, 0], sizes = [1, 128], strides = [1, 1]} : vector<8x128xi32> to vector<1x128xi32>
    %26 = vector.broadcast %24 : vector<1x128xi32> to vector<256x128xi32>
    %27 = arith.cmpi eq, %7, %26 : vector<256x128xi32>
    %28 = arith.extui %27 : vector<256x128xi1> to vector<256x128xi32>
    %29 = arith.sitofp %28 : vector<256x128xi32> to vector<256x128xf32>
    %30 = vector.broadcast %25 : vector<1x128xi32> to vector<256x128xi32>
    %31 = arith.cmpi eq, %7, %30 : vector<256x128xi32>
    %32 = arith.extui %31 : vector<256x128xi1> to vector<256x128xi32>
    %33 = arith.sitofp %32 : vector<256x128xi32> to vector<256x128xf32>
    %34 = arith.subf %29, %33 : vector<256x128xf32>
    %c0_12 = arith.constant 0 : index
    %c128 = arith.constant 128 : index
    %35 = vector.load %arg9[%c0_12, %c128] : memref<256x1024xf32, #tpu.memory_space<vmem>>, vector<256x128xf32>
    tpu.vector_store %arg9[%c0_12, %c128], %34 {strides = array<i32>} : memref<256x1024xf32, #tpu.memory_space<vmem>>, vector<256x128xf32>,
    %36 = vector.extract_strided_slice %9 {offsets = [2, 0], sizes = [1, 128], strides = [1, 1]} : vector<8x128xi32> to vector<1x128xi32>
    %37 = vector.extract_strided_slice %11 {offsets = [2, 0], sizes = [1, 128], strides = [1, 1]} : vector<8x128xi32> to vector<1x128xi32>
    %38 = vector.broadcast %36 : vector<1x128xi32> to vector<256x128xi32>
    %39 = arith.cmpi eq, %7, %38 : vector<256x128xi32>
    %40 = arith.extui %39 : vector<256x128xi1> to vector<256x128xi32>
    %41 = arith.sitofp %40 : vector<256x128xi32> to vector<256x128xf32>
    %42 = vector.broadcast %37 : vector<1x128xi32> to vector<256x128xi32>
    %43 = arith.cmpi eq, %7, %42 : vector<256x128xi32>
    %44 = arith.extui %43 : vector<256x128xi1> to vector<256x128xi32>
    %45 = arith.sitofp %44 : vector<256x128xi32> to vector<256x128xf32>
    %46 = arith.subf %41, %45 : vector<256x128xf32>
    %c0_13 = arith.constant 0 : index
    %c256 = arith.constant 256 : index
    %47 = vector.load %arg9[%c0_13, %c256] : memref<256x1024xf32, #tpu.memory_space<vmem>>, vector<256x128xf32>
    tpu.vector_store %arg9[%c0_13, %c256], %46 {strides = array<i32>} : memref<256x1024xf32, #tpu.memory_space<vmem>>, vector<256x128xf32>,
    %48 = vector.extract_strided_slice %9 {offsets = [3, 0], sizes = [1, 128], strides = [1, 1]} : vector<8x128xi32> to vector<1x128xi32>
    %49 = vector.extract_strided_slice %11 {offsets = [3, 0], sizes = [1, 128], strides = [1, 1]} : vector<8x128xi32> to vector<1x128xi32>
    %50 = vector.broadcast %48 : vector<1x128xi32> to vector<256x128xi32>
    %51 = arith.cmpi eq, %7, %50 : vector<256x128xi32>
    %52 = arith.extui %51 : vector<256x128xi1> to vector<256x128xi32>
    %53 = arith.sitofp %52 : vector<256x128xi32> to vector<256x128xf32>
    %54 = vector.broadcast %49 : vector<1x128xi32> to vector<256x128xi32>
    %55 = arith.cmpi eq, %7, %54 : vector<256x128xi32>
    %56 = arith.extui %55 : vector<256x128xi1> to vector<256x128xi32>
    %57 = arith.sitofp %56 : vector<256x128xi32> to vector<256x128xf32>
    %58 = arith.subf %53, %57 : vector<256x128xf32>
    %c0_14 = arith.constant 0 : index
    %c384 = arith.constant 384 : index
    %59 = vector.load %arg9[%c0_14, %c384] : memref<256x1024xf32, #tpu.memory_space<vmem>>, vector<256x128xf32>
    tpu.vector_store %arg9[%c0_14, %c384], %58 {strides = array<i32>} : memref<256x1024xf32, #tpu.memory_space<vmem>>, vector<256x128xf32>,
    %60 = vector.extract_strided_slice %9 {offsets = [4, 0], sizes = [1, 128], strides = [1, 1]} : vector<8x128xi32> to vector<1x128xi32>
    %61 = vector.extract_strided_slice %11 {offsets = [4, 0], sizes = [1, 128], strides = [1, 1]} : vector<8x128xi32> to vector<1x128xi32>
    %62 = vector.broadcast %60 : vector<1x128xi32> to vector<256x128xi32>
    %63 = arith.cmpi eq, %7, %62 : vector<256x128xi32>
    %64 = arith.extui %63 : vector<256x128xi1> to vector<256x128xi32>
    %65 = arith.sitofp %64 : vector<256x128xi32> to vector<256x128xf32>
    %66 = vector.broadcast %61 : vector<1x128xi32> to vector<256x128xi32>
    %67 = arith.cmpi eq, %7, %66 : vector<256x128xi32>
    %68 = arith.extui %67 : vector<256x128xi1> to vector<256x128xi32>
    %69 = arith.sitofp %68 : vector<256x128xi32> to vector<256x128xf32>
    %70 = arith.subf %65, %69 : vector<256x128xf32>
    %c0_15 = arith.constant 0 : index
    %c512 = arith.constant 512 : index
    %71 = vector.load %arg9[%c0_15, %c512] : memref<256x1024xf32, #tpu.memory_space<vmem>>, vector<256x128xf32>
    tpu.vector_store %arg9[%c0_15, %c512], %70 {strides = array<i32>} : memref<256x1024xf32, #tpu.memory_space<vmem>>, vector<256x128xf32>,
    %72 = vector.extract_strided_slice %9 {offsets = [5, 0], sizes = [1, 128], strides = [1, 1]} : vector<8x128xi32> to vector<1x128xi32>
    %73 = vector.extract_strided_slice %11 {offsets = [5, 0], sizes = [1, 128], strides = [1, 1]} : vector<8x128xi32> to vector<1x128xi32>
    %74 = vector.broadcast %72 : vector<1x128xi32> to vector<256x128xi32>
    %75 = arith.cmpi eq, %7, %74 : vector<256x128xi32>
    %76 = arith.extui %75 : vector<256x128xi1> to vector<256x128xi32>
    %77 = arith.sitofp %76 : vector<256x128xi32> to vector<256x128xf32>
    %78 = vector.broadcast %73 : vector<1x128xi32> to vector<256x128xi32>
    %79 = arith.cmpi eq, %7, %78 : vector<256x128xi32>
    %80 = arith.extui %79 : vector<256x128xi1> to vector<256x128xi32>
    %81 = arith.sitofp %80 : vector<256x128xi32> to vector<256x128xf32>
    %82 = arith.subf %77, %81 : vector<256x128xf32>
    %c0_16 = arith.constant 0 : index
    %c640 = arith.constant 640 : index
    %83 = vector.load %arg9[%c0_16, %c640] : memref<256x1024xf32, #tpu.memory_space<vmem>>, vector<256x128xf32>
    tpu.vector_store %arg9[%c0_16, %c640], %82 {strides = array<i32>} : memref<256x1024xf32, #tpu.memory_space<vmem>>, vector<256x128xf32>,
    %84 = vector.extract_strided_slice %9 {offsets = [6, 0], sizes = [1, 128], strides = [1, 1]} : vector<8x128xi32> to vector<1x128xi32>
    %85 = vector.extract_strided_slice %11 {offsets = [6, 0], sizes = [1, 128], strides = [1, 1]} : vector<8x128xi32> to vector<1x128xi32>
    %86 = vector.broadcast %84 : vector<1x128xi32> to vector<256x128xi32>
    %87 = arith.cmpi eq, %7, %86 : vector<256x128xi32>
    %88 = arith.extui %87 : vector<256x128xi1> to vector<256x128xi32>
    %89 = arith.sitofp %88 : vector<256x128xi32> to vector<256x128xf32>
    %90 = vector.broadcast %85 : vector<1x128xi32> to vector<256x128xi32>
    %91 = arith.cmpi eq, %7, %90 : vector<256x128xi32>
    %92 = arith.extui %91 : vector<256x128xi1> to vector<256x128xi32>
    %93 = arith.sitofp %92 : vector<256x128xi32> to vector<256x128xf32>
    %94 = arith.subf %89, %93 : vector<256x128xf32>
    %c0_17 = arith.constant 0 : index
    %c768 = arith.constant 768 : index
    %95 = vector.load %arg9[%c0_17, %c768] : memref<256x1024xf32, #tpu.memory_space<vmem>>, vector<256x128xf32>
    tpu.vector_store %arg9[%c0_17, %c768], %94 {strides = array<i32>} : memref<256x1024xf32, #tpu.memory_space<vmem>>, vector<256x128xf32>,
    %96 = vector.extract_strided_slice %9 {offsets = [7, 0], sizes = [1, 128], strides = [1, 1]} : vector<8x128xi32> to vector<1x128xi32>
    %97 = vector.extract_strided_slice %11 {offsets = [7, 0], sizes = [1, 128], strides = [1, 1]} : vector<8x128xi32> to vector<1x128xi32>
    %98 = vector.broadcast %96 : vector<1x128xi32> to vector<256x128xi32>
    %99 = arith.cmpi eq, %7, %98 : vector<256x128xi32>
    %100 = arith.extui %99 : vector<256x128xi1> to vector<256x128xi32>
    %101 = arith.sitofp %100 : vector<256x128xi32> to vector<256x128xf32>
    %102 = vector.broadcast %97 : vector<1x128xi32> to vector<256x128xi32>
    %103 = arith.cmpi eq, %7, %102 : vector<256x128xi32>
    %104 = arith.extui %103 : vector<256x128xi1> to vector<256x128xi32>
    %105 = arith.sitofp %104 : vector<256x128xi32> to vector<256x128xf32>
    %106 = arith.subf %101, %105 : vector<256x128xf32>
    %c0_18 = arith.constant 0 : index
    %c896 = arith.constant 896 : index
    %107 = vector.load %arg9[%c0_18, %c896] : memref<256x1024xf32, #tpu.memory_space<vmem>>, vector<256x128xf32>
    tpu.vector_store %arg9[%c0_18, %c896], %106 {strides = array<i32>} : memref<256x1024xf32, #tpu.memory_space<vmem>>, vector<256x128xf32>,
    %c0_19 = arith.constant 0 : index
    %c0_20 = arith.constant 0 : index
    %108 = vector.load %arg9[%c0_19, %c0_20] : memref<256x1024xf32, #tpu.memory_space<vmem>>, vector<256x1024xf32>
    %cst = arith.constant dense<0.000000e+00> : vector<8x1024xf32>
    %109 = tpu.matmul %1, %108, %cst {dimension_numbers = #tpu.dot_dimension_numbers<[1], [0], [0], [1], [0, 0, 1, 1], [], []>} : vector<8x256xf32>, vector<256x1024xf32>, vector<8x1024xf32> -> vector<8x1024xf32>
    %110 = vector.extract_strided_slice %109 {offsets = [0, 0], sizes = [8, 128], strides = [1, 1]} : vector<8x1024xf32> to vector<8x128xf32>
    %111 = vector.extract_strided_slice %109 {offsets = [0, 128], sizes = [8, 128], strides = [1, 1]} : vector<8x1024xf32> to vector<8x128xf32>
    %112 = arith.maximumf %110, %111 : vector<8x128xf32>
    %113 = vector.extract_strided_slice %109 {offsets = [0, 256], sizes = [8, 128], strides = [1, 1]} : vector<8x1024xf32> to vector<8x128xf32>
    %114 = arith.maximumf %112, %113 : vector<8x128xf32>
    %115 = vector.extract_strided_slice %109 {offsets = [0, 384], sizes = [8, 128], strides = [1, 1]} : vector<8x1024xf32> to vector<8x128xf32>
    %116 = arith.maximumf %114, %115 : vector<8x128xf32>
    %117 = vector.extract_strided_slice %109 {offsets = [0, 512], sizes = [8, 128], strides = [1, 1]} : vector<8x1024xf32> to vector<8x128xf32>
    %118 = arith.maximumf %116, %117 : vector<8x128xf32>
    %119 = vector.extract_strided_slice %109 {offsets = [0, 640], sizes = [8, 128], strides = [1, 1]} : vector<8x1024xf32> to vector<8x128xf32>
    %120 = arith.maximumf %118, %119 : vector<8x128xf32>
    %121 = vector.extract_strided_slice %109 {offsets = [0, 768], sizes = [8, 128], strides = [1, 1]} : vector<8x1024xf32> to vector<8x128xf32>
    %122 = arith.maximumf %120, %121 : vector<8x128xf32>
    %123 = vector.extract_strided_slice %109 {offsets = [0, 896], sizes = [8, 128], strides = [1, 1]} : vector<8x1024xf32> to vector<8x128xf32>
    %124 = arith.maximumf %122, %123 : vector<8x128xf32>
    %c0_21 = arith.constant 0 : index
    %c0_22 = arith.constant 0 : index
    %125 = vector.load %arg5[%c0_21, %c0_22] : memref<16x8xf32, #tpu.memory_space<vmem>>, vector<16x8xf32>
    %cst_23 = arith.constant dense<0.000000e+00> : vector<16x128xf32>
    %126 = tpu.matmul %125, %6, %cst_23 {dimension_numbers = #tpu.dot_dimension_numbers<[1], [0], [0], [1], [0, 0, 1, 1], [], []>} : vector<16x8xf32>, vector<8x128xf32>, vector<16x128xf32> -> vector<16x128xf32>
    %c0_24 = arith.constant 0 : index
    %c0_25 = arith.constant 0 : index
    %127 = vector.load %arg6[%c0_24, %c0_25] : memref<16x8xf32, #tpu.memory_space<vmem>>, vector<16x8xf32>
    %cst_26 = arith.constant dense<0.000000e+00> : vector<16x128xf32>
    %128 = tpu.matmul %127, %124, %cst_26 {dimension_numbers = #tpu.dot_dimension_numbers<[1], [0], [0], [1], [0, 0, 1, 1], [], []>} : vector<16x8xf32>, vector<8x128xf32>, vector<16x128xf32> -> vector<16x128xf32>
    %129 = arith.addf %126, %128 : vector<16x128xf32>
    %c0_27 = arith.constant 0 : index
    %c0_28 = arith.constant 0 : index
    %130 = vector.load %arg7[%c0_27, %c0_28] : memref<16x1xf32, #tpu.memory_space<vmem>>, vector<16x1xf32>
    %131 = vector.broadcast %130 : vector<16x1xf32> to vector<16x128xf32>
    %132 = arith.addf %129, %131 : vector<16x128xf32>
    %cst_29 = arith.constant 0.000000e+00 : f32
    %133 = vector.broadcast %cst_29 : f32 to vector<16x128xf32>
    %134 = arith.maximumf %132, %133 : vector<16x128xf32>
    %c0_30 = arith.constant 0 : index
    %c0_31 = arith.constant 0 : index
    %c0_32 = arith.constant 0 : index
    %135 = vector.load %arg8[%c0_30, %c0_31, %c0_32] : memref<1x16x128xf32, #tpu.memory_space<vmem>>, vector<1x16x128xf32>
    %136 = vector.shape_cast %135 : vector<1x16x128xf32> to vector<16x128xf32>
    %137 = vector.shape_cast %134 : vector<16x128xf32> to vector<1x16x128xf32>
    tpu.vector_store %arg8[%c0_30, %c0_31, %c0_32], %137 {strides = array<i32>} : memref<1x16x128xf32, #tpu.memory_space<vmem>>, vector<1x16x128xf32>,
    return
  }
  func.func @transform_0(%arg0: i32, %arg1: i32) -> (i32, i32, i32) {
    %c0_i32 = arith.constant 0 : i32
    %c0_i32_0 = arith.constant 0 : i32
    %c0_i32_1 = arith.constant 0 : i32
    return %arg0, %c0_i32, %c0_i32_0 : i32, i32, i32
  }
  func.func @transform_1(%arg0: i32, %arg1: i32) -> (i32, i32, i32) {
    %c0_i32 = arith.constant 0 : i32
    %c0_i32_0 = arith.constant 0 : i32
    return %arg0, %c0_i32, %arg1 : i32, i32, i32
  }
  func.func @transform_2(%arg0: i32, %arg1: i32) -> (i32, i32, i32) {
    %c0_i32 = arith.constant 0 : i32
    %c0_i32_0 = arith.constant 0 : i32
    return %arg0, %c0_i32, %arg1 : i32, i32, i32
  }
  func.func @transform_3(%arg0: i32, %arg1: i32) -> (i32, i32) {
    %c0_i32 = arith.constant 0 : i32
    %c0_i32_0 = arith.constant 0 : i32
    %c0_i32_1 = arith.constant 0 : i32
    return %c0_i32, %c0_i32_0 : i32, i32
  }
  func.func @transform_4(%arg0: i32, %arg1: i32) -> (i32, i32) {
    %c0_i32 = arith.constant 0 : i32
    %c0_i32_0 = arith.constant 0 : i32
    %c0_i32_1 = arith.constant 0 : i32
    return %c0_i32, %c0_i32_0 : i32, i32
  }
  func.func @transform_5(%arg0: i32, %arg1: i32) -> (i32, i32) {
    %c0_i32 = arith.constant 0 : i32
    %c0_i32_0 = arith.constant 0 : i32
    %c0_i32_1 = arith.constant 0 : i32
    return %c0_i32, %c0_i32_0 : i32, i32
  }
  func.func @transform_6(%arg0: i32, %arg1: i32) -> (i32, i32, i32) {
    %c0_i32 = arith.constant 0 : i32
    %c0_i32_0 = arith.constant 0 : i32
    return %arg0, %c0_i32, %arg1 : i32, i32, i32
  }
}

</mosaic_0001>

<llo_original>
// kernel: tpu_custom_call.1
$region0: #{tpu_custom_call.1}
  #allocation0 [shape = 'u32[]', space=smem, size = 0x4, offset = 0x4, fixed_abs, tag = 'smem constant byte address 0x4 - core index']
  #allocation1 [shape = 'u32[72,128]{1,0:T(1,128)}', space=vmem, size = 0x9000, scoped, tag = 'internal scratch']
  #allocation2 [shape = 'f32[256,1024]{1,0:T(8,128)}', space=vmem, size = 0x100000, scoped, tag = 'scratch operand']
  %s0 = inlined_call_operand.vmem [shape: f32[2,8,256], index: 0, kind: input, shape index: {}]
  %s1 = inlined_call_operand.hbm [shape: s32[2,8,256], index: 1, kind: input, shape index: {}]
  %s2 = inlined_call_operand.hbm [shape: s32[2,8,256], index: 2, kind: input, shape index: {}]
  %s3 = inlined_call_operand.vmem [shape: f32[16,8], index: 3, kind: input, shape index: {}]
  %s4 = inlined_call_operand.vmem [shape: f32[16,8], index: 4, kind: input, shape index: {}]
  %s5 = inlined_call_operand.vmem [shape: f32[16,1], index: 5, kind: input, shape index: {}]
  %s6 = inlined_call_operand.hbm [shape: f32[2,16,256], index: 6, kind: output, shape index: {}]
  %s7 = sld [smem:[#allocation0]]
  $region65: #{tpu_custom_call.1} parent=0
    _
  %s9 = ssub.s32 1, %s7
  %s10 = scalar_select 0, %s9, %s7
  $region1: #{tpu_custom_call.1} parent=0
    #allocation3 [shape = 'u8[8192]{0}', space=vmem, size = 0x2000, scoped, tag = 'input window, operand 1']
    #allocation4 [shape = 's32[2]{0}', space=sflag, size = 0x8, scoped, tag = 'scoped memory for tpu_custom_call.1']
    #allocation5 [shape = 's32[2]{0}', space=sflag, size = 0x8, scoped, tag = 'scoped memory for tpu_custom_call.1']
    #allocation6 [shape = 'u8[8192]{0}', space=vmem, size = 0x2000, scoped, tag = 'input window, operand 2']
    #allocation7 [shape = 's32[2]{0}', space=sflag, size = 0x8, scoped, tag = 'scoped memory for tpu_custom_call.1']
    #allocation8 [shape = 'u8[16384]{0}', space=vmem, size = 0x4000, scoped, tag = 'output window, operand 0']
    %11 = vsyncpa [#allocation4], 0
    %s12 = scalar_lea.sflag [#allocation4], 1
    %13 = vsyncpa %s12, 0
    %14 = vsyncpa [#allocation7], 0
    %s15 = scalar_lea.sflag [#allocation7], 1
    %16 = vsyncpa %s15, 0
    %17 = vsyncpa [#allocation5], 0
    %s18 = scalar_lea.sflag [#allocation5], 1
    %19 = vsyncpa %s18, 0
    loop: start=0, step=1, limit=6
    $region2: #{tpu_custom_call.1} parent=1 // loop_pre_header
      _
    $region3: #{tpu_custom_call.1} parent=1 // loop_header
      %s21 = sphi 0, %s25
      %p22 = scmp.ge.s32.totalorder %s21, 6
      %s28 = sphi 0, %s40
      %s29 = sphi 0, %s36
      %s30 = sphi 0, %s28
      %s31 = sphi 0, %s29
      %s32 = sphi 0, %s30
      %s33 = sphi 0, %s31
      %s43 = sphi 0, %s45
      %s46 = sphi 0, %s43
      %s47 = sphi 0, %s46
      %s63 = sphi 0, %s47
      %s71 = sphi 0, %s73
      %s74 = sphi 0, %s71
      %s75 = sphi 0, %s74
      %s91 = sphi 0, %s75
      %s99 = sphi 0, %s101
      %s102 = sphi 0, %s99
      %s103 = sphi 0, %s102
      %s119 = sphi 0, %s103
      %s123 = sphi 0, %s123
      %s125 = sphi 0, %s123
      %s126 = sphi 0, %s125
      %s140 = sphi 0, %s126
      %s144 = sphi 0, %s144
      %s146 = sphi 0, %s144
      %s147 = sphi 0, %s146
      %s161 = sphi 0, %s147
      %s165 = sphi 0, %s165
      %s167 = sphi 0, %s165
      %s168 = sphi 0, %s167
      %s182 = sphi 0, %s168
      %s190 = sphi 0, %s192
      %s193 = sphi 0, %s190
      %s194 = sphi 0, %s193
      %s210 = sphi 0, %s194
    $region4: #{tpu_custom_call.1} parent=1 // loop_header_branch
      %24 = sbr.rel (%p22) target = $region8
    $region5: #{tpu_custom_call.1} parent=1 // loop_body
      %s26 = ssub.s32 %s21, 1
      %s27 = ssub.s32 %s21, 2
      %s34 = sadd.s32 1, %s29
      %p35 = scmp.ge.s32.totalorder %s34, 2
      %s36 = scalar_select %p35, 0, %s34
      %s37 = sadd.s32 1, %s28
      %s38 = scalar_select %p35, %s37, %s28
      %p39 = scmp.ge.s32.totalorder %s38, 2
      %s40 = scalar_select %p39, 0, %s38
      %s41 = ssub.s32 %s28, %s40
      %p42 = scmp.eq.s32.totalorder %s41, 0
      %s44 = sadd.s32 %s43, 1
      %s45 = scalar_select %p42, %s43, %s44
      %p48 = pneg %p42
      %p49 = scmp.eq.s32.totalorder %s21, 3
      %p50 = por %p48, %p49
      %p51 = scmp.ne.s32.totalorder %s43, %s46
      %p52 = scmp.eq.s32.totalorder %s21, 0
      %p53 = por %p51, %p52
      %p54 = scmp.ne.s32.totalorder %s43, %s46
      %p55 = scmp.eq.s32.totalorder %s26, 3
      %p56 = por %p54, %p55
      %p57 = scmp.ne.s32.totalorder %s46, %s47
      %p58 = scmp.eq.s32.totalorder %s26, 0
      %p59 = por %p57, %p58
      %p60 = scmp.ne.s32.totalorder %s46, %s47
      %p61 = scmp.eq.s32.totalorder %s27, 3
      %p62 = por %p60, %p61
      %p64 = scmp.ne.s32.totalorder %s47, %s63
      %p65 = scmp.eq.s32.totalorder %s27, 0
      %p66 = por %p64, %p65
      %s67 = ssub.s32 %s28, %s40
      %s68 = ssub.s32 %s29, %s36
      %s69 = sor.u32 %s67, %s68
      %p70 = scmp.eq.s32.totalorder %s69, 0
      %s72 = sadd.s32 %s71, 1
      %s73 = scalar_select %p70, %s71, %s72
      %p76 = pneg %p70
      %p77 = scmp.eq.s32.totalorder %s21, 3
      %p78 = por %p76, %p77
      %p79 = scmp.ne.s32.totalorder %s71, %s74
      %p80 = scmp.eq.s32.totalorder %s21, 0
      %p81 = por %p79, %p80
      %p82 = scmp.ne.s32.totalorder %s71, %s74
      %p83 = scmp.eq.s32.totalorder %s26, 3
      %p84 = por %p82, %p83
      %p85 = scmp.ne.s32.totalorder %s74, %s75
      %p86 = scmp.eq.s32.totalorder %s26, 0
      %p87 = por %p85, %p86
      %p88 = scmp.ne.s32.totalorder %s74, %s75
      %p89 = scmp.eq.s32.totalorder %s27, 3
      %p90 = por %p88, %p89
      %p92 = scmp.ne.s32.totalorder %s75, %s91
      %p93 = scmp.eq.s32.totalorder %s27, 0
      %p94 = por %p92, %p93
      %s95 = ssub.s32 %s28, %s40
      %s96 = ssub.s32 %s29, %s36
      %s97 = sor.u32 %s95, %s96
      %p98 = scmp.eq.s32.totalorder %s97, 0
      %s100 = sadd.s32 %s99, 1
      %s101 = scalar_select %p98, %s99, %s100
      %p104 = pneg %p98
      %p105 = scmp.eq.s32.totalorder %s21, 3
      %p106 = por %p104, %p105
      %p107 = scmp.ne.s32.totalorder %s99, %s102
      %p108 = scmp.eq.s32.totalorder %s21, 0
      %p109 = por %p107, %p108
      %p110 = scmp.ne.s32.totalorder %s99, %s102
      %p111 = scmp.eq.s32.totalorder %s26, 3
      %p112 = por %p110, %p111
      %p113 = scmp.ne.s32.totalorder %s102, %s103
      %p114 = scmp.eq.s32.totalorder %s26, 0
      %p115 = por %p113, %p114
      %p116 = scmp.ne.s32.totalorder %s102, %s103
      %p117 = scmp.eq.s32.totalorder %s27, 3
      %p118 = por %p116, %p117
      %p120 = scmp.ne.s32.totalorder %s103, %s119
      %p121 = scmp.eq.s32.totalorder %s27, 0
      %p122 = por %p120, %p121
      %s124 = sadd.s32 %s123, 1
      %p127 = scmp.eq.s32.totalorder %s21, 3
      %p128 = scmp.ne.s32.totalorder %s123, %s125
      %p129 = scmp.eq.s32.totalorder %s21, 0
      %p130 = por %p128, %p129
      %p131 = scmp.ne.s32.totalorder %s123, %s125
      %p132 = scmp.eq.s32.totalorder %s26, 3
      %p133 = por %p131, %p132
      %p134 = scmp.ne.s32.totalorder %s125, %s126
      %p135 = scmp.eq.s32.totalorder %s26, 0
      %p136 = por %p134, %p135
      %p137 = scmp.ne.s32.totalorder %s125, %s126
      %p138 = scmp.eq.s32.totalorder %s27, 3
      %p139 = por %p137, %p138
      %p141 = scmp.ne.s32.totalorder %s126, %s140
      %p142 = scmp.eq.s32.totalorder %s27, 0
      %p143 = por %p141, %p142
      %s145 = sadd.s32 %s144, 1
      %p148 = scmp.eq.s32.totalorder %s21, 3
      %p149 = scmp.ne.s32.totalorder %s144, %s146
      %p150 = scmp.eq.s32.totalorder %s21, 0
      %p151 = por %p149, %p150
      %p152 = scmp.ne.s32.totalorder %s144, %s146
      %p153 = scmp.eq.s32.totalorder %s26, 3
      %p154 = por %p152, %p153
      %p155 = scmp.ne.s32.totalorder %s146, %s147
      %p156 = scmp.eq.s32.totalorder %s26, 0
      %p157 = por %p155, %p156
      %p158 = scmp.ne.s32.totalorder %s146, %s147
      %p159 = scmp.eq.s32.totalorder %s27, 3
      %p160 = por %p158, %p159
      %p162 = scmp.ne.s32.totalorder %s147, %s161
      %p163 = scmp.eq.s32.totalorder %s27, 0
      %p164 = por %p162, %p163
      %s166 = sadd.s32 %s165, 1
      %p169 = scmp.eq.s32.totalorder %s21, 3
      %p170 = scmp.ne.s32.totalorder %s165, %s167
      %p171 = scmp.eq.s32.totalorder %s21, 0
      %p172 = por %p170, %p171
      %p173 = scmp.ne.s32.totalorder %s165, %s167
      %p174 = scmp.eq.s32.totalorder %s26, 3
      %p175 = por %p173, %p174
      %p176 = scmp.ne.s32.totalorder %s167, %s168
      %p177 = scmp.eq.s32.totalorder %s26, 0
      %p178 = por %p176, %p177
      %p179 = scmp.ne.s32.totalorder %s167, %s168
      %p180 = scmp.eq.s32.totalorder %s27, 3
      %p181 = por %p179, %p180
      %p183 = scmp.ne.s32.totalorder %s168, %s182
      %p184 = scmp.eq.s32.totalorder %s27, 0
      %p185 = por %p183, %p184
      %s186 = ssub.s32 %s28, %s40
      %s187 = ssub.s32 %s29, %s36
      %s188 = sor.u32 %s186, %s187
      %p189 = scmp.eq.s32.totalorder %s188, 0
      %s191 = sadd.s32 %s190, 1
      %s192 = scalar_select %p189, %s190, %s191
      %p195 = pneg %p189
      %p196 = scmp.eq.s32.totalorder %s21, 3
      %p197 = por %p195, %p196
      %p198 = scmp.ne.s32.totalorder %s190, %s193
      %p199 = scmp.eq.s32.totalorder %s21, 0
      %p200 = por %p198, %p199
      %p201 = scmp.ne.s32.totalorder %s190, %s193
      %p202 = scmp.eq.s32.totalorder %s26, 3
      %p203 = por %p201, %p202
      %p204 = scmp.ne.s32.totalorder %s193, %s194
      %p205 = scmp.eq.s32.totalorder %s26, 0
      %p206 = por %p204, %p205
      %p207 = scmp.ne.s32.totalorder %s193, %s194
      %p208 = scmp.eq.s32.totalorder %s27, 3
      %p209 = por %p207, %p208
      %p211 = scmp.ne.s32.totalorder %s194, %s210
      %p212 = scmp.eq.s32.totalorder %s27, 0
      %p213 = por %p211, %p212
      %p214 = scmp.le.s32.totalorder 1, %s21
      %p215 = scmp.lt.s32.totalorder %s21, 5
      %p216 = pnand %p214, %p215
      %p217 = pneg %p216
      // Predicated region
      $region9: #{tpu_custom_call.1} parent=5 // pred_check
        _
      $region10: #{tpu_custom_call.1} parent=5 // pred_check_branch
        %219 = sbr.rel (%p216) target = $region12
      $region11: #{tpu_custom_call.1} parent=5 // pred_region
        %s220 = ssub.s32 %s21, 1
        // Predicated region
        $region13: #{tpu_custom_call.1} parent=11 // pred_check
          %p221 = pneg %p136
        $region14: #{tpu_custom_call.1} parent=11 // pred_check_branch
          %223 = sbr.rel (%p221) target = $region16
        $region15: #{tpu_custom_call.1} parent=11 // pred_region
          _
        $region16: #{tpu_custom_call.1} parent=11 // pred_fallthru
          _
        // Predicated region
        $region17: #{tpu_custom_call.1} parent=11 // pred_check
          %p224 = pneg %p157
        $region18: #{tpu_custom_call.1} parent=11 // pred_check_branch
          %226 = sbr.rel (%p224) target = $region20
        $region19: #{tpu_custom_call.1} parent=11 // pred_region
          _
        $region20: #{tpu_custom_call.1} parent=11 // pred_fallthru
          _
        // Predicated region
        $region21: #{tpu_custom_call.1} parent=11 // pred_check
          %p227 = pneg %p178
        $region22: #{tpu_custom_call.1} parent=11 // pred_check_branch
          %229 = sbr.rel (%p227) target = $region24
        $region23: #{tpu_custom_call.1} parent=11 // pred_region
          _
        $region24: #{tpu_custom_call.1} parent=11 // pred_fallthru
          _
      $region12: #{tpu_custom_call.1} parent=5 // pred_fallthru
        _
      %p230 = scmp.lt.s32.totalorder %s21, 4
      // Predicated region
      $region25: #{tpu_custom_call.1} parent=5 // pred_check
        %p231 = pneg %p230
      $region26: #{tpu_custom_call.1} parent=5 // pred_check_branch
        %233 = sbr.rel (%p231) target = $region28
      $region27: #{tpu_custom_call.1} parent=5 // pred_region
        // Predicated region
        $region29: #{tpu_custom_call.1} parent=27 // pred_check
          %p234 = pneg %p53
        $region30: #{tpu_custom_call.1} parent=27 // pred_check_branch
          %236 = sbr.rel (%p234) target = $region32
        $region31: #{tpu_custom_call.1} parent=27 // pred_region
          %p237 = scmp.lt.s32.totalorder %s28, 1
          %s238 = scalar_select %p237, %s28, 1
          %s239 = smul.addr %s238, 2
          %s240 = smul.addr %s239, 8
          %s241 = scalar_lea.vmem %s0, %s240
        $region32: #{tpu_custom_call.1} parent=27 // pred_fallthru
          _
        // Predicated region
        $region33: #{tpu_custom_call.1} parent=27 // pred_check
          %p242 = pneg %p81
        $region34: #{tpu_custom_call.1} parent=27 // pred_check_branch
          %244 = sbr.rel (%p242) target = $region36
        $region35: #{tpu_custom_call.1} parent=27 // pred_region
          %s245 = sand.u32 %s71, 1
          %s246 = scalar_lea.sflag [#allocation4], %s245
          %s247 = sand.u32 %s71, 1
          %s248 = smul.addr %s247, 8
          %s249 = scalar_lea.vmem [#allocation3], %s248
          %251 = vsyncadd %s246, 0
          %s252 = smul.addr %s28, 2
          %s253 = sadd.s32 %s29, %s252
          %s254 = smul.addr %s253, 8
          %s255 = scalar_lea.hbm %s1, %s254
          %s257 = sshll.u32 %s255, 4
          %s258 = int_to_ptr.hbm [resolvable:$true] %s257
          %s259 = sshll.u32 %s249, 4
          %s260 = int_to_ptr.vmem [resolvable:$true] %s259
          %262 = dma.hbm_to_vmem [thread:$0]  %s258, 128, %s260, %s246
        $region36: #{tpu_custom_call.1} parent=27 // pred_fallthru
          _
        // Predicated region
        $region37: #{tpu_custom_call.1} parent=27 // pred_check
          %p263 = pneg %p109
        $region38: #{tpu_custom_call.1} parent=27 // pred_check_branch
          %265 = sbr.rel (%p263) target = $region40
        $region39: #{tpu_custom_call.1} parent=27 // pred_region
          %s266 = sand.u32 %s99, 1
          %s267 = scalar_lea.sflag [#allocation7], %s266
          %s268 = sand.u32 %s99, 1
          %s269 = smul.addr %s268, 8
          %s270 = scalar_lea.vmem [#allocation6], %s269
          %272 = vsyncadd %s267, 0
          %s273 = smul.addr %s28, 2
          %s274 = sadd.s32 %s29, %s273
          %s275 = smul.addr %s274, 8
          %s276 = scalar_lea.hbm %s2, %s275
          %s278 = sshll.u32 %s276, 4
          %s279 = int_to_ptr.hbm [resolvable:$true] %s278
          %s280 = sshll.u32 %s270, 4
          %s281 = int_to_ptr.vmem [resolvable:$true] %s280
          %283 = dma.hbm_to_vmem [thread:$0]  %s279, 128, %s281, %s267
        $region40: #{tpu_custom_call.1} parent=27 // pred_fallthru
          _
      $region28: #{tpu_custom_call.1} parent=5 // pred_fallthru
        _
      %p284 = scmp.le.s32.totalorder 1, %s21
      %p285 = scmp.lt.s32.totalorder %s21, 5
      %p286 = pnand %p284, %p285
      %p287 = pneg %p286
      // Predicated region
      $region41: #{tpu_custom_call.1} parent=5 // pred_check
        _
      $region42: #{tpu_custom_call.1} parent=5 // pred_check_branch
        %289 = sbr.rel (%p286) target = $region44
      $region43: #{tpu_custom_call.1} parent=5 // pred_region
        %s290 = ssub.s32 %s21, 1
        %s291 = sand.u32 %s74, 1
        %s292 = scalar_lea.sflag [#allocation4], %s291
        %s293 = sand.u32 %s74, 1
        %s294 = smul.addr %s293, 8
        %s295 = scalar_lea.vmem [#allocation3], %s294
        // Predicated region
        $region45: #{tpu_custom_call.1} parent=43 // pred_check
          %p296 = pneg %p87
        $region46: #{tpu_custom_call.1} parent=43 // pred_check_branch
          %298 = sbr.rel (%p296) target = $region48
        $region47: #{tpu_custom_call.1} parent=43 // pred_region
          %300 = dma.done %s292, 128
        $region48: #{tpu_custom_call.1} parent=43 // pred_fallthru
          _
        %s301 = sand.u32 %s102, 1
        %s302 = scalar_lea.sflag [#allocation7], %s301
        %s303 = sand.u32 %s102, 1
        %s304 = smul.addr %s303, 8
        %s305 = scalar_lea.vmem [#allocation6], %s304
        // Predicated region
        $region49: #{tpu_custom_call.1} parent=43 // pred_check
          %p306 = pneg %p115
        $region50: #{tpu_custom_call.1} parent=43 // pred_check_branch
          %308 = sbr.rel (%p306) target = $region52
        $region51: #{tpu_custom_call.1} parent=43 // pred_region
          %310 = dma.done %s302, 128
        $region52: #{tpu_custom_call.1} parent=43 // pred_fallthru
          _
        %p311 = scmp.lt.s32.totalorder %s30, 1
        %s312 = scalar_select %p311, %s30, 1
        %s313 = smul.addr %s312, 2
        %s314 = smul.addr %s313, 8
        %s315 = scalar_lea.vmem %s0, %s314
        %p316 = pneg %p59
        %p317 = pneg %p56
        %s318 = sand.u32 %s74, 1
        %s319 = scalar_lea.sflag [#allocation4], %s318
        %s320 = sand.u32 %s74, 1
        %s321 = smul.addr %s320, 8
        %s322 = scalar_lea.vmem [#allocation3], %s321
        %p323 = pneg %p87
        %p324 = pneg %p84
        %s325 = sand.u32 %s102, 1
        %s326 = scalar_lea.sflag [#allocation7], %s325
        %s327 = sand.u32 %s102, 1
        %s328 = smul.addr %s327, 8
        %s329 = scalar_lea.vmem [#allocation6], %s328
        %p330 = pneg %p115
        %p331 = pneg %p112
        %p332 = pneg %p136
        %p333 = pneg %p133
        %p334 = pneg %p157
        %p335 = pneg %p154
        %p336 = pneg %p178
        %p337 = pneg %p175
        %p338 = pneg %p206
        %p339 = pneg %p203
        %s340 = sand.u32 %s193, 1
        %s341 = scalar_lea.sflag [#allocation5], %s340
        %s342 = sand.u32 %s193, 1
        %s343 = smul.addr %s342, 16
        %s344 = scalar_lea.vmem [#allocation8], %s343
        %p345 = scmp.lt.s32.totalorder %s30, 1
        %s346 = scalar_select %p345, %s30, 1
        %s347 = smul.addr %s346, 2
        %s348 = smul.addr %s347, 8
        %s349 = scalar_lea.vmem %s0, %s348
        %v350 = vld [vmem:[%s349] sm:$0xff]
        %v351 = vld [vmem:[%s349 + $0x8] sm:$0xff]
        %s352 = smul.u32 %s31, 128
        %s353 = sshra.s32 %s352, 7
        %s354 = sand.u32 %s352, 127
        %s355 = smul.addr %s353, 8
        %s356 = scalar_lea.vmem %s349, %s355
        %v357 = vld [vmem:[%s356] sm:$0xff]
        %v358 = vlaneseq
        %v359 = vshrl.u32 %v358, 7
        %v360 = vadd.s32 %v359, 8
        %v361 = vadd.s32 %v359, 16
        %v362 = vadd.s32 %v359, 24
        %v363 = vadd.s32 %v359, 32
        %v364 = vadd.s32 %v359, 40
        %v365 = vadd.s32 %v359, 48
        %v366 = vadd.s32 %v359, 56
        %v367 = vadd.s32 %v359, 64
        %v368 = vadd.s32 %v359, 72
        %v369 = vadd.s32 %v359, 80
        %v370 = vadd.s32 %v359, 88
        %v371 = vadd.s32 %v359, 96
        %v372 = vadd.s32 %v359, 104
        %v373 = vadd.s32 %v359, 112
        %v374 = vadd.s32 %v359, 120
        %v375 = vadd.s32 %v359, 128
        %v376 = vadd.s32 %v359, 136
        %v377 = vadd.s32 %v359, 144
        %v378 = vadd.s32 %v359, 152
        %v379 = vadd.s32 %v359, 160
        %v380 = vadd.s32 %v359, 168
        %v381 = vadd.s32 %v359, 176
        %v382 = vadd.s32 %v359, 184
        %v383 = vadd.s32 %v359, 192
        %v384 = vadd.s32 %v359, 200
        %v385 = vadd.s32 %v359, 208
        %v386 = vadd.s32 %v359, 216
        %v387 = vadd.s32 %v359, 224
        %v388 = vadd.s32 %v359, 232
        %v389 = vadd.s32 %v359, 240
        %v390 = vadd.s32 %v359, 248
        %v391 = vld [vmem:[%s295] sm:$0xff]
        %v392 = vld [vmem:[%s305] sm:$0xff]
        %v393 = vperm.slane %v391, 0
        %vm394 = vcmp.eq.s32.totalorder %v359, %v393
        %vm395 = vcmp.eq.s32.totalorder %v360, %v393
        %vm396 = vcmp.eq.s32.totalorder %v361, %v393
        %vm397 = vcmp.eq.s32.totalorder %v362, %v393
        %vm398 = vcmp.eq.s32.totalorder %v363, %v393
        %vm399 = vcmp.eq.s32.totalorder %v364, %v393
        %vm400 = vcmp.eq.s32.totalorder %v365, %v393
        %vm401 = vcmp.eq.s32.totalorder %v366, %v393
        %vm402 = vcmp.eq.s32.totalorder %v367, %v393
        %vm403 = vcmp.eq.s32.totalorder %v368, %v393
        %vm404 = vcmp.eq.s32.totalorder %v369, %v393
        %vm405 = vcmp.eq.s32.totalorder %v370, %v393
        %vm406 = vcmp.eq.s32.totalorder %v371, %v393
        %vm407 = vcmp.eq.s32.totalorder %v372, %v393
        %vm408 = vcmp.eq.s32.totalorder %v373, %v393
        %vm409 = vcmp.eq.s32.totalorder %v374, %v393
        %vm410 = vcmp.eq.s32.totalorder %v375, %v393
        %vm411 = vcmp.eq.s32.totalorder %v376, %v393
        %vm412 = vcmp.eq.s32.totalorder %v377, %v393
        %vm413 = vcmp.eq.s32.totalorder %v378, %v393
        %vm414 = vcmp.eq.s32.totalorder %v379, %v393
        %vm415 = vcmp.eq.s32.totalorder %v380, %v393
        %vm416 = vcmp.eq.s32.totalorder %v381, %v393
        %vm417 = vcmp.eq.s32.totalorder %v382, %v393
        %vm418 = vcmp.eq.s32.totalorder %v383, %v393
        %vm419 = vcmp.eq.s32.totalorder %v384, %v393
        %vm420 = vcmp.eq.s32.totalorder %v385, %v393
        %vm421 = vcmp.eq.s32.totalorder %v386, %v393
        %vm422 = vcmp.eq.s32.totalorder %v387, %v393
        %vm423 = vcmp.eq.s32.totalorder %v388, %v393
        %vm424 = vcmp.eq.s32.totalorder %v389, %v393
        %vm425 = vcmp.eq.s32.totalorder %v390, %v393
        %v426 = vsel %vm394, 1, 0
        %v427 = vsel %vm395, 1, 0
        %v428 = vsel %vm396, 1, 0
        %v429 = vsel %vm397, 1, 0
        %v430 = vsel %vm398, 1, 0
        %v431 = vsel %vm399, 1, 0
        %v432 = vsel %vm400, 1, 0
        %v433 = vsel %vm401, 1, 0
        %v434 = vsel %vm402, 1, 0
        %v435 = vsel %vm403, 1, 0
        %v436 = vsel %vm404, 1, 0
        %v437 = vsel %vm405, 1, 0
        %v438 = vsel %vm406, 1, 0
        %v439 = vsel %vm407, 1, 0
        %v440 = vsel %vm408, 1, 0
        %v441 = vsel %vm409, 1, 0
        %v442 = vsel %vm410, 1, 0
        %v443 = vsel %vm411, 1, 0
        %v444 = vsel %vm412, 1, 0
        %v445 = vsel %vm413, 1, 0
        %v446 = vsel %vm414, 1, 0
        %v447 = vsel %vm415, 1, 0
        %v448 = vsel %vm416, 1, 0
        %v449 = vsel %vm417, 1, 0
        %v450 = vsel %vm418, 1, 0
        %v451 = vsel %vm419, 1, 0
        %v452 = vsel %vm420, 1, 0
        %v453 = vsel %vm421, 1, 0
        %v454 = vsel %vm422, 1, 0
        %v455 = vsel %vm423, 1, 0
        %v456 = vsel %vm424, 1, 0
        %v457 = vsel %vm425, 1, 0
        %v458 = vcvt.s32.f32 %v426
        %v459 = vcvt.s32.f32 %v427
        %v460 = vcvt.s32.f32 %v428
        %v461 = vcvt.s32.f32 %v429
        %v462 = vcvt.s32.f32 %v430
        %v463 = vcvt.s32.f32 %v431
        %v464 = vcvt.s32.f32 %v432
        %v465 = vcvt.s32.f32 %v433
        %v466 = vcvt.s32.f32 %v434
        %v467 = vcvt.s32.f32 %v435
        %v468 = vcvt.s32.f32 %v436
        %v469 = vcvt.s32.f32 %v437
        %v470 = vcvt.s32.f32 %v438
        %v471 = vcvt.s32.f32 %v439
        %v472 = vcvt.s32.f32 %v440
        %v473 = vcvt.s32.f32 %v441
        %v474 = vcvt.s32.f32 %v442
        %v475 = vcvt.s32.f32 %v443
        %v476 = vcvt.s32.f32 %v444
        %v477 = vcvt.s32.f32 %v445
        %v478 = vcvt.s32.f32 %v446
        %v479 = vcvt.s32.f32 %v447
        %v480 = vcvt.s32.f32 %v448
        %v481 = vcvt.s32.f32 %v449
        %v482 = vcvt.s32.f32 %v450
        %v483 = vcvt.s32.f32 %v451
        %v484 = vcvt.s32.f32 %v452
        %v485 = vcvt.s32.f32 %v453
        %v486 = vcvt.s32.f32 %v454
        %v487 = vcvt.s32.f32 %v455
        %v488 = vcvt.s32.f32 %v456
        %v489 = vcvt.s32.f32 %v457
        %v490 = vperm.slane %v392, 0
        %vm491 = vcmp.eq.s32.totalorder %v359, %v490
        %vm492 = vcmp.eq.s32.totalorder %v360, %v490
        %vm493 = vcmp.eq.s32.totalorder %v361, %v490
        %vm494 = vcmp.eq.s32.totalorder %v362, %v490
        %vm495 = vcmp.eq.s32.totalorder %v363, %v490
        %vm496 = vcmp.eq.s32.totalorder %v364, %v490
        %vm497 = vcmp.eq.s32.totalorder %v365, %v490
        %vm498 = vcmp.eq.s32.totalorder %v366, %v490
        %vm499 = vcmp.eq.s32.totalorder %v367, %v490
        %vm500 = vcmp.eq.s32.totalorder %v368, %v490
        %vm501 = vcmp.eq.s32.totalorder %v369, %v490
        %vm502 = vcmp.eq.s32.totalorder %v370, %v490
        %vm503 = vcmp.eq.s32.totalorder %v371, %v490
        %vm504 = vcmp.eq.s32.totalorder %v372, %v490
        %vm505 = vcmp.eq.s32.totalorder %v373, %v490
        %vm506 = vcmp.eq.s32.totalorder %v374, %v490
        %vm507 = vcmp.eq.s32.totalorder %v375, %v490
        %vm508 = vcmp.eq.s32.totalorder %v376, %v490
        %vm509 = vcmp.eq.s32.totalorder %v377, %v490
        %vm510 = vcmp.eq.s32.totalorder %v378, %v490
        %vm511 = vcmp.eq.s32.totalorder %v379, %v490
        %vm512 = vcmp.eq.s32.totalorder %v380, %v490
        %vm513 = vcmp.eq.s32.totalorder %v381, %v490
        %vm514 = vcmp.eq.s32.totalorder %v382, %v490
        %vm515 = vcmp.eq.s32.totalorder %v383, %v490
        %vm516 = vcmp.eq.s32.totalorder %v384, %v490
        %vm517 = vcmp.eq.s32.totalorder %v385, %v490
        %vm518 = vcmp.eq.s32.totalorder %v386, %v490
        %vm519 = vcmp.eq.s32.totalorder %v387, %v490
        %vm520 = vcmp.eq.s32.totalorder %v388, %v490
        %vm521 = vcmp.eq.s32.totalorder %v389, %v490
        %vm522 = vcmp.eq.s32.totalorder %v390, %v490
        %v523 = vsel %vm491, 1, 0
        %v524 = vsel %vm492, 1, 0
        %v525 = vsel %vm493, 1, 0
        %v526 = vsel %vm494, 1, 0
        %v527 = vsel %vm495, 1, 0
        %v528 = vsel %vm496, 1, 0
        %v529 = vsel %vm497, 1, 0
        %v530 = vsel %vm498, 1, 0
        %v531 = vsel %vm499, 1, 0
        %v532 = vsel %vm500, 1, 0
        %v533 = vsel %vm501, 1, 0
        %v534 = vsel %vm502, 1, 0
        %v535 = vsel %vm503, 1, 0
        %v536 = vsel %vm504, 1, 0
        %v537 = vsel %vm505, 1, 0
        %v538 = vsel %vm506, 1, 0
        %v539 = vsel %vm507, 1, 0
        %v540 = vsel %vm508, 1, 0
        %v541 = vsel %vm509, 1, 0
        %v542 = vsel %vm510, 1, 0
        %v543 = vsel %vm511, 1, 0
        %v544 = vsel %vm512, 1, 0
        %v545 = vsel %vm513, 1, 0
        %v546 = vsel %vm514, 1, 0
        %v547 = vsel %vm515, 1, 0
        %v548 = vsel %vm516, 1, 0
        %v549 = vsel %vm517, 1, 0
        %v550 = vsel %vm518, 1, 0
        %v551 = vsel %vm519, 1, 0
        %v552 = vsel %vm520, 1, 0
        %v553 = vsel %vm521, 1, 0
        %v554 = vsel %vm522, 1, 0
        %v555 = vcvt.s32.f32 %v523
        %v556 = vcvt.s32.f32 %v524
        %v557 = vcvt.s32.f32 %v525
        %v558 = vcvt.s32.f32 %v526
        %v559 = vcvt.s32.f32 %v527
        %v560 = vcvt.s32.f32 %v528
        %v561 = vcvt.s32.f32 %v529
        %v562 = vcvt.s32.f32 %v530
        %v563 = vcvt.s32.f32 %v531
        %v564 = vcvt.s32.f32 %v532
        %v565 = vcvt.s32.f32 %v533
        %v566 = vcvt.s32.f32 %v534
        %v567 = vcvt.s32.f32 %v535
        %v568 = vcvt.s32.f32 %v536
        %v569 = vcvt.s32.f32 %v537
        %v570 = vcvt.s32.f32 %v538
        %v571 = vcvt.s32.f32 %v539
        %v572 = vcvt.s32.f32 %v540
        %v573 = vcvt.s32.f32 %v541
        %v574 = vcvt.s32.f32 %v542
        %v575 = vcvt.s32.f32 %v543
        %v576 = vcvt.s32.f32 %v544
        %v577 = vcvt.s32.f32 %v545
        %v578 = vcvt.s32.f32 %v546
        %v579 = vcvt.s32.f32 %v547
        %v580 = vcvt.s32.f32 %v548
        %v581 = vcvt.s32.f32 %v549
        %v582 = vcvt.s32.f32 %v550
        %v583 = vcvt.s32.f32 %v551
        %v584 = vcvt.s32.f32 %v552
        %v585 = vcvt.s32.f32 %v553
        %v586 = vcvt.s32.f32 %v554
        %v587 = vsub.f32 %v458, %v555
        %v588 = vsub.f32 %v459, %v556
        %v589 = vsub.f32 %v460, %v557
        %v590 = vsub.f32 %v461, %v558
        %v591 = vsub.f32 %v462, %v559
        %v592 = vsub.f32 %v463, %v560
        %v593 = vsub.f32 %v464, %v561
        %v594 = vsub.f32 %v465, %v562
        %v595 = vsub.f32 %v466, %v563
        %v596 = vsub.f32 %v467, %v564
        %v597 = vsub.f32 %v468, %v565
        %v598 = vsub.f32 %v469, %v566
        %v599 = vsub.f32 %v470, %v567
        %v600 = vsub.f32 %v471, %v568
        %v601 = vsub.f32 %v472, %v569
        %v602 = vsub.f32 %v473, %v570
        %v603 = vsub.f32 %v474, %v571
        %v604 = vsub.f32 %v475, %v572
        %v605 = vsub.f32 %v476, %v573
        %v606 = vsub.f32 %v477, %v574
        %v607 = vsub.f32 %v478, %v575
        %v608 = vsub.f32 %v479, %v576
        %v609 = vsub.f32 %v480, %v577
        %v610 = vsub.f32 %v481, %v578
        %v611 = vsub.f32 %v482, %v579
        %v612 = vsub.f32 %v483, %v580
        %v613 = vsub.f32 %v484, %v581
        %v614 = vsub.f32 %v485, %v582
        %v615 = vsub.f32 %v486, %v583
        %v616 = vsub.f32 %v487, %v584
        %v617 = vsub.f32 %v488, %v585
        %v618 = vsub.f32 %v489, %v586
        %619 = vst [vmem:[#allocation2] sm:$0xff] %v587
        %620 = vst [vmem:[#allocation2 + $0x40] sm:$0xff] %v588
        %621 = vst [vmem:[#allocation2 + $0x80] sm:$0xff] %v589
        %622 = vst [vmem:[#allocation2 + $0xc0] sm:$0xff] %v590
        %623 = vst [vmem:[#allocation2 + $0x100] sm:$0xff] %v591
        %624 = vst [vmem:[#allocation2 + $0x140] sm:$0xff] %v592
        %625 = vst [vmem:[#allocation2 + $0x180] sm:$0xff] %v593
        %626 = vst [vmem:[#allocation2 + $0x1c0] sm:$0xff] %v594
        %627 = vst [vmem:[#allocation2 + $0x200] sm:$0xff] %v595
        %628 = vst [vmem:[#allocation2 + $0x240] sm:$0xff] %v596
        %629 = vst [vmem:[#allocation2 + $0x280] sm:$0xff] %v597
        %630 = vst [vmem:[#allocation2 + $0x2c0] sm:$0xff] %v598
        %631 = vst [vmem:[#allocation2 + $0x300] sm:$0xff] %v599
        %632 = vst [vmem:[#allocation2 + $0x340] sm:$0xff] %v600
        %633 = vst [vmem:[#allocation2 + $0x380] sm:$0xff] %v601
        %634 = vst [vmem:[#allocation2 + $0x3c0] sm:$0xff] %v602
        %635 = vst [vmem:[#allocation2 + $0x400] sm:$0xff] %v603
        %636 = vst [vmem:[#allocation2 + $0x440] sm:$0xff] %v604
        %637 = vst [vmem:[#allocation2 + $0x480] sm:$0xff] %v605
        %638 = vst [vmem:[#allocation2 + $0x4c0] sm:$0xff] %v606
        %639 = vst [vmem:[#allocation2 + $0x500] sm:$0xff] %v607
        %640 = vst [vmem:[#allocation2 + $0x540] sm:$0xff] %v608
        %641 = vst [vmem:[#allocation2 + $0x580] sm:$0xff] %v609
        %642 = vst [vmem:[#allocation2 + $0x5c0] sm:$0xff] %v610
        %643 = vst [vmem:[#allocation2 + $0x600] sm:$0xff] %v611
        %644 = vst [vmem:[#allocation2 + $0x640] sm:$0xff] %v612
        %645 = vst [vmem:[#allocation2 + $0x680] sm:$0xff] %v613
        %646 = vst [vmem:[#allocation2 + $0x6c0] sm:$0xff] %v614
        %647 = vst [vmem:[#allocation2 + $0x700] sm:$0xff] %v615
        %648 = vst [vmem:[#allocation2 + $0x740] sm:$0xff] %v616
        %649 = vst [vmem:[#allocation2 + $0x780] sm:$0xff] %v617
        %650 = vst [vmem:[#allocation2 + $0x7c0] sm:$0xff] %v618
        %v651 = vperm.slane %v391, 1
        %vm652 = vcmp.eq.s32.totalorder %v359, %v651
        %vm653 = vcmp.eq.s32.totalorder %v360, %v651
        %vm654 = vcmp.eq.s32.totalorder %v361, %v651
        %vm655 = vcmp.eq.s32.totalorder %v362, %v651
        %vm656 = vcmp.eq.s32.totalorder %v363, %v651
        %vm657 = vcmp.eq.s32.totalorder %v364, %v651
        %vm658 = vcmp.eq.s32.totalorder %v365, %v651
        %vm659 = vcmp.eq.s32.totalorder %v366, %v651
        %vm660 = vcmp.eq.s32.totalorder %v367, %v651
        %vm661 = vcmp.eq.s32.totalorder %v368, %v651
        %vm662 = vcmp.eq.s32.totalorder %v369, %v651
        %vm663 = vcmp.eq.s32.totalorder %v370, %v651
        %vm664 = vcmp.eq.s32.totalorder %v371, %v651
        %vm665 = vcmp.eq.s32.totalorder %v372, %v651
        %vm666 = vcmp.eq.s32.totalorder %v373, %v651
        %vm667 = vcmp.eq.s32.totalorder %v374, %v651
        %vm668 = vcmp.eq.s32.totalorder %v375, %v651
        %vm669 = vcmp.eq.s32.totalorder %v376, %v651
        %vm670 = vcmp.eq.s32.totalorder %v377, %v651
        %vm671 = vcmp.eq.s32.totalorder %v378, %v651
        %vm672 = vcmp.eq.s32.totalorder %v379, %v651
        %vm673 = vcmp.eq.s32.totalorder %v380, %v651
        %vm674 = vcmp.eq.s32.totalorder %v381, %v651
        %vm675 = vcmp.eq.s32.totalorder %v382, %v651
        %vm676 = vcmp.eq.s32.totalorder %v383, %v651
        %vm677 = vcmp.eq.s32.totalorder %v384, %v651
        %vm678 = vcmp.eq.s32.totalorder %v385, %v651
        %vm679 = vcmp.eq.s32.totalorder %v386, %v651
        %vm680 = vcmp.eq.s32.totalorder %v387, %v651
        %vm681 = vcmp.eq.s32.totalorder %v388, %v651
        %vm682 = vcmp.eq.s32.totalorder %v389, %v651
        %vm683 = vcmp.eq.s32.totalorder %v390, %v651
        %v684 = vsel %vm652, 1, 0
        %v685 = vsel %vm653, 1, 0
        %v686 = vsel %vm654, 1, 0
        %v687 = vsel %vm655, 1, 0
        %v688 = vsel %vm656, 1, 0
        %v689 = vsel %vm657, 1, 0
        %v690 = vsel %vm658, 1, 0
        %v691 = vsel %vm659, 1, 0
        %v692 = vsel %vm660, 1, 0
        %v693 = vsel %vm661, 1, 0
        %v694 = vsel %vm662, 1, 0
        %v695 = vsel %vm663, 1, 0
        %v696 = vsel %vm664, 1, 0
        %v697 = vsel %vm665, 1, 0
        %v698 = vsel %vm666, 1, 0
        %v699 = vsel %vm667, 1, 0
        %v700 = vsel %vm668, 1, 0
        %v701 = vsel %vm669, 1, 0
        %v702 = vsel %vm670, 1, 0
        %v703 = vsel %vm671, 1, 0
        %v704 = vsel %vm672, 1, 0
        %v705 = vsel %vm673, 1, 0
        %v706 = vsel %vm674, 1, 0
        %v707 = vsel %vm675, 1, 0
        %v708 = vsel %vm676, 1, 0
        %v709 = vsel %vm677, 1, 0
        %v710 = vsel %vm678, 1, 0
        %v711 = vsel %vm679, 1, 0
        %v712 = vsel %vm680, 1, 0
        %v713 = vsel %vm681, 1, 0
        %v714 = vsel %vm682, 1, 0
        %v715 = vsel %vm683, 1, 0
        %v716 = vcvt.s32.f32 %v684
        %v717 = vcvt.s32.f32 %v685
        %v718 = vcvt.s32.f32 %v686
        %v719 = vcvt.s32.f32 %v687
        %v720 = vcvt.s32.f32 %v688
        %v721 = vcvt.s32.f32 %v689
        %v722 = vcvt.s32.f32 %v690
        %v723 = vcvt.s32.f32 %v691
        %v724 = vcvt.s32.f32 %v692
        %v725 = vcvt.s32.f32 %v693
        %v726 = vcvt.s32.f32 %v694
        %v727 = vcvt.s32.f32 %v695
        %v728 = vcvt.s32.f32 %v696
        %v729 = vcvt.s32.f32 %v697
        %v730 = vcvt.s32.f32 %v698
        %v731 = vcvt.s32.f32 %v699
        %v732 = vcvt.s32.f32 %v700
        %v733 = vcvt.s32.f32 %v701
        %v734 = vcvt.s32.f32 %v702
        %v735 = vcvt.s32.f32 %v703
        %v736 = vcvt.s32.f32 %v704
        %v737 = vcvt.s32.f32 %v705
        %v738 = vcvt.s32.f32 %v706
        %v739 = vcvt.s32.f32 %v707
        %v740 = vcvt.s32.f32 %v708
        %v741 = vcvt.s32.f32 %v709
        %v742 = vcvt.s32.f32 %v710
        %v743 = vcvt.s32.f32 %v711
        %v744 = vcvt.s32.f32 %v712
        %v745 = vcvt.s32.f32 %v713
        %v746 = vcvt.s32.f32 %v714
        %v747 = vcvt.s32.f32 %v715
        %v748 = vperm.slane %v392, 1
        %vm749 = vcmp.eq.s32.totalorder %v359, %v748
        %vm750 = vcmp.eq.s32.totalorder %v360, %v748
        %vm751 = vcmp.eq.s32.totalorder %v361, %v748
        %vm752 = vcmp.eq.s32.totalorder %v362, %v748
        %vm753 = vcmp.eq.s32.totalorder %v363, %v748
        %vm754 = vcmp.eq.s32.totalorder %v364, %v748
        %vm755 = vcmp.eq.s32.totalorder %v365, %v748
        %vm756 = vcmp.eq.s32.totalorder %v366, %v748
        %vm757 = vcmp.eq.s32.totalorder %v367, %v748
        %vm758 = vcmp.eq.s32.totalorder %v368, %v748
        %vm759 = vcmp.eq.s32.totalorder %v369, %v748
        %vm760 = vcmp.eq.s32.totalorder %v370, %v748
        %vm761 = vcmp.eq.s32.totalorder %v371, %v748
        %vm762 = vcmp.eq.s32.totalorder %v372, %v748
        %vm763 = vcmp.eq.s32.totalorder %v373, %v748
        %vm764 = vcmp.eq.s32.totalorder %v374, %v748
        %vm765 = vcmp.eq.s32.totalorder %v375, %v748
        %vm766 = vcmp.eq.s32.totalorder %v376, %v748
        %vm767 = vcmp.eq.s32.totalorder %v377, %v748
        %vm768 = vcmp.eq.s32.totalorder %v378, %v748
        %vm769 = vcmp.eq.s32.totalorder %v379, %v748
        %vm770 = vcmp.eq.s32.totalorder %v380, %v748
        %vm771 = vcmp.eq.s32.totalorder %v381, %v748
        %vm772 = vcmp.eq.s32.totalorder %v382, %v748
        %vm773 = vcmp.eq.s32.totalorder %v383, %v748
        %vm774 = vcmp.eq.s32.totalorder %v384, %v748
        %vm775 = vcmp.eq.s32.totalorder %v385, %v748
        %vm776 = vcmp.eq.s32.totalorder %v386, %v748
        %vm777 = vcmp.eq.s32.totalorder %v387, %v748
        %vm778 = vcmp.eq.s32.totalorder %v388, %v748
        %vm779 = vcmp.eq.s32.totalorder %v389, %v748
        %vm780 = vcmp.eq.s32.totalorder %v390, %v748
        %v781 = vsel %vm749, 1, 0
        %v782 = vsel %vm750, 1, 0
        %v783 = vsel %vm751, 1, 0
        %v784 = vsel %vm752, 1, 0
        %v785 = vsel %vm753, 1, 0
        %v786 = vsel %vm754, 1, 0
        %v787 = vsel %vm755, 1, 0
        %v788 = vsel %vm756, 1, 0
        %v789 = vsel %vm757, 1, 0
        %v790 = vsel %vm758, 1, 0
        %v791 = vsel %vm759, 1, 0
        %v792 = vsel %vm760, 1, 0
        %v793 = vsel %vm761, 1, 0
        %v794 = vsel %vm762, 1, 0
        %v795 = vsel %vm763, 1, 0
        %v796 = vsel %vm764, 1, 0
        %v797 = vsel %vm765, 1, 0
        %v798 = vsel %vm766, 1, 0
        %v799 = vsel %vm767, 1, 0
        %v800 = vsel %vm768, 1, 0
        %v801 = vsel %vm769, 1, 0
        %v802 = vsel %vm770, 1, 0
        %v803 = vsel %vm771, 1, 0
        %v804 = vsel %vm772, 1, 0
        %v805 = vsel %vm773, 1, 0
        %v806 = vsel %vm774, 1, 0
        %v807 = vsel %vm775, 1, 0
        %v808 = vsel %vm776, 1, 0
        %v809 = vsel %vm777, 1, 0
        %v810 = vsel %vm778, 1, 0
        %v811 = vsel %vm779, 1, 0
        %v812 = vsel %vm780, 1, 0
        %v813 = vcvt.s32.f32 %v781
        %v814 = vcvt.s32.f32 %v782
        %v815 = vcvt.s32.f32 %v783
        %v816 = vcvt.s32.f32 %v784
        %v817 = vcvt.s32.f32 %v785
        %v818 = vcvt.s32.f32 %v786
        %v819 = vcvt.s32.f32 %v787
        %v820 = vcvt.s32.f32 %v788
        %v821 = vcvt.s32.f32 %v789
        %v822 = vcvt.s32.f32 %v790
        %v823 = vcvt.s32.f32 %v791
        %v824 = vcvt.s32.f32 %v792
        %v825 = vcvt.s32.f32 %v793
        %v826 = vcvt.s32.f32 %v794
        %v827 = vcvt.s32.f32 %v795
        %v828 = vcvt.s32.f32 %v796
        %v829 = vcvt.s32.f32 %v797
        %v830 = vcvt.s32.f32 %v798
        %v831 = vcvt.s32.f32 %v799
        %v832 = vcvt.s32.f32 %v800
        %v833 = vcvt.s32.f32 %v801
        %v834 = vcvt.s32.f32 %v802
        %v835 = vcvt.s32.f32 %v803
        %v836 = vcvt.s32.f32 %v804
        %v837 = vcvt.s32.f32 %v805
        %v838 = vcvt.s32.f32 %v806
        %v839 = vcvt.s32.f32 %v807
        %v840 = vcvt.s32.f32 %v808
        %v841 = vcvt.s32.f32 %v809
        %v842 = vcvt.s32.f32 %v810
        %v843 = vcvt.s32.f32 %v811
        %v844 = vcvt.s32.f32 %v812
        %v845 = vsub.f32 %v716, %v813
        %v846 = vsub.f32 %v717, %v814
        %v847 = vsub.f32 %v718, %v815
        %v848 = vsub.f32 %v719, %v816
        %v849 = vsub.f32 %v720, %v817
        %v850 = vsub.f32 %v721, %v818
        %v851 = vsub.f32 %v722, %v819
        %v852 = vsub.f32 %v723, %v820
        %v853 = vsub.f32 %v724, %v821
        %v854 = vsub.f32 %v725, %v822
        %v855 = vsub.f32 %v726, %v823
        %v856 = vsub.f32 %v727, %v824
        %v857 = vsub.f32 %v728, %v825
        %v858 = vsub.f32 %v729, %v826
        %v859 = vsub.f32 %v730, %v827
        %v860 = vsub.f32 %v731, %v828
        %v861 = vsub.f32 %v732, %v829
        %v862 = vsub.f32 %v733, %v830
        %v863 = vsub.f32 %v734, %v831
        %v864 = vsub.f32 %v735, %v832
        %v865 = vsub.f32 %v736, %v833
        %v866 = vsub.f32 %v737, %v834
        %v867 = vsub.f32 %v738, %v835
        %v868 = vsub.f32 %v739, %v836
        %v869 = vsub.f32 %v740, %v837
        %v870 = vsub.f32 %v741, %v838
        %v871 = vsub.f32 %v742, %v839
        %v872 = vsub.f32 %v743, %v840
        %v873 = vsub.f32 %v744, %v841
        %v874 = vsub.f32 %v745, %v842
        %v875 = vsub.f32 %v746, %v843
        %v876 = vsub.f32 %v747, %v844
        %877 = vst [vmem:[#allocation2 + $0x8] sm:$0xff] %v845
        %878 = vst [vmem:[#allocation2 + $0x48] sm:$0xff] %v846
        %879 = vst [vmem:[#allocation2 + $0x88] sm:$0xff] %v847
        %880 = vst [vmem:[#allocation2 + $0xc8] sm:$0xff] %v848
        %881 = vst [vmem:[#allocation2 + $0x108] sm:$0xff] %v849
        %882 = vst [vmem:[#allocation2 + $0x148] sm:$0xff] %v850
        %883 = vst [vmem:[#allocation2 + $0x188] sm:$0xff] %v851
        %884 = vst [vmem:[#allocation2 + $0x1c8] sm:$0xff] %v852
        %885 = vst [vmem:[#allocation2 + $0x208] sm:$0xff] %v853
        %886 = vst [vmem:[#allocation2 + $0x248] sm:$0xff] %v854
        %887 = vst [vmem:[#allocation2 + $0x288] sm:$0xff] %v855
        %888 = vst [vmem:[#allocation2 + $0x2c8] sm:$0xff] %v856
        %889 = vst [vmem:[#allocation2 + $0x308] sm:$0xff] %v857
        %890 = vst [vmem:[#allocation2 + $0x348] sm:$0xff] %v858
        %891 = vst [vmem:[#allocation2 + $0x388] sm:$0xff] %v859
        %892 = vst [vmem:[#allocation2 + $0x3c8] sm:$0xff] %v860
        %893 = vst [vmem:[#allocation2 + $0x408] sm:$0xff] %v861
        %894 = vst [vmem:[#allocation2 + $0x448] sm:$0xff] %v862
        %895 = vst [vmem:[#allocation2 + $0x488] sm:$0xff] %v863
        %896 = vst [vmem:[#allocation2 + $0x4c8] sm:$0xff] %v864
        %897 = vst [vmem:[#allocation2 + $0x508] sm:$0xff] %v865
        %898 = vst [vmem:[#allocation2 + $0x548] sm:$0xff] %v866
        %899 = vst [vmem:[#allocation2 + $0x588] sm:$0xff] %v867
        %900 = vst [vmem:[#allocation2 + $0x5c8] sm:$0xff] %v868
        %901 = vst [vmem:[#allocation2 + $0x608] sm:$0xff] %v869
        %902 = vst [vmem:[#allocation2 + $0x648] sm:$0xff] %v870
        %903 = vst [vmem:[#allocation2 + $0x688] sm:$0xff] %v871
        %904 = vst [vmem:[#allocation2 + $0x6c8] sm:$0xff] %v872
        %905 = vst [vmem:[#allocation2 + $0x708] sm:$0xff] %v873
        %906 = vst [vmem:[#allocation2 + $0x748] sm:$0xff] %v874
        %907 = vst [vmem:[#allocation2 + $0x788] sm:$0xff] %v875
        %908 = vst [vmem:[#allocation2 + $0x7c8] sm:$0xff] %v876
        %v909 = vperm.slane %v391, 2
        %vm910 = vcmp.eq.s32.totalorder %v359, %v909
        %vm911 = vcmp.eq.s32.totalorder %v360, %v909
        %vm912 = vcmp.eq.s32.totalorder %v361, %v909
        %vm913 = vcmp.eq.s32.totalorder %v362, %v909
        %vm914 = vcmp.eq.s32.totalorder %v363, %v909
        %vm915 = vcmp.eq.s32.totalorder %v364, %v909
        %vm916 = vcmp.eq.s32.totalorder %v365, %v909
        %vm917 = vcmp.eq.s32.totalorder %v366, %v909
        %vm918 = vcmp.eq.s32.totalorder %v367, %v909
        %vm919 = vcmp.eq.s32.totalorder %v368, %v909
        %vm920 = vcmp.eq.s32.totalorder %v369, %v909
        %vm921 = vcmp.eq.s32.totalorder %v370, %v909
        %vm922 = vcmp.eq.s32.totalorder %v371, %v909
        %vm923 = vcmp.eq.s32.totalorder %v372, %v909
        %vm924 = vcmp.eq.s32.totalorder %v373, %v909
        %vm925 = vcmp.eq.s32.totalorder %v374, %v909
        %vm926 = vcmp.eq.s32.totalorder %v375, %v909
        %vm927 = vcmp.eq.s32.totalorder %v376, %v909
        %vm928 = vcmp.eq.s32.totalorder %v377, %v909
        %vm929 = vcmp.eq.s32.totalorder %v378, %v909
        %vm930 = vcmp.eq.s32.totalorder %v379, %v909
        %vm931 = vcmp.eq.s32.totalorder %v380, %v909
        %vm932 = vcmp.eq.s32.totalorder %v381, %v909
        %vm933 = vcmp.eq.s32.totalorder %v382, %v909
        %vm934 = vcmp.eq.s32.totalorder %v383, %v909
        %vm935 = vcmp.eq.s32.totalorder %v384, %v909
        %vm936 = vcmp.eq.s32.totalorder %v385, %v909
        %vm937 = vcmp.eq.s32.totalorder %v386, %v909
        %vm938 = vcmp.eq.s32.totalorder %v387, %v909
        %vm939 = vcmp.eq.s32.totalorder %v388, %v909
        %vm940 = vcmp.eq.s32.totalorder %v389, %v909
        %vm941 = vcmp.eq.s32.totalorder %v390, %v909
        %v942 = vsel %vm910, 1, 0
        %v943 = vsel %vm911, 1, 0
        %v944 = vsel %vm912, 1, 0
        %v945 = vsel %vm913, 1, 0
        %v946 = vsel %vm914, 1, 0
        %v947 = vsel %vm915, 1, 0
        %v948 = vsel %vm916, 1, 0
        %v949 = vsel %vm917, 1, 0
        %v950 = vsel %vm918, 1, 0
        %v951 = vsel %vm919, 1, 0
        %v952 = vsel %vm920, 1, 0
        %v953 = vsel %vm921, 1, 0
        %v954 = vsel %vm922, 1, 0
        %v955 = vsel %vm923, 1, 0
        %v956 = vsel %vm924, 1, 0
        %v957 = vsel %vm925, 1, 0
        %v958 = vsel %vm926, 1, 0
        %v959 = vsel %vm927, 1, 0
        %v960 = vsel %vm928, 1, 0
        %v961 = vsel %vm929, 1, 0
        %v962 = vsel %vm930, 1, 0
        %v963 = vsel %vm931, 1, 0
        %v964 = vsel %vm932, 1, 0
        %v965 = vsel %vm933, 1, 0
        %v966 = vsel %vm934, 1, 0
        %v967 = vsel %vm935, 1, 0
        %v968 = vsel %vm936, 1, 0
        %v969 = vsel %vm937, 1, 0
        %v970 = vsel %vm938, 1, 0
        %v971 = vsel %vm939, 1, 0
        %v972 = vsel %vm940, 1, 0
        %v973 = vsel %vm941, 1, 0
        %v974 = vcvt.s32.f32 %v942
        %v975 = vcvt.s32.f32 %v943
        %v976 = vcvt.s32.f32 %v944
        %v977 = vcvt.s32.f32 %v945
        %v978 = vcvt.s32.f32 %v946
        %v979 = vcvt.s32.f32 %v947
        %v980 = vcvt.s32.f32 %v948
        %v981 = vcvt.s32.f32 %v949
        %v982 = vcvt.s32.f32 %v950
        %v983 = vcvt.s32.f32 %v951
        %v984 = vcvt.s32.f32 %v952
        %v985 = vcvt.s32.f32 %v953
        %v986 = vcvt.s32.f32 %v954
        %v987 = vcvt.s32.f32 %v955
        %v988 = vcvt.s32.f32 %v956
        %v989 = vcvt.s32.f32 %v957
        %v990 = vcvt.s32.f32 %v958
        %v991 = vcvt.s32.f32 %v959
        %v992 = vcvt.s32.f32 %v960
        %v993 = vcvt.s32.f32 %v961
        %v994 = vcvt.s32.f32 %v962
        %v995 = vcvt.s32.f32 %v963
        %v996 = vcvt.s32.f32 %v964
        %v997 = vcvt.s32.f32 %v965
        %v998 = vcvt.s32.f32 %v966
        %v999 = vcvt.s32.f32 %v967
        %v1000 = vcvt.s32.f32 %v968
        %v1001 = vcvt.s32.f32 %v969
        %v1002 = vcvt.s32.f32 %v970
        %v1003 = vcvt.s32.f32 %v971
        %v1004 = vcvt.s32.f32 %v972
        %v1005 = vcvt.s32.f32 %v973
        %v1006 = vperm.slane %v392, 2
        %vm1007 = vcmp.eq.s32.totalorder %v359, %v1006
        %vm1008 = vcmp.eq.s32.totalorder %v360, %v1006
        %vm1009 = vcmp.eq.s32.totalorder %v361, %v1006
        %vm1010 = vcmp.eq.s32.totalorder %v362, %v1006
        %vm1011 = vcmp.eq.s32.totalorder %v363, %v1006
        %vm1012 = vcmp.eq.s32.totalorder %v364, %v1006
        %vm1013 = vcmp.eq.s32.totalorder %v365, %v1006
        %vm1014 = vcmp.eq.s32.totalorder %v366, %v1006
        %vm1015 = vcmp.eq.s32.totalorder %v367, %v1006
        %vm1016 = vcmp.eq.s32.totalorder %v368, %v1006
        %vm1017 = vcmp.eq.s32.totalorder %v369, %v1006
        %vm1018 = vcmp.eq.s32.totalorder %v370, %v1006
        %vm1019 = vcmp.eq.s32.totalorder %v371, %v1006
        %vm1020 = vcmp.eq.s32.totalorder %v372, %v1006
        %vm1021 = vcmp.eq.s32.totalorder %v373, %v1006
        %vm1022 = vcmp.eq.s32.totalorder %v374, %v1006
        %vm1023 = vcmp.eq.s32.totalorder %v375, %v1006
        %vm1024 = vcmp.eq.s32.totalorder %v376, %v1006
        %vm1025 = vcmp.eq.s32.totalorder %v377, %v1006
        %vm1026 = vcmp.eq.s32.totalorder %v378, %v1006
        %vm1027 = vcmp.eq.s32.totalorder %v379, %v1006
        %vm1028 = vcmp.eq.s32.totalorder %v380, %v1006
        %vm1029 = vcmp.eq.s32.totalorder %v381, %v1006
        %vm1030 = vcmp.eq.s32.totalorder %v382, %v1006
        %vm1031 = vcmp.eq.s32.totalorder %v383, %v1006
        %vm1032 = vcmp.eq.s32.totalorder %v384, %v1006
        %vm1033 = vcmp.eq.s32.totalorder %v385, %v1006
        %vm1034 = vcmp.eq.s32.totalorder %v386, %v1006
        %vm1035 = vcmp.eq.s32.totalorder %v387, %v1006
        %vm1036 = vcmp.eq.s32.totalorder %v388, %v1006
        %vm1037 = vcmp.eq.s32.totalorder %v389, %v1006
        %vm1038 = vcmp.eq.s32.totalorder %v390, %v1006
        %v1039 = vsel %vm1007, 1, 0
        %v1040 = vsel %vm1008, 1, 0
        %v1041 = vsel %vm1009, 1, 0
        %v1042 = vsel %vm1010, 1, 0
        %v1043 = vsel %vm1011, 1, 0
        %v1044 = vsel %vm1012, 1, 0
        %v1045 = vsel %vm1013, 1, 0
        %v1046 = vsel %vm1014, 1, 0
        %v1047 = vsel %vm1015, 1, 0
        %v1048 = vsel %vm1016, 1, 0
        %v1049 = vsel %vm1017, 1, 0
        %v1050 = vsel %vm1018, 1, 0
        %v1051 = vsel %vm1019, 1, 0
        %v1052 = vsel %vm1020, 1, 0
        %v1053 = vsel %vm1021, 1, 0
        %v1054 = vsel %vm1022, 1, 0
        %v1055 = vsel %vm1023, 1, 0
        %v1056 = vsel %vm1024, 1, 0
        %v1057 = vsel %vm1025, 1, 0
        %v1058 = vsel %vm1026, 1, 0
        %v1059 = vsel %vm1027, 1, 0
        %v1060 = vsel %vm1028, 1, 0
        %v1061 = vsel %vm1029, 1, 0
        %v1062 = vsel %vm1030, 1, 0
        %v1063 = vsel %vm1031, 1, 0
        %v1064 = vsel %vm1032, 1, 0
        %v1065 = vsel %vm1033, 1, 0
        %v1066 = vsel %vm1034, 1, 0
        %v1067 = vsel %vm1035, 1, 0
        %v1068 = vsel %vm1036, 1, 0
        %v1069 = vsel %vm1037, 1, 0
        %v1070 = vsel %vm1038, 1, 0
        %v1071 = vcvt.s32.f32 %v1039
        %v1072 = vcvt.s32.f32 %v1040
        %v1073 = vcvt.s32.f32 %v1041
        %v1074 = vcvt.s32.f32 %v1042
        %v1075 = vcvt.s32.f32 %v1043
        %v1076 = vcvt.s32.f32 %v1044
        %v1077 = vcvt.s32.f32 %v1045
        %v1078 = vcvt.s32.f32 %v1046
        %v1079 = vcvt.s32.f32 %v1047
        %v1080 = vcvt.s32.f32 %v1048
        %v1081 = vcvt.s32.f32 %v1049
        %v1082 = vcvt.s32.f32 %v1050
        %v1083 = vcvt.s32.f32 %v1051
        %v1084 = vcvt.s32.f32 %v1052
        %v1085 = vcvt.s32.f32 %v1053
        %v1086 = vcvt.s32.f32 %v1054
        %v1087 = vcvt.s32.f32 %v1055
        %v1088 = vcvt.s32.f32 %v1056
        %v1089 = vcvt.s32.f32 %v1057
        %v1090 = vcvt.s32.f32 %v1058
        %v1091 = vcvt.s32.f32 %v1059
        %v1092 = vcvt.s32.f32 %v1060
        %v1093 = vcvt.s32.f32 %v1061
        %v1094 = vcvt.s32.f32 %v1062
        %v1095 = vcvt.s32.f32 %v1063
        %v1096 = vcvt.s32.f32 %v1064
        %v1097 = vcvt.s32.f32 %v1065
        %v1098 = vcvt.s32.f32 %v1066
        %v1099 = vcvt.s32.f32 %v1067
        %v1100 = vcvt.s32.f32 %v1068
        %v1101 = vcvt.s32.f32 %v1069
        %v1102 = vcvt.s32.f32 %v1070
        %v1103 = vsub.f32 %v974, %v1071
        %v1104 = vsub.f32 %v975, %v1072
        %v1105 = vsub.f32 %v976, %v1073
        %v1106 = vsub.f32 %v977, %v1074
        %v1107 = vsub.f32 %v978, %v1075
        %v1108 = vsub.f32 %v979, %v1076
        %v1109 = vsub.f32 %v980, %v1077
        %v1110 = vsub.f32 %v981, %v1078
        %v1111 = vsub.f32 %v982, %v1079
        %v1112 = vsub.f32 %v983, %v1080
        %v1113 = vsub.f32 %v984, %v1081
        %v1114 = vsub.f32 %v985, %v1082
        %v1115 = vsub.f32 %v986, %v1083
        %v1116 = vsub.f32 %v987, %v1084
        %v1117 = vsub.f32 %v988, %v1085
        %v1118 = vsub.f32 %v989, %v1086
        %v1119 = vsub.f32 %v990, %v1087
        %v1120 = vsub.f32 %v991, %v1088
        %v1121 = vsub.f32 %v992, %v1089
        %v1122 = vsub.f32 %v993, %v1090
        %v1123 = vsub.f32 %v994, %v1091
        %v1124 = vsub.f32 %v995, %v1092
        %v1125 = vsub.f32 %v996, %v1093
        %v1126 = vsub.f32 %v997, %v1094
        %v1127 = vsub.f32 %v998, %v1095
        %v1128 = vsub.f32 %v999, %v1096
        %v1129 = vsub.f32 %v1000, %v1097
        %v1130 = vsub.f32 %v1001, %v1098
        %v1131 = vsub.f32 %v1002, %v1099
        %v1132 = vsub.f32 %v1003, %v1100
        %v1133 = vsub.f32 %v1004, %v1101
        %v1134 = vsub.f32 %v1005, %v1102
        %1135 = vst [vmem:[#allocation2 + $0x10] sm:$0xff] %v1103
        %1136 = vst [vmem:[#allocation2 + $0x50] sm:$0xff] %v1104
        %1137 = vst [vmem:[#allocation2 + $0x90] sm:$0xff] %v1105
        %1138 = vst [vmem:[#allocation2 + $0xd0] sm:$0xff] %v1106
        %1139 = vst [vmem:[#allocation2 + $0x110] sm:$0xff] %v1107
        %1140 = vst [vmem:[#allocation2 + $0x150] sm:$0xff] %v1108
        %1141 = vst [vmem:[#allocation2 + $0x190] sm:$0xff] %v1109
        %1142 = vst [vmem:[#allocation2 + $0x1d0] sm:$0xff] %v1110
        %1143 = vst [vmem:[#allocation2 + $0x210] sm:$0xff] %v1111
        %1144 = vst [vmem:[#allocation2 + $0x250] sm:$0xff] %v1112
        %1145 = vst [vmem:[#allocation2 + $0x290] sm:$0xff] %v1113
        %1146 = vst [vmem:[#allocation2 + $0x2d0] sm:$0xff] %v1114
        %1147 = vst [vmem:[#allocation2 + $0x310] sm:$0xff] %v1115
        %1148 = vst [vmem:[#allocation2 + $0x350] sm:$0xff] %v1116
        %1149 = vst [vmem:[#allocation2 + $0x390] sm:$0xff] %v1117
        %1150 = vst [vmem:[#allocation2 + $0x3d0] sm:$0xff] %v1118
        %1151 = vst [vmem:[#allocation2 + $0x410] sm:$0xff] %v1119
        %1152 = vst [vmem:[#allocation2 + $0x450] sm:$0xff] %v1120
        %1153 = vst [vmem:[#allocation2 + $0x490] sm:$0xff] %v1121
        %1154 = vst [vmem:[#allocation2 + $0x4d0] sm:$0xff] %v1122
        %1155 = vst [vmem:[#allocation2 + $0x510] sm:$0xff] %v1123
        %1156 = vst [vmem:[#allocation2 + $0x550] sm:$0xff] %v1124
        %1157 = vst [vmem:[#allocation2 + $0x590] sm:$0xff] %v1125
        %1158 = vst [vmem:[#allocation2 + $0x5d0] sm:$0xff] %v1126
        %1159 = vst [vmem:[#allocation2 + $0x610] sm:$0xff] %v1127
        %1160 = vst [vmem:[#allocation2 + $0x650] sm:$0xff] %v1128
        %1161 = vst [vmem:[#allocation2 + $0x690] sm:$0xff] %v1129
        %1162 = vst [vmem:[#allocation2 + $0x6d0] sm:$0xff] %v1130
        %1163 = vst [vmem:[#allocation2 + $0x710] sm:$0xff] %v1131
        %1164 = vst [vmem:[#allocation2 + $0x750] sm:$0xff] %v1132
        %1165 = vst [vmem:[#allocation2 + $0x790] sm:$0xff] %v1133
        %1166 = vst [vmem:[#allocation2 + $0x7d0] sm:$0xff] %v1134
        %v1167 = vperm.slane %v391, 3
        %vm1168 = vcmp.eq.s32.totalorder %v359, %v1167
        %vm1169 = vcmp.eq.s32.totalorder %v360, %v1167
        %vm1170 = vcmp.eq.s32.totalorder %v361, %v1167
        %vm1171 = vcmp.eq.s32.totalorder %v362, %v1167
        %vm1172 = vcmp.eq.s32.totalorder %v363, %v1167
        %vm1173 = vcmp.eq.s32.totalorder %v364, %v1167
        %vm1174 = vcmp.eq.s32.totalorder %v365, %v1167
        %vm1175 = vcmp.eq.s32.totalorder %v366, %v1167
        %vm1176 = vcmp.eq.s32.totalorder %v367, %v1167
        %vm1177 = vcmp.eq.s32.totalorder %v368, %v1167
        %vm1178 = vcmp.eq.s32.totalorder %v369, %v1167
        %vm1179 = vcmp.eq.s32.totalorder %v370, %v1167
        %vm1180 = vcmp.eq.s32.totalorder %v371, %v1167
        %vm1181 = vcmp.eq.s32.totalorder %v372, %v1167
        %vm1182 = vcmp.eq.s32.totalorder %v373, %v1167
        %vm1183 = vcmp.eq.s32.totalorder %v374, %v1167
        %vm1184 = vcmp.eq.s32.totalorder %v375, %v1167
        %vm1185 = vcmp.eq.s32.totalorder %v376, %v1167
        %vm1186 = vcmp.eq.s32.totalorder %v377, %v1167
        %vm1187 = vcmp.eq.s32.totalorder %v378, %v1167
        %vm1188 = vcmp.eq.s32.totalorder %v379, %v1167
        %vm1189 = vcmp.eq.s32.totalorder %v380, %v1167
        %vm1190 = vcmp.eq.s32.totalorder %v381, %v1167
        %vm1191 = vcmp.eq.s32.totalorder %v382, %v1167
        %vm1192 = vcmp.eq.s32.totalorder %v383, %v1167
        %vm1193 = vcmp.eq.s32.totalorder %v384, %v1167
        %vm1194 = vcmp.eq.s32.totalorder %v385, %v1167
        %vm1195 = vcmp.eq.s32.totalorder %v386, %v1167
        %vm1196 = vcmp.eq.s32.totalorder %v387, %v1167
        %vm1197 = vcmp.eq.s32.totalorder %v388, %v1167
        %vm1198 = vcmp.eq.s32.totalorder %v389, %v1167
        %vm1199 = vcmp.eq.s32.totalorder %v390, %v1167
        %v1200 = vsel %vm1168, 1, 0
        %v1201 = vsel %vm1169, 1, 0
        %v1202 = vsel %vm1170, 1, 0
        %v1203 = vsel %vm1171, 1, 0
        %v1204 = vsel %vm1172, 1, 0
        %v1205 = vsel %vm1173, 1, 0
        %v1206 = vsel %vm1174, 1, 0
        %v1207 = vsel %vm1175, 1, 0
        %v1208 = vsel %vm1176, 1, 0
        %v1209 = vsel %vm1177, 1, 0
        %v1210 = vsel %vm1178, 1, 0
        %v1211 = vsel %vm1179, 1, 0
        %v1212 = vsel %vm1180, 1, 0
        %v1213 = vsel %vm1181, 1, 0
        %v1214 = vsel %vm1182, 1, 0
        %v1215 = vsel %vm1183, 1, 0
        %v1216 = vsel %vm1184, 1, 0
        %v1217 = vsel %vm1185, 1, 0
        %v1218 = vsel %vm1186, 1, 0
        %v1219 = vsel %vm1187, 1, 0
        %v1220 = vsel %vm1188, 1, 0
        %v1221 = vsel %vm1189, 1, 0
        %v1222 = vsel %vm1190, 1, 0
        %v1223 = vsel %vm1191, 1, 0
        %v1224 = vsel %vm1192, 1, 0
        %v1225 = vsel %vm1193, 1, 0
        %v1226 = vsel %vm1194, 1, 0
        %v1227 = vsel %vm1195, 1, 0
        %v1228 = vsel %vm1196, 1, 0
        %v1229 = vsel %vm1197, 1, 0
        %v1230 = vsel %vm1198, 1, 0
        %v1231 = vsel %vm1199, 1, 0
        %v1232 = vcvt.s32.f32 %v1200
        %v1233 = vcvt.s32.f32 %v1201
        %v1234 = vcvt.s32.f32 %v1202
        %v1235 = vcvt.s32.f32 %v1203
        %v1236 = vcvt.s32.f32 %v1204
        %v1237 = vcvt.s32.f32 %v1205
        %v1238 = vcvt.s32.f32 %v1206
        %v1239 = vcvt.s32.f32 %v1207
        %v1240 = vcvt.s32.f32 %v1208
        %v1241 = vcvt.s32.f32 %v1209
        %v1242 = vcvt.s32.f32 %v1210
        %v1243 = vcvt.s32.f32 %v1211
        %v1244 = vcvt.s32.f32 %v1212
        %v1245 = vcvt.s32.f32 %v1213
        %v1246 = vcvt.s32.f32 %v1214
        %v1247 = vcvt.s32.f32 %v1215
        %v1248 = vcvt.s32.f32 %v1216
        %v1249 = vcvt.s32.f32 %v1217
        %v1250 = vcvt.s32.f32 %v1218
        %v1251 = vcvt.s32.f32 %v1219
        %v1252 = vcvt.s32.f32 %v1220
        %v1253 = vcvt.s32.f32 %v1221
        %v1254 = vcvt.s32.f32 %v1222
        %v1255 = vcvt.s32.f32 %v1223
        %v1256 = vcvt.s32.f32 %v1224
        %v1257 = vcvt.s32.f32 %v1225
        %v1258 = vcvt.s32.f32 %v1226
        %v1259 = vcvt.s32.f32 %v1227
        %v1260 = vcvt.s32.f32 %v1228
        %v1261 = vcvt.s32.f32 %v1229
        %v1262 = vcvt.s32.f32 %v1230
        %v1263 = vcvt.s32.f32 %v1231
        %v1264 = vperm.slane %v392, 3
        %vm1265 = vcmp.eq.s32.totalorder %v359, %v1264
        %vm1266 = vcmp.eq.s32.totalorder %v360, %v1264
        %vm1267 = vcmp.eq.s32.totalorder %v361, %v1264
        %vm1268 = vcmp.eq.s32.totalorder %v362, %v1264
        %vm1269 = vcmp.eq.s32.totalorder %v363, %v1264
        %vm1270 = vcmp.eq.s32.totalorder %v364, %v1264
        %vm1271 = vcmp.eq.s32.totalorder %v365, %v1264
        %vm1272 = vcmp.eq.s32.totalorder %v366, %v1264
        %vm1273 = vcmp.eq.s32.totalorder %v367, %v1264
        %vm1274 = vcmp.eq.s32.totalorder %v368, %v1264
        %vm1275 = vcmp.eq.s32.totalorder %v369, %v1264
        %vm1276 = vcmp.eq.s32.totalorder %v370, %v1264
        %vm1277 = vcmp.eq.s32.totalorder %v371, %v1264
        %vm1278 = vcmp.eq.s32.totalorder %v372, %v1264
        %vm1279 = vcmp.eq.s32.totalorder %v373, %v1264
        %vm1280 = vcmp.eq.s32.totalorder %v374, %v1264
        %vm1281 = vcmp.eq.s32.totalorder %v375, %v1264
        %vm1282 = vcmp.eq.s32.totalorder %v376, %v1264
        %vm1283 = vcmp.eq.s32.totalorder %v377, %v1264
        %vm1284 = vcmp.eq.s32.totalorder %v378, %v1264
        %vm1285 = vcmp.eq.s32.totalorder %v379, %v1264
        %vm1286 = vcmp.eq.s32.totalorder %v380, %v1264
        %vm1287 = vcmp.eq.s32.totalorder %v381, %v1264
        %vm1288 = vcmp.eq.s32.totalorder %v382, %v1264
        %vm1289 = vcmp.eq.s32.totalorder %v383, %v1264
        %vm1290 = vcmp.eq.s32.totalorder %v384, %v1264
        %vm1291 = vcmp.eq.s32.totalorder %v385, %v1264
        %vm1292 = vcmp.eq.s32.totalorder %v386, %v1264
        %vm1293 = vcmp.eq.s32.totalorder %v387, %v1264
        %vm1294 = vcmp.eq.s32.totalorder %v388, %v1264
        %vm1295 = vcmp.eq.s32.totalorder %v389, %v1264
        %vm1296 = vcmp.eq.s32.totalorder %v390, %v1264
        %v1297 = vsel %vm1265, 1, 0
        %v1298 = vsel %vm1266, 1, 0
        %v1299 = vsel %vm1267, 1, 0
        %v1300 = vsel %vm1268, 1, 0
        %v1301 = vsel %vm1269, 1, 0
        %v1302 = vsel %vm1270, 1, 0
        %v1303 = vsel %vm1271, 1, 0
        %v1304 = vsel %vm1272, 1, 0
        %v1305 = vsel %vm1273, 1, 0
        %v1306 = vsel %vm1274, 1, 0
        %v1307 = vsel %vm1275, 1, 0
        %v1308 = vsel %vm1276, 1, 0
        %v1309 = vsel %vm1277, 1, 0
        %v1310 = vsel %vm1278, 1, 0
        %v1311 = vsel %vm1279, 1, 0
        %v1312 = vsel %vm1280, 1, 0
        %v1313 = vsel %vm1281, 1, 0
        %v1314 = vsel %vm1282, 1, 0
        %v1315 = vsel %vm1283, 1, 0
        %v1316 = vsel %vm1284, 1, 0
        %v1317 = vsel %vm1285, 1, 0
        %v1318 = vsel %vm1286, 1, 0
        %v1319 = vsel %vm1287, 1, 0
        %v1320 = vsel %vm1288, 1, 0
        %v1321 = vsel %vm1289, 1, 0
        %v1322 = vsel %vm1290, 1, 0
        %v1323 = vsel %vm1291, 1, 0
        %v1324 = vsel %vm1292, 1, 0
        %v1325 = vsel %vm1293, 1, 0
        %v1326 = vsel %vm1294, 1, 0
        %v1327 = vsel %vm1295, 1, 0
        %v1328 = vsel %vm1296, 1, 0
        %v1329 = vcvt.s32.f32 %v1297
        %v1330 = vcvt.s32.f32 %v1298
        %v1331 = vcvt.s32.f32 %v1299
        %v1332 = vcvt.s32.f32 %v1300
        %v1333 = vcvt.s32.f32 %v1301
        %v1334 = vcvt.s32.f32 %v1302
        %v1335 = vcvt.s32.f32 %v1303
        %v1336 = vcvt.s32.f32 %v1304
        %v1337 = vcvt.s32.f32 %v1305
        %v1338 = vcvt.s32.f32 %v1306
        %v1339 = vcvt.s32.f32 %v1307
        %v1340 = vcvt.s32.f32 %v1308
        %v1341 = vcvt.s32.f32 %v1309
        %v1342 = vcvt.s32.f32 %v1310
        %v1343 = vcvt.s32.f32 %v1311
        %v1344 = vcvt.s32.f32 %v1312
        %v1345 = vcvt.s32.f32 %v1313
        %v1346 = vcvt.s32.f32 %v1314
        %v1347 = vcvt.s32.f32 %v1315
        %v1348 = vcvt.s32.f32 %v1316
        %v1349 = vcvt.s32.f32 %v1317
        %v1350 = vcvt.s32.f32 %v1318
        %v1351 = vcvt.s32.f32 %v1319
        %v1352 = vcvt.s32.f32 %v1320
        %v1353 = vcvt.s32.f32 %v1321
        %v1354 = vcvt.s32.f32 %v1322
        %v1355 = vcvt.s32.f32 %v1323
        %v1356 = vcvt.s32.f32 %v1324
        %v1357 = vcvt.s32.f32 %v1325
        %v1358 = vcvt.s32.f32 %v1326
        %v1359 = vcvt.s32.f32 %v1327
        %v1360 = vcvt.s32.f32 %v1328
        %v1361 = vsub.f32 %v1232, %v1329
        %v1362 = vsub.f32 %v1233, %v1330
        %v1363 = vsub.f32 %v1234, %v1331
        %v1364 = vsub.f32 %v1235, %v1332
        %v1365 = vsub.f32 %v1236, %v1333
        %v1366 = vsub.f32 %v1237, %v1334
        %v1367 = vsub.f32 %v1238, %v1335
        %v1368 = vsub.f32 %v1239, %v1336
        %v1369 = vsub.f32 %v1240, %v1337
        %v1370 = vsub.f32 %v1241, %v1338
        %v1371 = vsub.f32 %v1242, %v1339
        %v1372 = vsub.f32 %v1243, %v1340
        %v1373 = vsub.f32 %v1244, %v1341
        %v1374 = vsub.f32 %v1245, %v1342
        %v1375 = vsub.f32 %v1246, %v1343
        %v1376 = vsub.f32 %v1247, %v1344
        %v1377 = vsub.f32 %v1248, %v1345
        %v1378 = vsub.f32 %v1249, %v1346
        %v1379 = vsub.f32 %v1250, %v1347
        %v1380 = vsub.f32 %v1251, %v1348
        %v1381 = vsub.f32 %v1252, %v1349
        %v1382 = vsub.f32 %v1253, %v1350
        %v1383 = vsub.f32 %v1254, %v1351
        %v1384 = vsub.f32 %v1255, %v1352
        %v1385 = vsub.f32 %v1256, %v1353
        %v1386 = vsub.f32 %v1257, %v1354
        %v1387 = vsub.f32 %v1258, %v1355
        %v1388 = vsub.f32 %v1259, %v1356
        %v1389 = vsub.f32 %v1260, %v1357
        %v1390 = vsub.f32 %v1261, %v1358
        %v1391 = vsub.f32 %v1262, %v1359
        %v1392 = vsub.f32 %v1263, %v1360
        %1393 = vst [vmem:[#allocation2 + $0x18] sm:$0xff] %v1361
        %1394 = vst [vmem:[#allocation2 + $0x58] sm:$0xff] %v1362
        %1395 = vst [vmem:[#allocation2 + $0x98] sm:$0xff] %v1363
        %1396 = vst [vmem:[#allocation2 + $0xd8] sm:$0xff] %v1364
        %1397 = vst [vmem:[#allocation2 + $0x118] sm:$0xff] %v1365
        %1398 = vst [vmem:[#allocation2 + $0x158] sm:$0xff] %v1366
        %1399 = vst [vmem:[#allocation2 + $0x198] sm:$0xff] %v1367
        %1400 = vst [vmem:[#allocation2 + $0x1d8] sm:$0xff] %v1368
        %1401 = vst [vmem:[#allocation2 + $0x218] sm:$0xff] %v1369
        %1402 = vst [vmem:[#allocation2 + $0x258] sm:$0xff] %v1370
        %1403 = vst [vmem:[#allocation2 + $0x298] sm:$0xff] %v1371
        %1404 = vst [vmem:[#allocation2 + $0x2d8] sm:$0xff] %v1372
        %1405 = vst [vmem:[#allocation2 + $0x318] sm:$0xff] %v1373
        %1406 = vst [vmem:[#allocation2 + $0x358] sm:$0xff] %v1374
        %1407 = vst [vmem:[#allocation2 + $0x398] sm:$0xff] %v1375
        %1408 = vst [vmem:[#allocation2 + $0x3d8] sm:$0xff] %v1376
        %1409 = vst [vmem:[#allocation2 + $0x418] sm:$0xff] %v1377
        %1410 = vst [vmem:[#allocation2 + $0x458] sm:$0xff] %v1378
        %1411 = vst [vmem:[#allocation2 + $0x498] sm:$0xff] %v1379
        %1412 = vst [vmem:[#allocation2 + $0x4d8] sm:$0xff] %v1380
        %1413 = vst [vmem:[#allocation2 + $0x518] sm:$0xff] %v1381
        %1414 = vst [vmem:[#allocation2 + $0x558] sm:$0xff] %v1382
        %1415 = vst [vmem:[#allocation2 + $0x598] sm:$0xff] %v1383
        %1416 = vst [vmem:[#allocation2 + $0x5d8] sm:$0xff] %v1384
        %1417 = vst [vmem:[#allocation2 + $0x618] sm:$0xff] %v1385
        %1418 = vst [vmem:[#allocation2 + $0x658] sm:$0xff] %v1386
        %1419 = vst [vmem:[#allocation2 + $0x698] sm:$0xff] %v1387
        %1420 = vst [vmem:[#allocation2 + $0x6d8] sm:$0xff] %v1388
        %1421 = vst [vmem:[#allocation2 + $0x718] sm:$0xff] %v1389
        %1422 = vst [vmem:[#allocation2 + $0x758] sm:$0xff] %v1390
        %1423 = vst [vmem:[#allocation2 + $0x798] sm:$0xff] %v1391
        %1424 = vst [vmem:[#allocation2 + $0x7d8] sm:$0xff] %v1392
        %v1425 = vperm.slane %v391, 4
        %vm1426 = vcmp.eq.s32.totalorder %v359, %v1425
        %vm1427 = vcmp.eq.s32.totalorder %v360, %v1425
        %vm1428 = vcmp.eq.s32.totalorder %v361, %v1425
        %vm1429 = vcmp.eq.s32.totalorder %v362, %v1425
        %vm1430 = vcmp.eq.s32.totalorder %v363, %v1425
        %vm1431 = vcmp.eq.s32.totalorder %v364, %v1425
        %vm1432 = vcmp.eq.s32.totalorder %v365, %v1425
        %vm1433 = vcmp.eq.s32.totalorder %v366, %v1425
        %vm1434 = vcmp.eq.s32.totalorder %v367, %v1425
        %vm1435 = vcmp.eq.s32.totalorder %v368, %v1425
        %vm1436 = vcmp.eq.s32.totalorder %v369, %v1425
        %vm1437 = vcmp.eq.s32.totalorder %v370, %v1425
        %vm1438 = vcmp.eq.s32.totalorder %v371, %v1425
        %vm1439 = vcmp.eq.s32.totalorder %v372, %v1425
        %vm1440 = vcmp.eq.s32.totalorder %v373, %v1425
        %vm1441 = vcmp.eq.s32.totalorder %v374, %v1425
        %vm1442 = vcmp.eq.s32.totalorder %v375, %v1425
        %vm1443 = vcmp.eq.s32.totalorder %v376, %v1425
        %vm1444 = vcmp.eq.s32.totalorder %v377, %v1425
        %vm1445 = vcmp.eq.s32.totalorder %v378, %v1425
        %vm1446 = vcmp.eq.s32.totalorder %v379, %v1425
        %vm1447 = vcmp.eq.s32.totalorder %v380, %v1425
        %vm1448 = vcmp.eq.s32.totalorder %v381, %v1425
        %vm1449 = vcmp.eq.s32.totalorder %v382, %v1425
        %vm1450 = vcmp.eq.s32.totalorder %v383, %v1425
        %vm1451 = vcmp.eq.s32.totalorder %v384, %v1425
        %vm1452 = vcmp.eq.s32.totalorder %v385, %v1425
        %vm1453 = vcmp.eq.s32.totalorder %v386, %v1425
        %vm1454 = vcmp.eq.s32.totalorder %v387, %v1425
        %vm1455 = vcmp.eq.s32.totalorder %v388, %v1425
        %vm1456 = vcmp.eq.s32.totalorder %v389, %v1425
        %vm1457 = vcmp.eq.s32.totalorder %v390, %v1425
        %v1458 = vsel %vm1426, 1, 0
        %v1459 = vsel %vm1427, 1, 0
        %v1460 = vsel %vm1428, 1, 0
        %v1461 = vsel %vm1429, 1, 0
        %v1462 = vsel %vm1430, 1, 0
        %v1463 = vsel %vm1431, 1, 0
        %v1464 = vsel %vm1432, 1, 0
        %v1465 = vsel %vm1433, 1, 0
        %v1466 = vsel %vm1434, 1, 0
        %v1467 = vsel %vm1435, 1, 0
        %v1468 = vsel %vm1436, 1, 0
        %v1469 = vsel %vm1437, 1, 0
        %v1470 = vsel %vm1438, 1, 0
        %v1471 = vsel %vm1439, 1, 0
        %v1472 = vsel %vm1440, 1, 0
        %v1473 = vsel %vm1441, 1, 0
        %v1474 = vsel %vm1442, 1, 0
        %v1475 = vsel %vm1443, 1, 0
        %v1476 = vsel %vm1444, 1, 0
        %v1477 = vsel %vm1445, 1, 0
        %v1478 = vsel %vm1446, 1, 0
        %v1479 = vsel %vm1447, 1, 0
        %v1480 = vsel %vm1448, 1, 0
        %v1481 = vsel %vm1449, 1, 0
        %v1482 = vsel %vm1450, 1, 0
        %v1483 = vsel %vm1451, 1, 0
        %v1484 = vsel %vm1452, 1, 0
        %v1485 = vsel %vm1453, 1, 0
        %v1486 = vsel %vm1454, 1, 0
        %v1487 = vsel %vm1455, 1, 0
        %v1488 = vsel %vm1456, 1, 0
        %v1489 = vsel %vm1457, 1, 0
        %v1490 = vcvt.s32.f32 %v1458
        %v1491 = vcvt.s32.f32 %v1459
        %v1492 = vcvt.s32.f32 %v1460
        %v1493 = vcvt.s32.f32 %v1461
        %v1494 = vcvt.s32.f32 %v1462
        %v1495 = vcvt.s32.f32 %v1463
        %v1496 = vcvt.s32.f32 %v1464
        %v1497 = vcvt.s32.f32 %v1465
        %v1498 = vcvt.s32.f32 %v1466
        %v1499 = vcvt.s32.f32 %v1467
        %v1500 = vcvt.s32.f32 %v1468
        %v1501 = vcvt.s32.f32 %v1469
        %v1502 = vcvt.s32.f32 %v1470
        %v1503 = vcvt.s32.f32 %v1471
        %v1504 = vcvt.s32.f32 %v1472
        %v1505 = vcvt.s32.f32 %v1473
        %v1506 = vcvt.s32.f32 %v1474
        %v1507 = vcvt.s32.f32 %v1475
        %v1508 = vcvt.s32.f32 %v1476
        %v1509 = vcvt.s32.f32 %v1477
        %v1510 = vcvt.s32.f32 %v1478
        %v1511 = vcvt.s32.f32 %v1479
        %v1512 = vcvt.s32.f32 %v1480
        %v1513 = vcvt.s32.f32 %v1481
        %v1514 = vcvt.s32.f32 %v1482
        %v1515 = vcvt.s32.f32 %v1483
        %v1516 = vcvt.s32.f32 %v1484
        %v1517 = vcvt.s32.f32 %v1485
        %v1518 = vcvt.s32.f32 %v1486
        %v1519 = vcvt.s32.f32 %v1487
        %v1520 = vcvt.s32.f32 %v1488
        %v1521 = vcvt.s32.f32 %v1489
        %v1522 = vperm.slane %v392, 4
        %vm1523 = vcmp.eq.s32.totalorder %v359, %v1522
        %vm1524 = vcmp.eq.s32.totalorder %v360, %v1522
        %vm1525 = vcmp.eq.s32.totalorder %v361, %v1522
        %vm1526 = vcmp.eq.s32.totalorder %v362, %v1522
        %vm1527 = vcmp.eq.s32.totalorder %v363, %v1522
        %vm1528 = vcmp.eq.s32.totalorder %v364, %v1522
        %vm1529 = vcmp.eq.s32.totalorder %v365, %v1522
        %vm1530 = vcmp.eq.s32.totalorder %v366, %v1522
        %vm1531 = vcmp.eq.s32.totalorder %v367, %v1522
        %vm1532 = vcmp.eq.s32.totalorder %v368, %v1522
        %vm1533 = vcmp.eq.s32.totalorder %v369, %v1522
        %vm1534 = vcmp.eq.s32.totalorder %v370, %v1522
        %vm1535 = vcmp.eq.s32.totalorder %v371, %v1522
        %vm1536 = vcmp.eq.s32.totalorder %v372, %v1522
        %vm1537 = vcmp.eq.s32.totalorder %v373, %v1522
        %vm1538 = vcmp.eq.s32.totalorder %v374, %v1522
        %vm1539 = vcmp.eq.s32.totalorder %v375, %v1522
        %vm1540 = vcmp.eq.s32.totalorder %v376, %v1522
        %vm1541 = vcmp.eq.s32.totalorder %v377, %v1522
        %vm1542 = vcmp.eq.s32.totalorder %v378, %v1522
        %vm1543 = vcmp.eq.s32.totalorder %v379, %v1522
        %vm1544 = vcmp.eq.s32.totalorder %v380, %v1522
        %vm1545 = vcmp.eq.s32.totalorder %v381, %v1522
        %vm1546 = vcmp.eq.s32.totalorder %v382, %v1522
        %vm1547 = vcmp.eq.s32.totalorder %v383, %v1522
        %vm1548 = vcmp.eq.s32.totalorder %v384, %v1522
        %vm1549 = vcmp.eq.s32.totalorder %v385, %v1522
        %vm1550 = vcmp.eq.s32.totalorder %v386, %v1522
        %vm1551 = vcmp.eq.s32.totalorder %v387, %v1522
        %vm1552 = vcmp.eq.s32.totalorder %v388, %v1522
        %vm1553 = vcmp.eq.s32.totalorder %v389, %v1522
        %vm1554 = vcmp.eq.s32.totalorder %v390, %v1522
        %v1555 = vsel %vm1523, 1, 0
        %v1556 = vsel %vm1524, 1, 0
        %v1557 = vsel %vm1525, 1, 0
        %v1558 = vsel %vm1526, 1, 0
        %v1559 = vsel %vm1527, 1, 0
        %v1560 = vsel %vm1528, 1, 0
        %v1561 = vsel %vm1529, 1, 0
        %v1562 = vsel %vm1530, 1, 0
        %v1563 = vsel %vm1531, 1, 0
        %v1564 = vsel %vm1532, 1, 0
        %v1565 = vsel %vm1533, 1, 0
        %v1566 = vsel %vm1534, 1, 0
        %v1567 = vsel %vm1535, 1, 0
        %v1568 = vsel %vm1536, 1, 0
        %v1569 = vsel %vm1537, 1, 0
        %v1570 = vsel %vm1538, 1, 0
        %v1571 = vsel %vm1539, 1, 0
        %v1572 = vsel %vm1540, 1, 0
        %v1573 = vsel %vm1541, 1, 0
        %v1574 = vsel %vm1542, 1, 0
        %v1575 = vsel %vm1543, 1, 0
        %v1576 = vsel %vm1544, 1, 0
        %v1577 = vsel %vm1545, 1, 0
        %v1578 = vsel %vm1546, 1, 0
        %v1579 = vsel %vm1547, 1, 0
        %v1580 = vsel %vm1548, 1, 0
        %v1581 = vsel %vm1549, 1, 0
        %v1582 = vsel %vm1550, 1, 0
        %v1583 = vsel %vm1551, 1, 0
        %v1584 = vsel %vm1552, 1, 0
        %v1585 = vsel %vm1553, 1, 0
        %v1586 = vsel %vm1554, 1, 0
        %v1587 = vcvt.s32.f32 %v1555
        %v1588 = vcvt.s32.f32 %v1556
        %v1589 = vcvt.s32.f32 %v1557
        %v1590 = vcvt.s32.f32 %v1558
        %v1591 = vcvt.s32.f32 %v1559
        %v1592 = vcvt.s32.f32 %v1560
        %v1593 = vcvt.s32.f32 %v1561
        %v1594 = vcvt.s32.f32 %v1562
        %v1595 = vcvt.s32.f32 %v1563
        %v1596 = vcvt.s32.f32 %v1564
        %v1597 = vcvt.s32.f32 %v1565
        %v1598 = vcvt.s32.f32 %v1566
        %v1599 = vcvt.s32.f32 %v1567
        %v1600 = vcvt.s32.f32 %v1568
        %v1601 = vcvt.s32.f32 %v1569
        %v1602 = vcvt.s32.f32 %v1570
        %v1603 = vcvt.s32.f32 %v1571
        %v1604 = vcvt.s32.f32 %v1572
        %v1605 = vcvt.s32.f32 %v1573
        %v1606 = vcvt.s32.f32 %v1574
        %v1607 = vcvt.s32.f32 %v1575
        %v1608 = vcvt.s32.f32 %v1576
        %v1609 = vcvt.s32.f32 %v1577
        %v1610 = vcvt.s32.f32 %v1578
        %v1611 = vcvt.s32.f32 %v1579
        %v1612 = vcvt.s32.f32 %v1580
        %v1613 = vcvt.s32.f32 %v1581
        %v1614 = vcvt.s32.f32 %v1582
        %v1615 = vcvt.s32.f32 %v1583
        %v1616 = vcvt.s32.f32 %v1584
        %v1617 = vcvt.s32.f32 %v1585
        %v1618 = vcvt.s32.f32 %v1586
        %v1619 = vsub.f32 %v1490, %v1587
        %v1620 = vsub.f32 %v1491, %v1588
        %v1621 = vsub.f32 %v1492, %v1589
        %v1622 = vsub.f32 %v1493, %v1590
        %v1623 = vsub.f32 %v1494, %v1591
        %v1624 = vsub.f32 %v1495, %v1592
        %v1625 = vsub.f32 %v1496, %v1593
        %v1626 = vsub.f32 %v1497, %v1594
        %v1627 = vsub.f32 %v1498, %v1595
        %v1628 = vsub.f32 %v1499, %v1596
        %v1629 = vsub.f32 %v1500, %v1597
        %v1630 = vsub.f32 %v1501, %v1598
        %v1631 = vsub.f32 %v1502, %v1599
        %v1632 = vsub.f32 %v1503, %v1600
        %v1633 = vsub.f32 %v1504, %v1601
        %v1634 = vsub.f32 %v1505, %v1602
        %v1635 = vsub.f32 %v1506, %v1603
        %v1636 = vsub.f32 %v1507, %v1604
        %v1637 = vsub.f32 %v1508, %v1605
        %v1638 = vsub.f32 %v1509, %v1606
        %v1639 = vsub.f32 %v1510, %v1607
        %v1640 = vsub.f32 %v1511, %v1608
        %v1641 = vsub.f32 %v1512, %v1609
        %v1642 = vsub.f32 %v1513, %v1610
        %v1643 = vsub.f32 %v1514, %v1611
        %v1644 = vsub.f32 %v1515, %v1612
        %v1645 = vsub.f32 %v1516, %v1613
        %v1646 = vsub.f32 %v1517, %v1614
        %v1647 = vsub.f32 %v1518, %v1615
        %v1648 = vsub.f32 %v1519, %v1616
        %v1649 = vsub.f32 %v1520, %v1617
        %v1650 = vsub.f32 %v1521, %v1618
        %1651 = vst [vmem:[#allocation2 + $0x20] sm:$0xff] %v1619
        %1652 = vst [vmem:[#allocation2 + $0x60] sm:$0xff] %v1620
        %1653 = vst [vmem:[#allocation2 + $0xa0] sm:$0xff] %v1621
        %1654 = vst [vmem:[#allocation2 + $0xe0] sm:$0xff] %v1622
        %1655 = vst [vmem:[#allocation2 + $0x120] sm:$0xff] %v1623
        %1656 = vst [vmem:[#allocation2 + $0x160] sm:$0xff] %v1624
        %1657 = vst [vmem:[#allocation2 + $0x1a0] sm:$0xff] %v1625
        %1658 = vst [vmem:[#allocation2 + $0x1e0] sm:$0xff] %v1626
        %1659 = vst [vmem:[#allocation2 + $0x220] sm:$0xff] %v1627
        %1660 = vst [vmem:[#allocation2 + $0x260] sm:$0xff] %v1628
        %1661 = vst [vmem:[#allocation2 + $0x2a0] sm:$0xff] %v1629
        %1662 = vst [vmem:[#allocation2 + $0x2e0] sm:$0xff] %v1630
        %1663 = vst [vmem:[#allocation2 + $0x320] sm:$0xff] %v1631
        %1664 = vst [vmem:[#allocation2 + $0x360] sm:$0xff] %v1632
        %1665 = vst [vmem:[#allocation2 + $0x3a0] sm:$0xff] %v1633
        %1666 = vst [vmem:[#allocation2 + $0x3e0] sm:$0xff] %v1634
        %1667 = vst [vmem:[#allocation2 + $0x420] sm:$0xff] %v1635
        %1668 = vst [vmem:[#allocation2 + $0x460] sm:$0xff] %v1636
        %1669 = vst [vmem:[#allocation2 + $0x4a0] sm:$0xff] %v1637
        %1670 = vst [vmem:[#allocation2 + $0x4e0] sm:$0xff] %v1638
        %1671 = vst [vmem:[#allocation2 + $0x520] sm:$0xff] %v1639
        %1672 = vst [vmem:[#allocation2 + $0x560] sm:$0xff] %v1640
        %1673 = vst [vmem:[#allocation2 + $0x5a0] sm:$0xff] %v1641
        %1674 = vst [vmem:[#allocation2 + $0x5e0] sm:$0xff] %v1642
        %1675 = vst [vmem:[#allocation2 + $0x620] sm:$0xff] %v1643
        %1676 = vst [vmem:[#allocation2 + $0x660] sm:$0xff] %v1644
        %1677 = vst [vmem:[#allocation2 + $0x6a0] sm:$0xff] %v1645
        %1678 = vst [vmem:[#allocation2 + $0x6e0] sm:$0xff] %v1646
        %1679 = vst [vmem:[#allocation2 + $0x720] sm:$0xff] %v1647
        %1680 = vst [vmem:[#allocation2 + $0x760] sm:$0xff] %v1648
        %1681 = vst [vmem:[#allocation2 + $0x7a0] sm:$0xff] %v1649
        %1682 = vst [vmem:[#allocation2 + $0x7e0] sm:$0xff] %v1650
        %v1683 = vperm.slane %v391, 5
        %vm1684 = vcmp.eq.s32.totalorder %v359, %v1683
        %vm1685 = vcmp.eq.s32.totalorder %v360, %v1683
        %vm1686 = vcmp.eq.s32.totalorder %v361, %v1683
        %vm1687 = vcmp.eq.s32.totalorder %v362, %v1683
        %vm1688 = vcmp.eq.s32.totalorder %v363, %v1683
        %vm1689 = vcmp.eq.s32.totalorder %v364, %v1683
        %vm1690 = vcmp.eq.s32.totalorder %v365, %v1683
        %vm1691 = vcmp.eq.s32.totalorder %v366, %v1683
        %vm1692 = vcmp.eq.s32.totalorder %v367, %v1683
        %vm1693 = vcmp.eq.s32.totalorder %v368, %v1683
        %vm1694 = vcmp.eq.s32.totalorder %v369, %v1683
        %vm1695 = vcmp.eq.s32.totalorder %v370, %v1683
        %vm1696 = vcmp.eq.s32.totalorder %v371, %v1683
        %vm1697 = vcmp.eq.s32.totalorder %v372, %v1683
        %vm1698 = vcmp.eq.s32.totalorder %v373, %v1683
        %vm1699 = vcmp.eq.s32.totalorder %v374, %v1683
        %vm1700 = vcmp.eq.s32.totalorder %v375, %v1683
        %vm1701 = vcmp.eq.s32.totalorder %v376, %v1683
        %vm1702 = vcmp.eq.s32.totalorder %v377, %v1683
        %vm1703 = vcmp.eq.s32.totalorder %v378, %v1683
        %vm1704 = vcmp.eq.s32.totalorder %v379, %v1683
        %vm1705 = vcmp.eq.s32.totalorder %v380, %v1683
        %vm1706 = vcmp.eq.s32.totalorder %v381, %v1683
        %vm1707 = vcmp.eq.s32.totalorder %v382, %v1683
        %vm1708 = vcmp.eq.s32.totalorder %v383, %v1683
        %vm1709 = vcmp.eq.s32.totalorder %v384, %v1683
        %vm1710 = vcmp.eq.s32.totalorder %v385, %v1683
        %vm1711 = vcmp.eq.s32.totalorder %v386, %v1683
        %vm1712 = vcmp.eq.s32.totalorder %v387, %v1683
        %vm1713 = vcmp.eq.s32.totalorder %v388, %v1683
        %vm1714 = vcmp.eq.s32.totalorder %v389, %v1683
        %vm1715 = vcmp.eq.s32.totalorder %v390, %v1683
        %v1716 = vsel %vm1684, 1, 0
        %v1717 = vsel %vm1685, 1, 0
        %v1718 = vsel %vm1686, 1, 0
        %v1719 = vsel %vm1687, 1, 0
        %v1720 = vsel %vm1688, 1, 0
        %v1721 = vsel %vm1689, 1, 0
        %v1722 = vsel %vm1690, 1, 0
        %v1723 = vsel %vm1691, 1, 0
        %v1724 = vsel %vm1692, 1, 0
        %v1725 = vsel %vm1693, 1, 0
        %v1726 = vsel %vm1694, 1, 0
        %v1727 = vsel %vm1695, 1, 0
        %v1728 = vsel %vm1696, 1, 0
        %v1729 = vsel %vm1697, 1, 0
        %v1730 = vsel %vm1698, 1, 0
        %v1731 = vsel %vm1699, 1, 0
        %v1732 = vsel %vm1700, 1, 0
        %v1733 = vsel %vm1701, 1, 0
        %v1734 = vsel %vm1702, 1, 0
        %v1735 = vsel %vm1703, 1, 0
        %v1736 = vsel %vm1704, 1, 0
        %v1737 = vsel %vm1705, 1, 0
        %v1738 = vsel %vm1706, 1, 0
        %v1739 = vsel %vm1707, 1, 0
        %v1740 = vsel %vm1708, 1, 0
        %v1741 = vsel %vm1709, 1, 0
        %v1742 = vsel %vm1710, 1, 0
        %v1743 = vsel %vm1711, 1, 0
        %v1744 = vsel %vm1712, 1, 0
        %v1745 = vsel %vm1713, 1, 0
        %v1746 = vsel %vm1714, 1, 0
        %v1747 = vsel %vm1715, 1, 0
        %v1748 = vcvt.s32.f32 %v1716
        %v1749 = vcvt.s32.f32 %v1717
        %v1750 = vcvt.s32.f32 %v1718
        %v1751 = vcvt.s32.f32 %v1719
        %v1752 = vcvt.s32.f32 %v1720
        %v1753 = vcvt.s32.f32 %v1721
        %v1754 = vcvt.s32.f32 %v1722
        %v1755 = vcvt.s32.f32 %v1723
        %v1756 = vcvt.s32.f32 %v1724
        %v1757 = vcvt.s32.f32 %v1725
        %v1758 = vcvt.s32.f32 %v1726
        %v1759 = vcvt.s32.f32 %v1727
        %v1760 = vcvt.s32.f32 %v1728
        %v1761 = vcvt.s32.f32 %v1729
        %v1762 = vcvt.s32.f32 %v1730
        %v1763 = vcvt.s32.f32 %v1731
        %v1764 = vcvt.s32.f32 %v1732
        %v1765 = vcvt.s32.f32 %v1733
        %v1766 = vcvt.s32.f32 %v1734
        %v1767 = vcvt.s32.f32 %v1735
        %v1768 = vcvt.s32.f32 %v1736
        %v1769 = vcvt.s32.f32 %v1737
        %v1770 = vcvt.s32.f32 %v1738
        %v1771 = vcvt.s32.f32 %v1739
        %v1772 = vcvt.s32.f32 %v1740
        %v1773 = vcvt.s32.f32 %v1741
        %v1774 = vcvt.s32.f32 %v1742
        %v1775 = vcvt.s32.f32 %v1743
        %v1776 = vcvt.s32.f32 %v1744
        %v1777 = vcvt.s32.f32 %v1745
        %v1778 = vcvt.s32.f32 %v1746
        %v1779 = vcvt.s32.f32 %v1747
        %v1780 = vperm.slane %v392, 5
        %vm1781 = vcmp.eq.s32.totalorder %v359, %v1780
        %vm1782 = vcmp.eq.s32.totalorder %v360, %v1780
        %vm1783 = vcmp.eq.s32.totalorder %v361, %v1780
        %vm1784 = vcmp.eq.s32.totalorder %v362, %v1780
        %vm1785 = vcmp.eq.s32.totalorder %v363, %v1780
        %vm1786 = vcmp.eq.s32.totalorder %v364, %v1780
        %vm1787 = vcmp.eq.s32.totalorder %v365, %v1780
        %vm1788 = vcmp.eq.s32.totalorder %v366, %v1780
        %vm1789 = vcmp.eq.s32.totalorder %v367, %v1780
        %vm1790 = vcmp.eq.s32.totalorder %v368, %v1780
        %vm1791 = vcmp.eq.s32.totalorder %v369, %v1780
        %vm1792 = vcmp.eq.s32.totalorder %v370, %v1780
        %vm1793 = vcmp.eq.s32.totalorder %v371, %v1780
        %vm1794 = vcmp.eq.s32.totalorder %v372, %v1780
        %vm1795 = vcmp.eq.s32.totalorder %v373, %v1780
        %vm1796 = vcmp.eq.s32.totalorder %v374, %v1780
        %vm1797 = vcmp.eq.s32.totalorder %v375, %v1780
        %vm1798 = vcmp.eq.s32.totalorder %v376, %v1780
        %vm1799 = vcmp.eq.s32.totalorder %v377, %v1780
        %vm1800 = vcmp.eq.s32.totalorder %v378, %v1780
        %vm1801 = vcmp.eq.s32.totalorder %v379, %v1780
        %vm1802 = vcmp.eq.s32.totalorder %v380, %v1780
        %vm1803 = vcmp.eq.s32.totalorder %v381, %v1780
        %vm1804 = vcmp.eq.s32.totalorder %v382, %v1780
        %vm1805 = vcmp.eq.s32.totalorder %v383, %v1780
        %vm1806 = vcmp.eq.s32.totalorder %v384, %v1780
        %vm1807 = vcmp.eq.s32.totalorder %v385, %v1780
        %vm1808 = vcmp.eq.s32.totalorder %v386, %v1780
        %vm1809 = vcmp.eq.s32.totalorder %v387, %v1780
        %vm1810 = vcmp.eq.s32.totalorder %v388, %v1780
        %vm1811 = vcmp.eq.s32.totalorder %v389, %v1780
        %vm1812 = vcmp.eq.s32.totalorder %v390, %v1780
        %v1813 = vsel %vm1781, 1, 0
        %v1814 = vsel %vm1782, 1, 0
        %v1815 = vsel %vm1783, 1, 0
        %v1816 = vsel %vm1784, 1, 0
        %v1817 = vsel %vm1785, 1, 0
        %v1818 = vsel %vm1786, 1, 0
        %v1819 = vsel %vm1787, 1, 0
        %v1820 = vsel %vm1788, 1, 0
        %v1821 = vsel %vm1789, 1, 0
        %v1822 = vsel %vm1790, 1, 0
        %v1823 = vsel %vm1791, 1, 0
        %v1824 = vsel %vm1792, 1, 0
        %v1825 = vsel %vm1793, 1, 0
        %v1826 = vsel %vm1794, 1, 0
        %v1827 = vsel %vm1795, 1, 0
        %v1828 = vsel %vm1796, 1, 0
        %v1829 = vsel %vm1797, 1, 0
        %v1830 = vsel %vm1798, 1, 0
        %v1831 = vsel %vm1799, 1, 0
        %v1832 = vsel %vm1800, 1, 0
        %v1833 = vsel %vm1801, 1, 0
        %v1834 = vsel %vm1802, 1, 0
        %v1835 = vsel %vm1803, 1, 0
        %v1836 = vsel %vm1804, 1, 0
        %v1837 = vsel %vm1805, 1, 0
        %v1838 = vsel %vm1806, 1, 0
        %v1839 = vsel %vm1807, 1, 0
        %v1840 = vsel %vm1808, 1, 0
        %v1841 = vsel %vm1809, 1, 0
        %v1842 = vsel %vm1810, 1, 0
        %v1843 = vsel %vm1811, 1, 0
        %v1844 = vsel %vm1812, 1, 0
        %v1845 = vcvt.s32.f32 %v1813
        %v1846 = vcvt.s32.f32 %v1814
        %v1847 = vcvt.s32.f32 %v1815
        %v1848 = vcvt.s32.f32 %v1816
        %v1849 = vcvt.s32.f32 %v1817
        %v1850 = vcvt.s32.f32 %v1818
        %v1851 = vcvt.s32.f32 %v1819
        %v1852 = vcvt.s32.f32 %v1820
        %v1853 = vcvt.s32.f32 %v1821
        %v1854 = vcvt.s32.f32 %v1822
        %v1855 = vcvt.s32.f32 %v1823
        %v1856 = vcvt.s32.f32 %v1824
        %v1857 = vcvt.s32.f32 %v1825
        %v1858 = vcvt.s32.f32 %v1826
        %v1859 = vcvt.s32.f32 %v1827
        %v1860 = vcvt.s32.f32 %v1828
        %v1861 = vcvt.s32.f32 %v1829
        %v1862 = vcvt.s32.f32 %v1830
        %v1863 = vcvt.s32.f32 %v1831
        %v1864 = vcvt.s32.f32 %v1832
        %v1865 = vcvt.s32.f32 %v1833
        %v1866 = vcvt.s32.f32 %v1834
        %v1867 = vcvt.s32.f32 %v1835
        %v1868 = vcvt.s32.f32 %v1836
        %v1869 = vcvt.s32.f32 %v1837
        %v1870 = vcvt.s32.f32 %v1838
        %v1871 = vcvt.s32.f32 %v1839
        %v1872 = vcvt.s32.f32 %v1840
        %v1873 = vcvt.s32.f32 %v1841
        %v1874 = vcvt.s32.f32 %v1842
        %v1875 = vcvt.s32.f32 %v1843
        %v1876 = vcvt.s32.f32 %v1844
        %v1877 = vsub.f32 %v1748, %v1845
        %v1878 = vsub.f32 %v1749, %v1846
        %v1879 = vsub.f32 %v1750, %v1847
        %v1880 = vsub.f32 %v1751, %v1848
        %v1881 = vsub.f32 %v1752, %v1849
        %v1882 = vsub.f32 %v1753, %v1850
        %v1883 = vsub.f32 %v1754, %v1851
        %v1884 = vsub.f32 %v1755, %v1852
        %v1885 = vsub.f32 %v1756, %v1853
        %v1886 = vsub.f32 %v1757, %v1854
        %v1887 = vsub.f32 %v1758, %v1855
        %v1888 = vsub.f32 %v1759, %v1856
        %v1889 = vsub.f32 %v1760, %v1857
        %v1890 = vsub.f32 %v1761, %v1858
        %v1891 = vsub.f32 %v1762, %v1859
        %v1892 = vsub.f32 %v1763, %v1860
        %v1893 = vsub.f32 %v1764, %v1861
        %v1894 = vsub.f32 %v1765, %v1862
        %v1895 = vsub.f32 %v1766, %v1863
        %v1896 = vsub.f32 %v1767, %v1864
        %v1897 = vsub.f32 %v1768, %v1865
        %v1898 = vsub.f32 %v1769, %v1866
        %v1899 = vsub.f32 %v1770, %v1867
        %v1900 = vsub.f32 %v1771, %v1868
        %v1901 = vsub.f32 %v1772, %v1869
        %v1902 = vsub.f32 %v1773, %v1870
        %v1903 = vsub.f32 %v1774, %v1871
        %v1904 = vsub.f32 %v1775, %v1872
        %v1905 = vsub.f32 %v1776, %v1873
        %v1906 = vsub.f32 %v1777, %v1874
        %v1907 = vsub.f32 %v1778, %v1875
        %v1908 = vsub.f32 %v1779, %v1876
        %1909 = vst [vmem:[#allocation2 + $0x28] sm:$0xff] %v1877
        %1910 = vst [vmem:[#allocation2 + $0x68] sm:$0xff] %v1878
        %1911 = vst [vmem:[#allocation2 + $0xa8] sm:$0xff] %v1879
        %1912 = vst [vmem:[#allocation2 + $0xe8] sm:$0xff] %v1880
        %1913 = vst [vmem:[#allocation2 + $0x128] sm:$0xff] %v1881
        %1914 = vst [vmem:[#allocation2 + $0x168] sm:$0xff] %v1882
        %1915 = vst [vmem:[#allocation2 + $0x1a8] sm:$0xff] %v1883
        %1916 = vst [vmem:[#allocation2 + $0x1e8] sm:$0xff] %v1884
        %1917 = vst [vmem:[#allocation2 + $0x228] sm:$0xff] %v1885
        %1918 = vst [vmem:[#allocation2 + $0x268] sm:$0xff] %v1886
        %1919 = vst [vmem:[#allocation2 + $0x2a8] sm:$0xff] %v1887
        %1920 = vst [vmem:[#allocation2 + $0x2e8] sm:$0xff] %v1888
        %1921 = vst [vmem:[#allocation2 + $0x328] sm:$0xff] %v1889
        %1922 = vst [vmem:[#allocation2 + $0x368] sm:$0xff] %v1890
        %1923 = vst [vmem:[#allocation2 + $0x3a8] sm:$0xff] %v1891
        %1924 = vst [vmem:[#allocation2 + $0x3e8] sm:$0xff] %v1892
        %1925 = vst [vmem:[#allocation2 + $0x428] sm:$0xff] %v1893
        %1926 = vst [vmem:[#allocation2 + $0x468] sm:$0xff] %v1894
        %1927 = vst [vmem:[#allocation2 + $0x4a8] sm:$0xff] %v1895
        %1928 = vst [vmem:[#allocation2 + $0x4e8] sm:$0xff] %v1896
        %1929 = vst [vmem:[#allocation2 + $0x528] sm:$0xff] %v1897
        %1930 = vst [vmem:[#allocation2 + $0x568] sm:$0xff] %v1898
        %1931 = vst [vmem:[#allocation2 + $0x5a8] sm:$0xff] %v1899
        %1932 = vst [vmem:[#allocation2 + $0x5e8] sm:$0xff] %v1900
        %1933 = vst [vmem:[#allocation2 + $0x628] sm:$0xff] %v1901
        %1934 = vst [vmem:[#allocation2 + $0x668] sm:$0xff] %v1902
        %1935 = vst [vmem:[#allocation2 + $0x6a8] sm:$0xff] %v1903
        %1936 = vst [vmem:[#allocation2 + $0x6e8] sm:$0xff] %v1904
        %1937 = vst [vmem:[#allocation2 + $0x728] sm:$0xff] %v1905
        %1938 = vst [vmem:[#allocation2 + $0x768] sm:$0xff] %v1906
        %1939 = vst [vmem:[#allocation2 + $0x7a8] sm:$0xff] %v1907
        %1940 = vst [vmem:[#allocation2 + $0x7e8] sm:$0xff] %v1908
        %v1941 = vperm.slane %v391, 6
        %vm1942 = vcmp.eq.s32.totalorder %v359, %v1941
        %vm1943 = vcmp.eq.s32.totalorder %v360, %v1941
        %vm1944 = vcmp.eq.s32.totalorder %v361, %v1941
        %vm1945 = vcmp.eq.s32.totalorder %v362, %v1941
        %vm1946 = vcmp.eq.s32.totalorder %v363, %v1941
        %vm1947 = vcmp.eq.s32.totalorder %v364, %v1941
        %vm1948 = vcmp.eq.s32.totalorder %v365, %v1941
        %vm1949 = vcmp.eq.s32.totalorder %v366, %v1941
        %vm1950 = vcmp.eq.s32.totalorder %v367, %v1941
        %vm1951 = vcmp.eq.s32.totalorder %v368, %v1941
        %vm1952 = vcmp.eq.s32.totalorder %v369, %v1941
        %vm1953 = vcmp.eq.s32.totalorder %v370, %v1941
        %vm1954 = vcmp.eq.s32.totalorder %v371, %v1941
        %vm1955 = vcmp.eq.s32.totalorder %v372, %v1941
        %vm1956 = vcmp.eq.s32.totalorder %v373, %v1941
        %vm1957 = vcmp.eq.s32.totalorder %v374, %v1941
        %vm1958 = vcmp.eq.s32.totalorder %v375, %v1941
        %vm1959 = vcmp.eq.s32.totalorder %v376, %v1941
        %vm1960 = vcmp.eq.s32.totalorder %v377, %v1941
        %vm1961 = vcmp.eq.s32.totalorder %v378, %v1941
        %vm1962 = vcmp.eq.s32.totalorder %v379, %v1941
        %vm1963 = vcmp.eq.s32.totalorder %v380, %v1941
        %vm1964 = vcmp.eq.s32.totalorder %v381, %v1941
        %vm1965 = vcmp.eq.s32.totalorder %v382, %v1941
        %vm1966 = vcmp.eq.s32.totalorder %v383, %v1941
        %vm1967 = vcmp.eq.s32.totalorder %v384, %v1941
        %vm1968 = vcmp.eq.s32.totalorder %v385, %v1941
        %vm1969 = vcmp.eq.s32.totalorder %v386, %v1941
        %vm1970 = vcmp.eq.s32.totalorder %v387, %v1941
        %vm1971 = vcmp.eq.s32.totalorder %v388, %v1941
        %vm1972 = vcmp.eq.s32.totalorder %v389, %v1941
        %vm1973 = vcmp.eq.s32.totalorder %v390, %v1941
        %v1974 = vsel %vm1942, 1, 0
        %v1975 = vsel %vm1943, 1, 0
        %v1976 = vsel %vm1944, 1, 0
        %v1977 = vsel %vm1945, 1, 0
        %v1978 = vsel %vm1946, 1, 0
        %v1979 = vsel %vm1947, 1, 0
        %v1980 = vsel %vm1948, 1, 0
        %v1981 = vsel %vm1949, 1, 0
        %v1982 = vsel %vm1950, 1, 0
        %v1983 = vsel %vm1951, 1, 0
        %v1984 = vsel %vm1952, 1, 0
        %v1985 = vsel %vm1953, 1, 0
        %v1986 = vsel %vm1954, 1, 0
        %v1987 = vsel %vm1955, 1, 0
        %v1988 = vsel %vm1956, 1, 0
        %v1989 = vsel %vm1957, 1, 0
        %v1990 = vsel %vm1958, 1, 0
        %v1991 = vsel %vm1959, 1, 0
        %v1992 = vsel %vm1960, 1, 0
        %v1993 = vsel %vm1961, 1, 0
        %v1994 = vsel %vm1962, 1, 0
        %v1995 = vsel %vm1963, 1, 0
        %v1996 = vsel %vm1964, 1, 0
        %v1997 = vsel %vm1965, 1, 0
        %v1998 = vsel %vm1966, 1, 0
        %v1999 = vsel %vm1967, 1, 0
        %v2000 = vsel %vm1968, 1, 0
        %v2001 = vsel %vm1969, 1, 0
        %v2002 = vsel %vm1970, 1, 0
        %v2003 = vsel %vm1971, 1, 0
        %v2004 = vsel %vm1972, 1, 0
        %v2005 = vsel %vm1973, 1, 0
        %v2006 = vcvt.s32.f32 %v1974
        %v2007 = vcvt.s32.f32 %v1975
        %v2008 = vcvt.s32.f32 %v1976
        %v2009 = vcvt.s32.f32 %v1977
        %v2010 = vcvt.s32.f32 %v1978
        %v2011 = vcvt.s32.f32 %v1979
        %v2012 = vcvt.s32.f32 %v1980
        %v2013 = vcvt.s32.f32 %v1981
        %v2014 = vcvt.s32.f32 %v1982
        %v2015 = vcvt.s32.f32 %v1983
        %v2016 = vcvt.s32.f32 %v1984
        %v2017 = vcvt.s32.f32 %v1985
        %v2018 = vcvt.s32.f32 %v1986
        %v2019 = vcvt.s32.f32 %v1987
        %v2020 = vcvt.s32.f32 %v1988
        %v2021 = vcvt.s32.f32 %v1989
        %v2022 = vcvt.s32.f32 %v1990
        %v2023 = vcvt.s32.f32 %v1991
        %v2024 = vcvt.s32.f32 %v1992
        %v2025 = vcvt.s32.f32 %v1993
        %v2026 = vcvt.s32.f32 %v1994
        %v2027 = vcvt.s32.f32 %v1995
        %v2028 = vcvt.s32.f32 %v1996
        %v2029 = vcvt.s32.f32 %v1997
        %v2030 = vcvt.s32.f32 %v1998
        %v2031 = vcvt.s32.f32 %v1999
        %v2032 = vcvt.s32.f32 %v2000
        %v2033 = vcvt.s32.f32 %v2001
        %v2034 = vcvt.s32.f32 %v2002
        %v2035 = vcvt.s32.f32 %v2003
        %v2036 = vcvt.s32.f32 %v2004
        %v2037 = vcvt.s32.f32 %v2005
        %v2038 = vperm.slane %v392, 6
        %vm2039 = vcmp.eq.s32.totalorder %v359, %v2038
        %vm2040 = vcmp.eq.s32.totalorder %v360, %v2038
        %vm2041 = vcmp.eq.s32.totalorder %v361, %v2038
        %vm2042 = vcmp.eq.s32.totalorder %v362, %v2038
        %vm2043 = vcmp.eq.s32.totalorder %v363, %v2038
        %vm2044 = vcmp.eq.s32.totalorder %v364, %v2038
        %vm2045 = vcmp.eq.s32.totalorder %v365, %v2038
        %vm2046 = vcmp.eq.s32.totalorder %v366, %v2038
        %vm2047 = vcmp.eq.s32.totalorder %v367, %v2038
        %vm2048 = vcmp.eq.s32.totalorder %v368, %v2038
        %vm2049 = vcmp.eq.s32.totalorder %v369, %v2038
        %vm2050 = vcmp.eq.s32.totalorder %v370, %v2038
        %vm2051 = vcmp.eq.s32.totalorder %v371, %v2038
        %vm2052 = vcmp.eq.s32.totalorder %v372, %v2038
        %vm2053 = vcmp.eq.s32.totalorder %v373, %v2038
        %vm2054 = vcmp.eq.s32.totalorder %v374, %v2038
        %vm2055 = vcmp.eq.s32.totalorder %v375, %v2038
        %vm2056 = vcmp.eq.s32.totalorder %v376, %v2038
        %vm2057 = vcmp.eq.s32.totalorder %v377, %v2038
        %vm2058 = vcmp.eq.s32.totalorder %v378, %v2038
        %vm2059 = vcmp.eq.s32.totalorder %v379, %v2038
        %vm2060 = vcmp.eq.s32.totalorder %v380, %v2038
        %vm2061 = vcmp.eq.s32.totalorder %v381, %v2038
        %vm2062 = vcmp.eq.s32.totalorder %v382, %v2038
        %vm2063 = vcmp.eq.s32.totalorder %v383, %v2038
        %vm2064 = vcmp.eq.s32.totalorder %v384, %v2038
        %vm2065 = vcmp.eq.s32.totalorder %v385, %v2038
        %vm2066 = vcmp.eq.s32.totalorder %v386, %v2038
        %vm2067 = vcmp.eq.s32.totalorder %v387, %v2038
        %vm2068 = vcmp.eq.s32.totalorder %v388, %v2038
        %vm2069 = vcmp.eq.s32.totalorder %v389, %v2038
        %vm2070 = vcmp.eq.s32.totalorder %v390, %v2038
        %v2071 = vsel %vm2039, 1, 0
        %v2072 = vsel %vm2040, 1, 0
        %v2073 = vsel %vm2041, 1, 0
        %v2074 = vsel %vm2042, 1, 0
        %v2075 = vsel %vm2043, 1, 0
        %v2076 = vsel %vm2044, 1, 0
        %v2077 = vsel %vm2045, 1, 0
        %v2078 = vsel %vm2046, 1, 0
        %v2079 = vsel %vm2047, 1, 0
        %v2080 = vsel %vm2048, 1, 0
        %v2081 = vsel %vm2049, 1, 0
        %v2082 = vsel %vm2050, 1, 0
        %v2083 = vsel %vm2051, 1, 0
        %v2084 = vsel %vm2052, 1, 0
        %v2085 = vsel %vm2053, 1, 0
        %v2086 = vsel %vm2054, 1, 0
        %v2087 = vsel %vm2055, 1, 0
        %v2088 = vsel %vm2056, 1, 0
        %v2089 = vsel %vm2057, 1, 0
        %v2090 = vsel %vm2058, 1, 0
        %v2091 = vsel %vm2059, 1, 0
        %v2092 = vsel %vm2060, 1, 0
        %v2093 = vsel %vm2061, 1, 0
        %v2094 = vsel %vm2062, 1, 0
        %v2095 = vsel %vm2063, 1, 0
        %v2096 = vsel %vm2064, 1, 0
        %v2097 = vsel %vm2065, 1, 0
        %v2098 = vsel %vm2066, 1, 0
        %v2099 = vsel %vm2067, 1, 0
        %v2100 = vsel %vm2068, 1, 0
        %v2101 = vsel %vm2069, 1, 0
        %v2102 = vsel %vm2070, 1, 0
        %v2103 = vcvt.s32.f32 %v2071
        %v2104 = vcvt.s32.f32 %v2072
        %v2105 = vcvt.s32.f32 %v2073
        %v2106 = vcvt.s32.f32 %v2074
        %v2107 = vcvt.s32.f32 %v2075
        %v2108 = vcvt.s32.f32 %v2076
        %v2109 = vcvt.s32.f32 %v2077
        %v2110 = vcvt.s32.f32 %v2078
        %v2111 = vcvt.s32.f32 %v2079
        %v2112 = vcvt.s32.f32 %v2080
        %v2113 = vcvt.s32.f32 %v2081
        %v2114 = vcvt.s32.f32 %v2082
        %v2115 = vcvt.s32.f32 %v2083
        %v2116 = vcvt.s32.f32 %v2084
        %v2117 = vcvt.s32.f32 %v2085
        %v2118 = vcvt.s32.f32 %v2086
        %v2119 = vcvt.s32.f32 %v2087
        %v2120 = vcvt.s32.f32 %v2088
        %v2121 = vcvt.s32.f32 %v2089
        %v2122 = vcvt.s32.f32 %v2090
        %v2123 = vcvt.s32.f32 %v2091
        %v2124 = vcvt.s32.f32 %v2092
        %v2125 = vcvt.s32.f32 %v2093
        %v2126 = vcvt.s32.f32 %v2094
        %v2127 = vcvt.s32.f32 %v2095
        %v2128 = vcvt.s32.f32 %v2096
        %v2129 = vcvt.s32.f32 %v2097
        %v2130 = vcvt.s32.f32 %v2098
        %v2131 = vcvt.s32.f32 %v2099
        %v2132 = vcvt.s32.f32 %v2100
        %v2133 = vcvt.s32.f32 %v2101
        %v2134 = vcvt.s32.f32 %v2102
        %v2135 = vsub.f32 %v2006, %v2103
        %v2136 = vsub.f32 %v2007, %v2104
        %v2137 = vsub.f32 %v2008, %v2105
        %v2138 = vsub.f32 %v2009, %v2106
        %v2139 = vsub.f32 %v2010, %v2107
        %v2140 = vsub.f32 %v2011, %v2108
        %v2141 = vsub.f32 %v2012, %v2109
        %v2142 = vsub.f32 %v2013, %v2110
        %v2143 = vsub.f32 %v2014, %v2111
        %v2144 = vsub.f32 %v2015, %v2112
        %v2145 = vsub.f32 %v2016, %v2113
        %v2146 = vsub.f32 %v2017, %v2114
        %v2147 = vsub.f32 %v2018, %v2115
        %v2148 = vsub.f32 %v2019, %v2116
        %v2149 = vsub.f32 %v2020, %v2117
        %v2150 = vsub.f32 %v2021, %v2118
        %v2151 = vsub.f32 %v2022, %v2119
        %v2152 = vsub.f32 %v2023, %v2120
        %v2153 = vsub.f32 %v2024, %v2121
        %v2154 = vsub.f32 %v2025, %v2122
        %v2155 = vsub.f32 %v2026, %v2123
        %v2156 = vsub.f32 %v2027, %v2124
        %v2157 = vsub.f32 %v2028, %v2125
        %v2158 = vsub.f32 %v2029, %v2126
        %v2159 = vsub.f32 %v2030, %v2127
        %v2160 = vsub.f32 %v2031, %v2128
        %v2161 = vsub.f32 %v2032, %v2129
        %v2162 = vsub.f32 %v2033, %v2130
        %v2163 = vsub.f32 %v2034, %v2131
        %v2164 = vsub.f32 %v2035, %v2132
        %v2165 = vsub.f32 %v2036, %v2133
        %v2166 = vsub.f32 %v2037, %v2134
        %2167 = vst [vmem:[#allocation2 + $0x30] sm:$0xff] %v2135
        %2168 = vst [vmem:[#allocation2 + $0x70] sm:$0xff] %v2136
        %2169 = vst [vmem:[#allocation2 + $0xb0] sm:$0xff] %v2137
        %2170 = vst [vmem:[#allocation2 + $0xf0] sm:$0xff] %v2138
        %2171 = vst [vmem:[#allocation2 + $0x130] sm:$0xff] %v2139
        %2172 = vst [vmem:[#allocation2 + $0x170] sm:$0xff] %v2140
        %2173 = vst [vmem:[#allocation2 + $0x1b0] sm:$0xff] %v2141
        %2174 = vst [vmem:[#allocation2 + $0x1f0] sm:$0xff] %v2142
        %2175 = vst [vmem:[#allocation2 + $0x230] sm:$0xff] %v2143
        %2176 = vst [vmem:[#allocation2 + $0x270] sm:$0xff] %v2144
        %2177 = vst [vmem:[#allocation2 + $0x2b0] sm:$0xff] %v2145
        %2178 = vst [vmem:[#allocation2 + $0x2f0] sm:$0xff] %v2146
        %2179 = vst [vmem:[#allocation2 + $0x330] sm:$0xff] %v2147
        %2180 = vst [vmem:[#allocation2 + $0x370] sm:$0xff] %v2148
        %2181 = vst [vmem:[#allocation2 + $0x3b0] sm:$0xff] %v2149
        %2182 = vst [vmem:[#allocation2 + $0x3f0] sm:$0xff] %v2150
        %2183 = vst [vmem:[#allocation2 + $0x430] sm:$0xff] %v2151
        %2184 = vst [vmem:[#allocation2 + $0x470] sm:$0xff] %v2152
        %2185 = vst [vmem:[#allocation2 + $0x4b0] sm:$0xff] %v2153
        %2186 = vst [vmem:[#allocation2 + $0x4f0] sm:$0xff] %v2154
        %2187 = vst [vmem:[#allocation2 + $0x530] sm:$0xff] %v2155
        %2188 = vst [vmem:[#allocation2 + $0x570] sm:$0xff] %v2156
        %2189 = vst [vmem:[#allocation2 + $0x5b0] sm:$0xff] %v2157
        %2190 = vst [vmem:[#allocation2 + $0x5f0] sm:$0xff] %v2158
        %2191 = vst [vmem:[#allocation2 + $0x630] sm:$0xff] %v2159
        %2192 = vst [vmem:[#allocation2 + $0x670] sm:$0xff] %v2160
        %2193 = vst [vmem:[#allocation2 + $0x6b0] sm:$0xff] %v2161
        %2194 = vst [vmem:[#allocation2 + $0x6f0] sm:$0xff] %v2162
        %2195 = vst [vmem:[#allocation2 + $0x730] sm:$0xff] %v2163
        %2196 = vst [vmem:[#allocation2 + $0x770] sm:$0xff] %v2164
        %2197 = vst [vmem:[#allocation2 + $0x7b0] sm:$0xff] %v2165
        %2198 = vst [vmem:[#allocation2 + $0x7f0] sm:$0xff] %v2166
        %v2199 = vperm.slane %v391, 7
        %vm2200 = vcmp.eq.s32.totalorder %v359, %v2199
        %vm2201 = vcmp.eq.s32.totalorder %v360, %v2199
        %vm2202 = vcmp.eq.s32.totalorder %v361, %v2199
        %vm2203 = vcmp.eq.s32.totalorder %v362, %v2199
        %vm2204 = vcmp.eq.s32.totalorder %v363, %v2199
        %vm2205 = vcmp.eq.s32.totalorder %v364, %v2199
        %vm2206 = vcmp.eq.s32.totalorder %v365, %v2199
        %vm2207 = vcmp.eq.s32.totalorder %v366, %v2199
        %vm2208 = vcmp.eq.s32.totalorder %v367, %v2199
        %vm2209 = vcmp.eq.s32.totalorder %v368, %v2199
        %vm2210 = vcmp.eq.s32.totalorder %v369, %v2199
        %vm2211 = vcmp.eq.s32.totalorder %v370, %v2199
        %vm2212 = vcmp.eq.s32.totalorder %v371, %v2199
        %vm2213 = vcmp.eq.s32.totalorder %v372, %v2199
        %vm2214 = vcmp.eq.s32.totalorder %v373, %v2199
        %vm2215 = vcmp.eq.s32.totalorder %v374, %v2199
        %vm2216 = vcmp.eq.s32.totalorder %v375, %v2199
        %vm2217 = vcmp.eq.s32.totalorder %v376, %v2199
        %vm2218 = vcmp.eq.s32.totalorder %v377, %v2199
        %vm2219 = vcmp.eq.s32.totalorder %v378, %v2199
        %vm2220 = vcmp.eq.s32.totalorder %v379, %v2199
        %vm2221 = vcmp.eq.s32.totalorder %v380, %v2199
        %vm2222 = vcmp.eq.s32.totalorder %v381, %v2199
        %vm2223 = vcmp.eq.s32.totalorder %v382, %v2199
        %vm2224 = vcmp.eq.s32.totalorder %v383, %v2199
        %vm2225 = vcmp.eq.s32.totalorder %v384, %v2199
        %vm2226 = vcmp.eq.s32.totalorder %v385, %v2199
        %vm2227 = vcmp.eq.s32.totalorder %v386, %v2199
        %vm2228 = vcmp.eq.s32.totalorder %v387, %v2199
        %vm2229 = vcmp.eq.s32.totalorder %v388, %v2199
        %vm2230 = vcmp.eq.s32.totalorder %v389, %v2199
        %vm2231 = vcmp.eq.s32.totalorder %v390, %v2199
        %v2232 = vsel %vm2200, 1, 0
        %v2233 = vsel %vm2201, 1, 0
        %v2234 = vsel %vm2202, 1, 0
        %v2235 = vsel %vm2203, 1, 0
        %v2236 = vsel %vm2204, 1, 0
        %v2237 = vsel %vm2205, 1, 0
        %v2238 = vsel %vm2206, 1, 0
        %v2239 = vsel %vm2207, 1, 0
        %v2240 = vsel %vm2208, 1, 0
        %v2241 = vsel %vm2209, 1, 0
        %v2242 = vsel %vm2210, 1, 0
        %v2243 = vsel %vm2211, 1, 0
        %v2244 = vsel %vm2212, 1, 0
        %v2245 = vsel %vm2213, 1, 0
        %v2246 = vsel %vm2214, 1, 0
        %v2247 = vsel %vm2215, 1, 0
        %v2248 = vsel %vm2216, 1, 0
        %v2249 = vsel %vm2217, 1, 0
        %v2250 = vsel %vm2218, 1, 0
        %v2251 = vsel %vm2219, 1, 0
        %v2252 = vsel %vm2220, 1, 0
        %v2253 = vsel %vm2221, 1, 0
        %v2254 = vsel %vm2222, 1, 0
        %v2255 = vsel %vm2223, 1, 0
        %v2256 = vsel %vm2224, 1, 0
        %v2257 = vsel %vm2225, 1, 0
        %v2258 = vsel %vm2226, 1, 0
        %v2259 = vsel %vm2227, 1, 0
        %v2260 = vsel %vm2228, 1, 0
        %v2261 = vsel %vm2229, 1, 0
        %v2262 = vsel %vm2230, 1, 0
        %v2263 = vsel %vm2231, 1, 0
        %v2264 = vcvt.s32.f32 %v2232
        %v2265 = vcvt.s32.f32 %v2233
        %v2266 = vcvt.s32.f32 %v2234
        %v2267 = vcvt.s32.f32 %v2235
        %v2268 = vcvt.s32.f32 %v2236
        %v2269 = vcvt.s32.f32 %v2237
        %v2270 = vcvt.s32.f32 %v2238
        %v2271 = vcvt.s32.f32 %v2239
        %v2272 = vcvt.s32.f32 %v2240
        %v2273 = vcvt.s32.f32 %v2241
        %v2274 = vcvt.s32.f32 %v2242
        %v2275 = vcvt.s32.f32 %v2243
        %v2276 = vcvt.s32.f32 %v2244
        %v2277 = vcvt.s32.f32 %v2245
        %v2278 = vcvt.s32.f32 %v2246
        %v2279 = vcvt.s32.f32 %v2247
        %v2280 = vcvt.s32.f32 %v2248
        %v2281 = vcvt.s32.f32 %v2249
        %v2282 = vcvt.s32.f32 %v2250
        %v2283 = vcvt.s32.f32 %v2251
        %v2284 = vcvt.s32.f32 %v2252
        %v2285 = vcvt.s32.f32 %v2253
        %v2286 = vcvt.s32.f32 %v2254
        %v2287 = vcvt.s32.f32 %v2255
        %v2288 = vcvt.s32.f32 %v2256
        %v2289 = vcvt.s32.f32 %v2257
        %v2290 = vcvt.s32.f32 %v2258
        %v2291 = vcvt.s32.f32 %v2259
        %v2292 = vcvt.s32.f32 %v2260
        %v2293 = vcvt.s32.f32 %v2261
        %v2294 = vcvt.s32.f32 %v2262
        %v2295 = vcvt.s32.f32 %v2263
        %v2296 = vperm.slane %v392, 7
        %vm2297 = vcmp.eq.s32.totalorder %v359, %v2296
        %vm2298 = vcmp.eq.s32.totalorder %v360, %v2296
        %vm2299 = vcmp.eq.s32.totalorder %v361, %v2296
        %vm2300 = vcmp.eq.s32.totalorder %v362, %v2296
        %vm2301 = vcmp.eq.s32.totalorder %v363, %v2296
        %vm2302 = vcmp.eq.s32.totalorder %v364, %v2296
        %vm2303 = vcmp.eq.s32.totalorder %v365, %v2296
        %vm2304 = vcmp.eq.s32.totalorder %v366, %v2296
        %vm2305 = vcmp.eq.s32.totalorder %v367, %v2296
        %vm2306 = vcmp.eq.s32.totalorder %v368, %v2296
        %vm2307 = vcmp.eq.s32.totalorder %v369, %v2296
        %vm2308 = vcmp.eq.s32.totalorder %v370, %v2296
        %vm2309 = vcmp.eq.s32.totalorder %v371, %v2296
        %vm2310 = vcmp.eq.s32.totalorder %v372, %v2296
        %vm2311 = vcmp.eq.s32.totalorder %v373, %v2296
        %vm2312 = vcmp.eq.s32.totalorder %v374, %v2296
        %vm2313 = vcmp.eq.s32.totalorder %v375, %v2296
        %vm2314 = vcmp.eq.s32.totalorder %v376, %v2296
        %vm2315 = vcmp.eq.s32.totalorder %v377, %v2296
        %vm2316 = vcmp.eq.s32.totalorder %v378, %v2296
        %vm2317 = vcmp.eq.s32.totalorder %v379, %v2296
        %vm2318 = vcmp.eq.s32.totalorder %v380, %v2296
        %vm2319 = vcmp.eq.s32.totalorder %v381, %v2296
        %vm2320 = vcmp.eq.s32.totalorder %v382, %v2296
        %vm2321 = vcmp.eq.s32.totalorder %v383, %v2296
        %vm2322 = vcmp.eq.s32.totalorder %v384, %v2296
        %vm2323 = vcmp.eq.s32.totalorder %v385, %v2296
        %vm2324 = vcmp.eq.s32.totalorder %v386, %v2296
        %vm2325 = vcmp.eq.s32.totalorder %v387, %v2296
        %vm2326 = vcmp.eq.s32.totalorder %v388, %v2296
        %vm2327 = vcmp.eq.s32.totalorder %v389, %v2296
        %vm2328 = vcmp.eq.s32.totalorder %v390, %v2296
        %v2329 = vsel %vm2297, 1, 0
        %v2330 = vsel %vm2298, 1, 0
        %v2331 = vsel %vm2299, 1, 0
        %v2332 = vsel %vm2300, 1, 0
        %v2333 = vsel %vm2301, 1, 0
        %v2334 = vsel %vm2302, 1, 0
        %v2335 = vsel %vm2303, 1, 0
        %v2336 = vsel %vm2304, 1, 0
        %v2337 = vsel %vm2305, 1, 0
        %v2338 = vsel %vm2306, 1, 0
        %v2339 = vsel %vm2307, 1, 0
        %v2340 = vsel %vm2308, 1, 0
        %v2341 = vsel %vm2309, 1, 0
        %v2342 = vsel %vm2310, 1, 0
        %v2343 = vsel %vm2311, 1, 0
        %v2344 = vsel %vm2312, 1, 0
        %v2345 = vsel %vm2313, 1, 0
        %v2346 = vsel %vm2314, 1, 0
        %v2347 = vsel %vm2315, 1, 0
        %v2348 = vsel %vm2316, 1, 0
        %v2349 = vsel %vm2317, 1, 0
        %v2350 = vsel %vm2318, 1, 0
        %v2351 = vsel %vm2319, 1, 0
        %v2352 = vsel %vm2320, 1, 0
        %v2353 = vsel %vm2321, 1, 0
        %v2354 = vsel %vm2322, 1, 0
        %v2355 = vsel %vm2323, 1, 0
        %v2356 = vsel %vm2324, 1, 0
        %v2357 = vsel %vm2325, 1, 0
        %v2358 = vsel %vm2326, 1, 0
        %v2359 = vsel %vm2327, 1, 0
        %v2360 = vsel %vm2328, 1, 0
        %v2361 = vcvt.s32.f32 %v2329
        %v2362 = vcvt.s32.f32 %v2330
        %v2363 = vcvt.s32.f32 %v2331
        %v2364 = vcvt.s32.f32 %v2332
        %v2365 = vcvt.s32.f32 %v2333
        %v2366 = vcvt.s32.f32 %v2334
        %v2367 = vcvt.s32.f32 %v2335
        %v2368 = vcvt.s32.f32 %v2336
        %v2369 = vcvt.s32.f32 %v2337
        %v2370 = vcvt.s32.f32 %v2338
        %v2371 = vcvt.s32.f32 %v2339
        %v2372 = vcvt.s32.f32 %v2340
        %v2373 = vcvt.s32.f32 %v2341
        %v2374 = vcvt.s32.f32 %v2342
        %v2375 = vcvt.s32.f32 %v2343
        %v2376 = vcvt.s32.f32 %v2344
        %v2377 = vcvt.s32.f32 %v2345
        %v2378 = vcvt.s32.f32 %v2346
        %v2379 = vcvt.s32.f32 %v2347
        %v2380 = vcvt.s32.f32 %v2348
        %v2381 = vcvt.s32.f32 %v2349
        %v2382 = vcvt.s32.f32 %v2350
        %v2383 = vcvt.s32.f32 %v2351
        %v2384 = vcvt.s32.f32 %v2352
        %v2385 = vcvt.s32.f32 %v2353
        %v2386 = vcvt.s32.f32 %v2354
        %v2387 = vcvt.s32.f32 %v2355
        %v2388 = vcvt.s32.f32 %v2356
        %v2389 = vcvt.s32.f32 %v2357
        %v2390 = vcvt.s32.f32 %v2358
        %v2391 = vcvt.s32.f32 %v2359
        %v2392 = vcvt.s32.f32 %v2360
        %v2393 = vsub.f32 %v2264, %v2361
        %v2394 = vsub.f32 %v2265, %v2362
        %v2395 = vsub.f32 %v2266, %v2363
        %v2396 = vsub.f32 %v2267, %v2364
        %v2397 = vsub.f32 %v2268, %v2365
        %v2398 = vsub.f32 %v2269, %v2366
        %v2399 = vsub.f32 %v2270, %v2367
        %v2400 = vsub.f32 %v2271, %v2368
        %v2401 = vsub.f32 %v2272, %v2369
        %v2402 = vsub.f32 %v2273, %v2370
        %v2403 = vsub.f32 %v2274, %v2371
        %v2404 = vsub.f32 %v2275, %v2372
        %v2405 = vsub.f32 %v2276, %v2373
        %v2406 = vsub.f32 %v2277, %v2374
        %v2407 = vsub.f32 %v2278, %v2375
        %v2408 = vsub.f32 %v2279, %v2376
        %v2409 = vsub.f32 %v2280, %v2377
        %v2410 = vsub.f32 %v2281, %v2378
        %v2411 = vsub.f32 %v2282, %v2379
        %v2412 = vsub.f32 %v2283, %v2380
        %v2413 = vsub.f32 %v2284, %v2381
        %v2414 = vsub.f32 %v2285, %v2382
        %v2415 = vsub.f32 %v2286, %v2383
        %v2416 = vsub.f32 %v2287, %v2384
        %v2417 = vsub.f32 %v2288, %v2385
        %v2418 = vsub.f32 %v2289, %v2386
        %v2419 = vsub.f32 %v2290, %v2387
        %v2420 = vsub.f32 %v2291, %v2388
        %v2421 = vsub.f32 %v2292, %v2389
        %v2422 = vsub.f32 %v2293, %v2390
        %v2423 = vsub.f32 %v2294, %v2391
        %v2424 = vsub.f32 %v2295, %v2392
        %2425 = vst [vmem:[#allocation2 + $0x38] sm:$0xff] %v2393
        %2426 = vst [vmem:[#allocation2 + $0x78] sm:$0xff] %v2394
        %2427 = vst [vmem:[#allocation2 + $0xb8] sm:$0xff] %v2395
        %2428 = vst [vmem:[#allocation2 + $0xf8] sm:$0xff] %v2396
        %2429 = vst [vmem:[#allocation2 + $0x138] sm:$0xff] %v2397
        %2430 = vst [vmem:[#allocation2 + $0x178] sm:$0xff] %v2398
        %2431 = vst [vmem:[#allocation2 + $0x1b8] sm:$0xff] %v2399
        %2432 = vst [vmem:[#allocation2 + $0x1f8] sm:$0xff] %v2400
        %2433 = vst [vmem:[#allocation2 + $0x238] sm:$0xff] %v2401
        %2434 = vst [vmem:[#allocation2 + $0x278] sm:$0xff] %v2402
        %2435 = vst [vmem:[#allocation2 + $0x2b8] sm:$0xff] %v2403
        %2436 = vst [vmem:[#allocation2 + $0x2f8] sm:$0xff] %v2404
        %2437 = vst [vmem:[#allocation2 + $0x338] sm:$0xff] %v2405
        %2438 = vst [vmem:[#allocation2 + $0x378] sm:$0xff] %v2406
        %2439 = vst [vmem:[#allocation2 + $0x3b8] sm:$0xff] %v2407
        %2440 = vst [vmem:[#allocation2 + $0x3f8] sm:$0xff] %v2408
        %2441 = vst [vmem:[#allocation2 + $0x438] sm:$0xff] %v2409
        %2442 = vst [vmem:[#allocation2 + $0x478] sm:$0xff] %v2410
        %2443 = vst [vmem:[#allocation2 + $0x4b8] sm:$0xff] %v2411
        %2444 = vst [vmem:[#allocation2 + $0x4f8] sm:$0xff] %v2412
        %2445 = vst [vmem:[#allocation2 + $0x538] sm:$0xff] %v2413
        %2446 = vst [vmem:[#allocation2 + $0x578] sm:$0xff] %v2414
        %2447 = vst [vmem:[#allocation2 + $0x5b8] sm:$0xff] %v2415
        %2448 = vst [vmem:[#allocation2 + $0x5f8] sm:$0xff] %v2416
        %2449 = vst [vmem:[#allocation2 + $0x638] sm:$0xff] %v2417
        %2450 = vst [vmem:[#allocation2 + $0x678] sm:$0xff] %v2418
        %2451 = vst [vmem:[#allocation2 + $0x6b8] sm:$0xff] %v2419
        %2452 = vst [vmem:[#allocation2 + $0x6f8] sm:$0xff] %v2420
        %2453 = vst [vmem:[#allocation2 + $0x738] sm:$0xff] %v2421
        %2454 = vst [vmem:[#allocation2 + $0x778] sm:$0xff] %v2422
        %2455 = vst [vmem:[#allocation2 + $0x7b8] sm:$0xff] %v2423
        %2456 = vst [vmem:[#allocation2 + $0x7f8] sm:$0xff] %v2424
        %v2457 = vld [vmem:[#allocation2] sm:$0xff]
        %v2458 = vld [vmem:[#allocation2 + $0x8] sm:$0xff]
        %v2459 = vld [vmem:[#allocation2 + $0x10] sm:$0xff]
        %v2460 = vld [vmem:[#allocation2 + $0x18] sm:$0xff]
        %v2461 = vld [vmem:[#allocation2 + $0x20] sm:$0xff]
        %v2462 = vld [vmem:[#allocation2 + $0x28] sm:$0xff]
        %v2463 = vld [vmem:[#allocation2 + $0x30] sm:$0xff]
        %v2464 = vld [vmem:[#allocation2 + $0x38] sm:$0xff]
        %v2465 = vld [vmem:[#allocation2 + $0x40] sm:$0xff]
        %v2466 = vld [vmem:[#allocation2 + $0x48] sm:$0xff]
        %v2467 = vld [vmem:[#allocation2 + $0x50] sm:$0xff]
        %v2468 = vld [vmem:[#allocation2 + $0x58] sm:$0xff]
        %v2469 = vld [vmem:[#allocation2 + $0x60] sm:$0xff]
        %v2470 = vld [vmem:[#allocation2 + $0x68] sm:$0xff]
        %v2471 = vld [vmem:[#allocation2 + $0x70] sm:$0xff]
        %v2472 = vld [vmem:[#allocation2 + $0x78] sm:$0xff]
        %v2473 = vld [vmem:[#allocation2 + $0x80] sm:$0xff]
        %v2474 = vld [vmem:[#allocation2 + $0x88] sm:$0xff]
        %v2475 = vld [vmem:[#allocation2 + $0x90] sm:$0xff]
        %v2476 = vld [vmem:[#allocation2 + $0x98] sm:$0xff]
        %v2477 = vld [vmem:[#allocation2 + $0xa0] sm:$0xff]
        %v2478 = vld [vmem:[#allocation2 + $0xa8] sm:$0xff]
        %v2479 = vld [vmem:[#allocation2 + $0xb0] sm:$0xff]
        %v2480 = vld [vmem:[#allocation2 + $0xb8] sm:$0xff]
        %v2481 = vld [vmem:[#allocation2 + $0xc0] sm:$0xff]
        %v2482 = vld [vmem:[#allocation2 + $0xc8] sm:$0xff]
        %v2483 = vld [vmem:[#allocation2 + $0xd0] sm:$0xff]
        %v2484 = vld [vmem:[#allocation2 + $0xd8] sm:$0xff]
        %v2485 = vld [vmem:[#allocation2 + $0xe0] sm:$0xff]
        %v2486 = vld [vmem:[#allocation2 + $0xe8] sm:$0xff]
        %v2487 = vld [vmem:[#allocation2 + $0xf0] sm:$0xff]
        %v2488 = vld [vmem:[#allocation2 + $0xf8] sm:$0xff]
        %v2489 = vld [vmem:[#allocation2 + $0x100] sm:$0xff]
        %v2490 = vld [vmem:[#allocation2 + $0x108] sm:$0xff]
        %v2491 = vld [vmem:[#allocation2 + $0x110] sm:$0xff]
        %v2492 = vld [vmem:[#allocation2 + $0x118] sm:$0xff]
        %v2493 = vld [vmem:[#allocation2 + $0x120] sm:$0xff]
        %v2494 = vld [vmem:[#allocation2 + $0x128] sm:$0xff]
        %v2495 = vld [vmem:[#allocation2 + $0x130] sm:$0xff]
        %v2496 = vld [vmem:[#allocation2 + $0x138] sm:$0xff]
        %v2497 = vld [vmem:[#allocation2 + $0x140] sm:$0xff]
        %v2498 = vld [vmem:[#allocation2 + $0x148] sm:$0xff]
        %v2499 = vld [vmem:[#allocation2 + $0x150] sm:$0xff]
        %v2500 = vld [vmem:[#allocation2 + $0x158] sm:$0xff]
        %v2501 = vld [vmem:[#allocation2 + $0x160] sm:$0xff]
        %v2502 = vld [vmem:[#allocation2 + $0x168] sm:$0xff]
        %v2503 = vld [vmem:[#allocation2 + $0x170] sm:$0xff]
        %v2504 = vld [vmem:[#allocation2 + $0x178] sm:$0xff]
        %v2505 = vld [vmem:[#allocation2 + $0x180] sm:$0xff]
        %v2506 = vld [vmem:[#allocation2 + $0x188] sm:$0xff]
        %v2507 = vld [vmem:[#allocation2 + $0x190] sm:$0xff]
        %v2508 = vld [vmem:[#allocation2 + $0x198] sm:$0xff]
        %v2509 = vld [vmem:[#allocation2 + $0x1a0] sm:$0xff]
        %v2510 = vld [vmem:[#allocation2 + $0x1a8] sm:$0xff]
        %v2511 = vld [vmem:[#allocation2 + $0x1b0] sm:$0xff]
        %v2512 = vld [vmem:[#allocation2 + $0x1b8] sm:$0xff]
        %v2513 = vld [vmem:[#allocation2 + $0x1c0] sm:$0xff]
        %v2514 = vld [vmem:[#allocation2 + $0x1c8] sm:$0xff]
        %v2515 = vld [vmem:[#allocation2 + $0x1d0] sm:$0xff]
        %v2516 = vld [vmem:[#allocation2 + $0x1d8] sm:$0xff]
        %v2517 = vld [vmem:[#allocation2 + $0x1e0] sm:$0xff]
        %v2518 = vld [vmem:[#allocation2 + $0x1e8] sm:$0xff]
        %v2519 = vld [vmem:[#allocation2 + $0x1f0] sm:$0xff]
        %v2520 = vld [vmem:[#allocation2 + $0x1f8] sm:$0xff]
        %v2521 = vld [vmem:[#allocation2 + $0x200] sm:$0xff]
        %v2522 = vld [vmem:[#allocation2 + $0x208] sm:$0xff]
        %v2523 = vld [vmem:[#allocation2 + $0x210] sm:$0xff]
        %v2524 = vld [vmem:[#allocation2 + $0x218] sm:$0xff]
        %v2525 = vld [vmem:[#allocation2 + $0x220] sm:$0xff]
        %v2526 = vld [vmem:[#allocation2 + $0x228] sm:$0xff]
        %v2527 = vld [vmem:[#allocation2 + $0x230] sm:$0xff]
        %v2528 = vld [vmem:[#allocation2 + $0x238] sm:$0xff]
        %v2529 = vld [vmem:[#allocation2 + $0x240] sm:$0xff]
        %v2530 = vld [vmem:[#allocation2 + $0x248] sm:$0xff]
        %v2531 = vld [vmem:[#allocation2 + $0x250] sm:$0xff]
        %v2532 = vld [vmem:[#allocation2 + $0x258] sm:$0xff]
        %v2533 = vld [vmem:[#allocation2 + $0x260] sm:$0xff]
        %v2534 = vld [vmem:[#allocation2 + $0x268] sm:$0xff]
        %v2535 = vld [vmem:[#allocation2 + $0x270] sm:$0xff]
        %v2536 = vld [vmem:[#allocation2 + $0x278] sm:$0xff]
        %v2537 = vld [vmem:[#allocation2 + $0x280] sm:$0xff]
        %v2538 = vld [vmem:[#allocation2 + $0x288] sm:$0xff]
        %v2539 = vld [vmem:[#allocation2 + $0x290] sm:$0xff]
        %v2540 = vld [vmem:[#allocation2 + $0x298] sm:$0xff]
        %v2541 = vld [vmem:[#allocation2 + $0x2a0] sm:$0xff]
        %v2542 = vld [vmem:[#allocation2 + $0x2a8] sm:$0xff]
        %v2543 = vld [vmem:[#allocation2 + $0x2b0] sm:$0xff]
        %v2544 = vld [vmem:[#allocation2 + $0x2b8] sm:$0xff]
        %v2545 = vld [vmem:[#allocation2 + $0x2c0] sm:$0xff]
        %v2546 = vld [vmem:[#allocation2 + $0x2c8] sm:$0xff]
        %v2547 = vld [vmem:[#allocation2 + $0x2d0] sm:$0xff]
        %v2548 = vld [vmem:[#allocation2 + $0x2d8] sm:$0xff]
        %v2549 = vld [vmem:[#allocation2 + $0x2e0] sm:$0xff]
        %v2550 = vld [vmem:[#allocation2 + $0x2e8] sm:$0xff]
        %v2551 = vld [vmem:[#allocation2 + $0x2f0] sm:$0xff]
        %v2552 = vld [vmem:[#allocation2 + $0x2f8] sm:$0xff]
        %v2553 = vld [vmem:[#allocation2 + $0x300] sm:$0xff]
        %v2554 = vld [vmem:[#allocation2 + $0x308] sm:$0xff]
        %v2555 = vld [vmem:[#allocation2 + $0x310] sm:$0xff]
        %v2556 = vld [vmem:[#allocation2 + $0x318] sm:$0xff]
        %v2557 = vld [vmem:[#allocation2 + $0x320] sm:$0xff]
        %v2558 = vld [vmem:[#allocation2 + $0x328] sm:$0xff]
        %v2559 = vld [vmem:[#allocation2 + $0x330] sm:$0xff]
        %v2560 = vld [vmem:[#allocation2 + $0x338] sm:$0xff]
        %v2561 = vld [vmem:[#allocation2 + $0x340] sm:$0xff]
        %v2562 = vld [vmem:[#allocation2 + $0x348] sm:$0xff]
        %v2563 = vld [vmem:[#allocation2 + $0x350] sm:$0xff]
        %v2564 = vld [vmem:[#allocation2 + $0x358] sm:$0xff]
        %v2565 = vld [vmem:[#allocation2 + $0x360] sm:$0xff]
        %v2566 = vld [vmem:[#allocation2 + $0x368] sm:$0xff]
        %v2567 = vld [vmem:[#allocation2 + $0x370] sm:$0xff]
        %v2568 = vld [vmem:[#allocation2 + $0x378] sm:$0xff]
        %v2569 = vld [vmem:[#allocation2 + $0x380] sm:$0xff]
        %v2570 = vld [vmem:[#allocation2 + $0x388] sm:$0xff]
        %v2571 = vld [vmem:[#allocation2 + $0x390] sm:$0xff]
        %v2572 = vld [vmem:[#allocation2 + $0x398] sm:$0xff]
        %v2573 = vld [vmem:[#allocation2 + $0x3a0] sm:$0xff]
        %v2574 = vld [vmem:[#allocation2 + $0x3a8] sm:$0xff]
        %v2575 = vld [vmem:[#allocation2 + $0x3b0] sm:$0xff]
        %v2576 = vld [vmem:[#allocation2 + $0x3b8] sm:$0xff]
        %v2577 = vld [vmem:[#allocation2 + $0x3c0] sm:$0xff]
        %v2578 = vld [vmem:[#allocation2 + $0x3c8] sm:$0xff]
        %v2579 = vld [vmem:[#allocation2 + $0x3d0] sm:$0xff]
        %v2580 = vld [vmem:[#allocation2 + $0x3d8] sm:$0xff]
        %v2581 = vld [vmem:[#allocation2 + $0x3e0] sm:$0xff]
        %v2582 = vld [vmem:[#allocation2 + $0x3e8] sm:$0xff]
        %v2583 = vld [vmem:[#allocation2 + $0x3f0] sm:$0xff]
        %v2584 = vld [vmem:[#allocation2 + $0x3f8] sm:$0xff]
        %v2585 = vld [vmem:[#allocation2 + $0x400] sm:$0xff]
        %v2586 = vld [vmem:[#allocation2 + $0x408] sm:$0xff]
        %v2587 = vld [vmem:[#allocation2 + $0x410] sm:$0xff]
        %v2588 = vld [vmem:[#allocation2 + $0x418] sm:$0xff]
        %v2589 = vld [vmem:[#allocation2 + $0x420] sm:$0xff]
        %v2590 = vld [vmem:[#allocation2 + $0x428] sm:$0xff]
        %v2591 = vld [vmem:[#allocation2 + $0x430] sm:$0xff]
        %v2592 = vld [vmem:[#allocation2 + $0x438] sm:$0xff]
        %v2593 = vld [vmem:[#allocation2 + $0x440] sm:$0xff]
        %v2594 = vld [vmem:[#allocation2 + $0x448] sm:$0xff]
        %v2595 = vld [vmem:[#allocation2 + $0x450] sm:$0xff]
        %v2596 = vld [vmem:[#allocation2 + $0x458] sm:$0xff]
        %v2597 = vld [vmem:[#allocation2 + $0x460] sm:$0xff]
        %v2598 = vld [vmem:[#allocation2 + $0x468] sm:$0xff]
        %v2599 = vld [vmem:[#allocation2 + $0x470] sm:$0xff]
        %v2600 = vld [vmem:[#allocation2 + $0x478] sm:$0xff]
        %v2601 = vld [vmem:[#allocation2 + $0x480] sm:$0xff]
        %v2602 = vld [vmem:[#allocation2 + $0x488] sm:$0xff]
        %v2603 = vld [vmem:[#allocation2 + $0x490] sm:$0xff]
        %v2604 = vld [vmem:[#allocation2 + $0x498] sm:$0xff]
        %v2605 = vld [vmem:[#allocation2 + $0x4a0] sm:$0xff]
        %v2606 = vld [vmem:[#allocation2 + $0x4a8] sm:$0xff]
        %v2607 = vld [vmem:[#allocation2 + $0x4b0] sm:$0xff]
        %v2608 = vld [vmem:[#allocation2 + $0x4b8] sm:$0xff]
        %v2609 = vld [vmem:[#allocation2 + $0x4c0] sm:$0xff]
        %v2610 = vld [vmem:[#allocation2 + $0x4c8] sm:$0xff]
        %v2611 = vld [vmem:[#allocation2 + $0x4d0] sm:$0xff]
        %v2612 = vld [vmem:[#allocation2 + $0x4d8] sm:$0xff]
        %v2613 = vld [vmem:[#allocation2 + $0x4e0] sm:$0xff]
        %v2614 = vld [vmem:[#allocation2 + $0x4e8] sm:$0xff]
        %v2615 = vld [vmem:[#allocation2 + $0x4f0] sm:$0xff]
        %v2616 = vld [vmem:[#allocation2 + $0x4f8] sm:$0xff]
        %v2617 = vld [vmem:[#allocation2 + $0x500] sm:$0xff]
        %v2618 = vld [vmem:[#allocation2 + $0x508] sm:$0xff]
        %v2619 = vld [vmem:[#allocation2 + $0x510] sm:$0xff]
        %v2620 = vld [vmem:[#allocation2 + $0x518] sm:$0xff]
        %v2621 = vld [vmem:[#allocation2 + $0x520] sm:$0xff]
        %v2622 = vld [vmem:[#allocation2 + $0x528] sm:$0xff]
        %v2623 = vld [vmem:[#allocation2 + $0x530] sm:$0xff]
        %v2624 = vld [vmem:[#allocation2 + $0x538] sm:$0xff]
        %v2625 = vld [vmem:[#allocation2 + $0x540] sm:$0xff]
        %v2626 = vld [vmem:[#allocation2 + $0x548] sm:$0xff]
        %v2627 = vld [vmem:[#allocation2 + $0x550] sm:$0xff]
        %v2628 = vld [vmem:[#allocation2 + $0x558] sm:$0xff]
        %v2629 = vld [vmem:[#allocation2 + $0x560] sm:$0xff]
        %v2630 = vld [vmem:[#allocation2 + $0x568] sm:$0xff]
        %v2631 = vld [vmem:[#allocation2 + $0x570] sm:$0xff]
        %v2632 = vld [vmem:[#allocation2 + $0x578] sm:$0xff]
        %v2633 = vld [vmem:[#allocation2 + $0x580] sm:$0xff]
        %v2634 = vld [vmem:[#allocation2 + $0x588] sm:$0xff]
        %v2635 = vld [vmem:[#allocation2 + $0x590] sm:$0xff]
        %v2636 = vld [vmem:[#allocation2 + $0x598] sm:$0xff]
        %v2637 = vld [vmem:[#allocation2 + $0x5a0] sm:$0xff]
        %v2638 = vld [vmem:[#allocation2 + $0x5a8] sm:$0xff]
        %v2639 = vld [vmem:[#allocation2 + $0x5b0] sm:$0xff]
        %v2640 = vld [vmem:[#allocation2 + $0x5b8] sm:$0xff]
        %v2641 = vld [vmem:[#allocation2 + $0x5c0] sm:$0xff]
        %v2642 = vld [vmem:[#allocation2 + $0x5c8] sm:$0xff]
        %v2643 = vld [vmem:[#allocation2 + $0x5d0] sm:$0xff]
        %v2644 = vld [vmem:[#allocation2 + $0x5d8] sm:$0xff]
        %v2645 = vld [vmem:[#allocation2 + $0x5e0] sm:$0xff]
        %v2646 = vld [vmem:[#allocation2 + $0x5e8] sm:$0xff]
        %v2647 = vld [vmem:[#allocation2 + $0x5f0] sm:$0xff]
        %v2648 = vld [vmem:[#allocation2 + $0x5f8] sm:$0xff]
        %v2649 = vld [vmem:[#allocation2 + $0x600] sm:$0xff]
        %v2650 = vld [vmem:[#allocation2 + $0x608] sm:$0xff]
        %v2651 = vld [vmem:[#allocation2 + $0x610] sm:$0xff]
        %v2652 = vld [vmem:[#allocation2 + $0x618] sm:$0xff]
        %v2653 = vld [vmem:[#allocation2 + $0x620] sm:$0xff]
        %v2654 = vld [vmem:[#allocation2 + $0x628] sm:$0xff]
        %v2655 = vld [vmem:[#allocation2 + $0x630] sm:$0xff]
        %v2656 = vld [vmem:[#allocation2 + $0x638] sm:$0xff]
        %v2657 = vld [vmem:[#allocation2 + $0x640] sm:$0xff]
        %v2658 = vld [vmem:[#allocation2 + $0x648] sm:$0xff]
        %v2659 = vld [vmem:[#allocation2 + $0x650] sm:$0xff]
        %v2660 = vld [vmem:[#allocation2 + $0x658] sm:$0xff]
        %v2661 = vld [vmem:[#allocation2 + $0x660] sm:$0xff]
        %v2662 = vld [vmem:[#allocation2 + $0x668] sm:$0xff]
        %v2663 = vld [vmem:[#allocation2 + $0x670] sm:$0xff]
        %v2664 = vld [vmem:[#allocation2 + $0x678] sm:$0xff]
        %v2665 = vld [vmem:[#allocation2 + $0x680] sm:$0xff]
        %v2666 = vld [vmem:[#allocation2 + $0x688] sm:$0xff]
        %v2667 = vld [vmem:[#allocation2 + $0x690] sm:$0xff]
        %v2668 = vld [vmem:[#allocation2 + $0x698] sm:$0xff]
        %v2669 = vld [vmem:[#allocation2 + $0x6a0] sm:$0xff]
        %v2670 = vld [vmem:[#allocation2 + $0x6a8] sm:$0xff]
        %v2671 = vld [vmem:[#allocation2 + $0x6b0] sm:$0xff]
        %v2672 = vld [vmem:[#allocation2 + $0x6b8] sm:$0xff]
        %v2673 = vld [vmem:[#allocation2 + $0x6c0] sm:$0xff]
        %v2674 = vld [vmem:[#allocation2 + $0x6c8] sm:$0xff]
        %v2675 = vld [vmem:[#allocation2 + $0x6d0] sm:$0xff]
        %v2676 = vld [vmem:[#allocation2 + $0x6d8] sm:$0xff]
        %v2677 = vld [vmem:[#allocation2 + $0x6e0] sm:$0xff]
        %v2678 = vld [vmem:[#allocation2 + $0x6e8] sm:$0xff]
        %v2679 = vld [vmem:[#allocation2 + $0x6f0] sm:$0xff]
        %v2680 = vld [vmem:[#allocation2 + $0x6f8] sm:$0xff]
        %v2681 = vld [vmem:[#allocation2 + $0x700] sm:$0xff]
        %v2682 = vld [vmem:[#allocation2 + $0x708] sm:$0xff]
        %v2683 = vld [vmem:[#allocation2 + $0x710] sm:$0xff]
        %v2684 = vld [vmem:[#allocation2 + $0x718] sm:$0xff]
        %v2685 = vld [vmem:[#allocation2 + $0x720] sm:$0xff]
        %v2686 = vld [vmem:[#allocation2 + $0x728] sm:$0xff]
        %v2687 = vld [vmem:[#allocation2 + $0x730] sm:$0xff]
        %v2688 = vld [vmem:[#allocation2 + $0x738] sm:$0xff]
        %v2689 = vld [vmem:[#allocation2 + $0x740] sm:$0xff]
        %v2690 = vld [vmem:[#allocation2 + $0x748] sm:$0xff]
        %v2691 = vld [vmem:[#allocation2 + $0x750] sm:$0xff]
        %v2692 = vld [vmem:[#allocation2 + $0x758] sm:$0xff]
        %v2693 = vld [vmem:[#allocation2 + $0x760] sm:$0xff]
        %v2694 = vld [vmem:[#allocation2 + $0x768] sm:$0xff]
        %v2695 = vld [vmem:[#allocation2 + $0x770] sm:$0xff]
        %v2696 = vld [vmem:[#allocation2 + $0x778] sm:$0xff]
        %v2697 = vld [vmem:[#allocation2 + $0x780] sm:$0xff]
        %v2698 = vld [vmem:[#allocation2 + $0x788] sm:$0xff]
        %v2699 = vld [vmem:[#allocation2 + $0x790] sm:$0xff]
        %v2700 = vld [vmem:[#allocation2 + $0x798] sm:$0xff]
        %v2701 = vld [vmem:[#allocation2 + $0x7a0] sm:$0xff]
        %v2702 = vld [vmem:[#allocation2 + $0x7a8] sm:$0xff]
        %v2703 = vld [vmem:[#allocation2 + $0x7b0] sm:$0xff]
        %v2704 = vld [vmem:[#allocation2 + $0x7b8] sm:$0xff]
        %v2705 = vld [vmem:[#allocation2 + $0x7c0] sm:$0xff]
        %v2706 = vld [vmem:[#allocation2 + $0x7c8] sm:$0xff]
        %v2707 = vld [vmem:[#allocation2 + $0x7d0] sm:$0xff]
        %v2708 = vld [vmem:[#allocation2 + $0x7d8] sm:$0xff]
        %v2709 = vld [vmem:[#allocation2 + $0x7e0] sm:$0xff]
        %v2710 = vld [vmem:[#allocation2 + $0x7e8] sm:$0xff]
        %v2711 = vld [vmem:[#allocation2 + $0x7f0] sm:$0xff]
        %v2712 = vld [vmem:[#allocation2 + $0x7f8] sm:$0xff]
        %2713 = vmatpush.msra.mxu0 %v2577
        %2714 = vmatpush.msra.mxu0 %v2569
        %2715 = vmatpush.msra.mxu0 %v2561
        %2716 = vmatpush.msra.mxu0 %v2553
        %2717 = vmatpush.msra.mxu0 %v2545
        %2718 = vmatpush.msra.mxu0 %v2537
        %2719 = vmatpush.msra.mxu0 %v2529
        %2720 = vmatpush.msra.mxu0 %v2521
        %2721 = vmatpush.msra.mxu0 %v2513
        %2722 = vmatpush.msra.mxu0 %v2505
        %2723 = vmatpush.msra.mxu0 %v2497
        %2724 = vmatpush.msra.mxu0 %v2489
        %2725 = vmatpush.msra.mxu0 %v2481
        %2726 = vmatpush.msra.mxu0 %v2473
        %2727 = vmatpush.msra.mxu0 %v2465
        %2728 = vmatpush.msra.mxu0 %v2457
        %2729 = vmatmul.f32.gmra.mxu0 %v350
        %v2730 = vpop.f32.mrf.mxu0
        %v2731 = vadd.f32 0.0, %v2730
        %2732 = vdwg.mxu0
        %2733 = vmatpush.msra.mxu0 %v2705
        %2734 = vmatpush.msra.mxu0 %v2697
        %2735 = vmatpush.msra.mxu0 %v2689
        %2736 = vmatpush.msra.mxu0 %v2681
        %2737 = vmatpush.msra.mxu0 %v2673
        %2738 = vmatpush.msra.mxu0 %v2665
        %2739 = vmatpush.msra.mxu0 %v2657
        %2740 = vmatpush.msra.mxu0 %v2649
        %2741 = vmatpush.msra.mxu0 %v2641
        %2742 = vmatpush.msra.mxu0 %v2633
        %2743 = vmatpush.msra.mxu0 %v2625
        %2744 = vmatpush.msra.mxu0 %v2617
        %2745 = vmatpush.msra.mxu0 %v2609
        %2746 = vmatpush.msra.mxu0 %v2601
        %2747 = vmatpush.msra.mxu0 %v2593
        %2748 = vmatpush.msra.mxu0 %v2585
        %2749 = vmatmul.f32.gmra.mxu0 %v351
        %v2750 = vpop.f32.mrf.mxu0
        %v2751 = vadd.f32 %v2731, %v2750
        %2752 = vdwg.mxu0
        %2753 = vmatpush.msra.mxu0 %v2578
        %2754 = vmatpush.msra.mxu0 %v2570
        %2755 = vmatpush.msra.mxu0 %v2562
        %2756 = vmatpush.msra.mxu0 %v2554
        %2757 = vmatpush.msra.mxu0 %v2546
        %2758 = vmatpush.msra.mxu0 %v2538
        %2759 = vmatpush.msra.mxu0 %v2530
        %2760 = vmatpush.msra.mxu0 %v2522
        %2761 = vmatpush.msra.mxu0 %v2514
        %2762 = vmatpush.msra.mxu0 %v2506
        %2763 = vmatpush.msra.mxu0 %v2498
        %2764 = vmatpush.msra.mxu0 %v2490
        %2765 = vmatpush.msra.mxu0 %v2482
        %2766 = vmatpush.msra.mxu0 %v2474
        %2767 = vmatpush.msra.mxu0 %v2466
        %2768 = vmatpush.msra.mxu0 %v2458
        %2769 = vmatmul.f32.gmra.mxu0 %v350
        %v2770 = vpop.f32.mrf.mxu0
        %v2771 = vadd.f32 0.0, %v2770
        %2772 = vdwg.mxu0
        %2773 = vmatpush.msra.mxu0 %v2706
        %2774 = vmatpush.msra.mxu0 %v2698
        %2775 = vmatpush.msra.mxu0 %v2690
        %2776 = vmatpush.msra.mxu0 %v2682
        %2777 = vmatpush.msra.mxu0 %v2674
        %2778 = vmatpush.msra.mxu0 %v2666
        %2779 = vmatpush.msra.mxu0 %v2658
        %2780 = vmatpush.msra.mxu0 %v2650
        %2781 = vmatpush.msra.mxu0 %v2642
        %2782 = vmatpush.msra.mxu0 %v2634
        %2783 = vmatpush.msra.mxu0 %v2626
        %2784 = vmatpush.msra.mxu0 %v2618
        %2785 = vmatpush.msra.mxu0 %v2610
        %2786 = vmatpush.msra.mxu0 %v2602
        %2787 = vmatpush.msra.mxu0 %v2594
        %2788 = vmatpush.msra.mxu0 %v2586
        %2789 = vmatmul.f32.gmra.mxu0 %v351
        %v2790 = vpop.f32.mrf.mxu0
        %v2791 = vadd.f32 %v2771, %v2790
        %2792 = vdwg.mxu0
        %2793 = vmatpush.msra.mxu0 %v2579
        %2794 = vmatpush.msra.mxu0 %v2571
        %2795 = vmatpush.msra.mxu0 %v2563
        %2796 = vmatpush.msra.mxu0 %v2555
        %2797 = vmatpush.msra.mxu0 %v2547
        %2798 = vmatpush.msra.mxu0 %v2539
        %2799 = vmatpush.msra.mxu0 %v2531
        %2800 = vmatpush.msra.mxu0 %v2523
        %2801 = vmatpush.msra.mxu0 %v2515
        %2802 = vmatpush.msra.mxu0 %v2507
        %2803 = vmatpush.msra.mxu0 %v2499
        %2804 = vmatpush.msra.mxu0 %v2491
        %2805 = vmatpush.msra.mxu0 %v2483
        %2806 = vmatpush.msra.mxu0 %v2475
        %2807 = vmatpush.msra.mxu0 %v2467
        %2808 = vmatpush.msra.mxu0 %v2459
        %2809 = vmatmul.f32.gmra.mxu0 %v350
        %v2810 = vpop.f32.mrf.mxu0
        %v2811 = vadd.f32 0.0, %v2810
        %2812 = vdwg.mxu0
        %2813 = vmatpush.msra.mxu0 %v2707
        %2814 = vmatpush.msra.mxu0 %v2699
        %2815 = vmatpush.msra.mxu0 %v2691
        %2816 = vmatpush.msra.mxu0 %v2683
        %2817 = vmatpush.msra.mxu0 %v2675
        %2818 = vmatpush.msra.mxu0 %v2667
        %2819 = vmatpush.msra.mxu0 %v2659
        %2820 = vmatpush.msra.mxu0 %v2651
        %2821 = vmatpush.msra.mxu0 %v2643
        %2822 = vmatpush.msra.mxu0 %v2635
        %2823 = vmatpush.msra.mxu0 %v2627
        %2824 = vmatpush.msra.mxu0 %v2619
        %2825 = vmatpush.msra.mxu0 %v2611
        %2826 = vmatpush.msra.mxu0 %v2603
        %2827 = vmatpush.msra.mxu0 %v2595
        %2828 = vmatpush.msra.mxu0 %v2587
        %2829 = vmatmul.f32.gmra.mxu0 %v351
        %v2830 = vpop.f32.mrf.mxu0
        %v2831 = vadd.f32 %v2811, %v2830
        %2832 = vdwg.mxu0
        %2833 = vmatpush.msra.mxu0 %v2580
        %2834 = vmatpush.msra.mxu0 %v2572
        %2835 = vmatpush.msra.mxu0 %v2564
        %2836 = vmatpush.msra.mxu0 %v2556
        %2837 = vmatpush.msra.mxu0 %v2548
        %2838 = vmatpush.msra.mxu0 %v2540
        %2839 = vmatpush.msra.mxu0 %v2532
        %2840 = vmatpush.msra.mxu0 %v2524
        %2841 = vmatpush.msra.mxu0 %v2516
        %2842 = vmatpush.msra.mxu0 %v2508
        %2843 = vmatpush.msra.mxu0 %v2500
        %2844 = vmatpush.msra.mxu0 %v2492
        %2845 = vmatpush.msra.mxu0 %v2484
        %2846 = vmatpush.msra.mxu0 %v2476
        %2847 = vmatpush.msra.mxu0 %v2468
        %2848 = vmatpush.msra.mxu0 %v2460
        %2849 = vmatmul.f32.gmra.mxu0 %v350
        %v2850 = vpop.f32.mrf.mxu0
        %v2851 = vadd.f32 0.0, %v2850
        %2852 = vdwg.mxu0
        %2853 = vmatpush.msra.mxu0 %v2708
        %2854 = vmatpush.msra.mxu0 %v2700
        %2855 = vmatpush.msra.mxu0 %v2692
        %2856 = vmatpush.msra.mxu0 %v2684
        %2857 = vmatpush.msra.mxu0 %v2676
        %2858 = vmatpush.msra.mxu0 %v2668
        %2859 = vmatpush.msra.mxu0 %v2660
        %2860 = vmatpush.msra.mxu0 %v2652
        %2861 = vmatpush.msra.mxu0 %v2644
        %2862 = vmatpush.msra.mxu0 %v2636
        %2863 = vmatpush.msra.mxu0 %v2628
        %2864 = vmatpush.msra.mxu0 %v2620
        %2865 = vmatpush.msra.mxu0 %v2612
        %2866 = vmatpush.msra.mxu0 %v2604
        %2867 = vmatpush.msra.mxu0 %v2596
        %2868 = vmatpush.msra.mxu0 %v2588
        %2869 = vmatmul.f32.gmra.mxu0 %v351
        %v2870 = vpop.f32.mrf.mxu0
        %v2871 = vadd.f32 %v2851, %v2870
        %2872 = vdwg.mxu0
        %2873 = vmatpush.msra.mxu0 %v2581
        %2874 = vmatpush.msra.mxu0 %v2573
        %2875 = vmatpush.msra.mxu0 %v2565
        %2876 = vmatpush.msra.mxu0 %v2557
        %2877 = vmatpush.msra.mxu0 %v2549
        %2878 = vmatpush.msra.mxu0 %v2541
        %2879 = vmatpush.msra.mxu0 %v2533
        %2880 = vmatpush.msra.mxu0 %v2525
        %2881 = vmatpush.msra.mxu0 %v2517
        %2882 = vmatpush.msra.mxu0 %v2509
        %2883 = vmatpush.msra.mxu0 %v2501
        %2884 = vmatpush.msra.mxu0 %v2493
        %2885 = vmatpush.msra.mxu0 %v2485
        %2886 = vmatpush.msra.mxu0 %v2477
        %2887 = vmatpush.msra.mxu0 %v2469
        %2888 = vmatpush.msra.mxu0 %v2461
        %2889 = vmatmul.f32.gmra.mxu0 %v350
        %v2890 = vpop.f32.mrf.mxu0
        %v2891 = vadd.f32 0.0, %v2890
        %2892 = vdwg.mxu0
        %2893 = vmatpush.msra.mxu0 %v2709
        %2894 = vmatpush.msra.mxu0 %v2701
        %2895 = vmatpush.msra.mxu0 %v2693
        %2896 = vmatpush.msra.mxu0 %v2685
        %2897 = vmatpush.msra.mxu0 %v2677
        %2898 = vmatpush.msra.mxu0 %v2669
        %2899 = vmatpush.msra.mxu0 %v2661
        %2900 = vmatpush.msra.mxu0 %v2653
        %2901 = vmatpush.msra.mxu0 %v2645
        %2902 = vmatpush.msra.mxu0 %v2637
        %2903 = vmatpush.msra.mxu0 %v2629
        %2904 = vmatpush.msra.mxu0 %v2621
        %2905 = vmatpush.msra.mxu0 %v2613
        %2906 = vmatpush.msra.mxu0 %v2605
        %2907 = vmatpush.msra.mxu0 %v2597
        %2908 = vmatpush.msra.mxu0 %v2589
        %2909 = vmatmul.f32.gmra.mxu0 %v351
        %v2910 = vpop.f32.mrf.mxu0
        %v2911 = vadd.f32 %v2891, %v2910
        %2912 = vdwg.mxu0
        %2913 = vmatpush.msra.mxu0 %v2582
        %2914 = vmatpush.msra.mxu0 %v2574
        %2915 = vmatpush.msra.mxu0 %v2566
        %2916 = vmatpush.msra.mxu0 %v2558
        %2917 = vmatpush.msra.mxu0 %v2550
        %2918 = vmatpush.msra.mxu0 %v2542
        %2919 = vmatpush.msra.mxu0 %v2534
        %2920 = vmatpush.msra.mxu0 %v2526
        %2921 = vmatpush.msra.mxu0 %v2518
        %2922 = vmatpush.msra.mxu0 %v2510
        %2923 = vmatpush.msra.mxu0 %v2502
        %2924 = vmatpush.msra.mxu0 %v2494
        %2925 = vmatpush.msra.mxu0 %v2486
        %2926 = vmatpush.msra.mxu0 %v2478
        %2927 = vmatpush.msra.mxu0 %v2470
        %2928 = vmatpush.msra.mxu0 %v2462
        %2929 = vmatmul.f32.gmra.mxu0 %v350
        %v2930 = vpop.f32.mrf.mxu0
        %v2931 = vadd.f32 0.0, %v2930
        %2932 = vdwg.mxu0
        %2933 = vmatpush.msra.mxu0 %v2710
        %2934 = vmatpush.msra.mxu0 %v2702
        %2935 = vmatpush.msra.mxu0 %v2694
        %2936 = vmatpush.msra.mxu0 %v2686
        %2937 = vmatpush.msra.mxu0 %v2678
        %2938 = vmatpush.msra.mxu0 %v2670
        %2939 = vmatpush.msra.mxu0 %v2662
        %2940 = vmatpush.msra.mxu0 %v2654
        %2941 = vmatpush.msra.mxu0 %v2646
        %2942 = vmatpush.msra.mxu0 %v2638
        %2943 = vmatpush.msra.mxu0 %v2630
        %2944 = vmatpush.msra.mxu0 %v2622
        %2945 = vmatpush.msra.mxu0 %v2614
        %2946 = vmatpush.msra.mxu0 %v2606
        %2947 = vmatpush.msra.mxu0 %v2598
        %2948 = vmatpush.msra.mxu0 %v2590
        %2949 = vmatmul.f32.gmra.mxu0 %v351
        %v2950 = vpop.f32.mrf.mxu0
        %v2951 = vadd.f32 %v2931, %v2950
        %2952 = vdwg.mxu0
        %2953 = vmatpush.msra.mxu0 %v2583
        %2954 = vmatpush.msra.mxu0 %v2575
        %2955 = vmatpush.msra.mxu0 %v2567
        %2956 = vmatpush.msra.mxu0 %v2559
        %2957 = vmatpush.msra.mxu0 %v2551
        %2958 = vmatpush.msra.mxu0 %v2543
        %2959 = vmatpush.msra.mxu0 %v2535
        %2960 = vmatpush.msra.mxu0 %v2527
        %2961 = vmatpush.msra.mxu0 %v2519
        %2962 = vmatpush.msra.mxu0 %v2511
        %2963 = vmatpush.msra.mxu0 %v2503
        %2964 = vmatpush.msra.mxu0 %v2495
        %2965 = vmatpush.msra.mxu0 %v2487
        %2966 = vmatpush.msra.mxu0 %v2479
        %2967 = vmatpush.msra.mxu0 %v2471
        %2968 = vmatpush.msra.mxu0 %v2463
        %2969 = vmatmul.f32.gmra.mxu0 %v350
        %v2970 = vpop.f32.mrf.mxu0
        %v2971 = vadd.f32 0.0, %v2970
        %2972 = vdwg.mxu0
        %2973 = vmatpush.msra.mxu0 %v2711
        %2974 = vmatpush.msra.mxu0 %v2703
        %2975 = vmatpush.msra.mxu0 %v2695
        %2976 = vmatpush.msra.mxu0 %v2687
        %2977 = vmatpush.msra.mxu0 %v2679
        %2978 = vmatpush.msra.mxu0 %v2671
        %2979 = vmatpush.msra.mxu0 %v2663
        %2980 = vmatpush.msra.mxu0 %v2655
        %2981 = vmatpush.msra.mxu0 %v2647
        %2982 = vmatpush.msra.mxu0 %v2639
        %2983 = vmatpush.msra.mxu0 %v2631
        %2984 = vmatpush.msra.mxu0 %v2623
        %2985 = vmatpush.msra.mxu0 %v2615
        %2986 = vmatpush.msra.mxu0 %v2607
        %2987 = vmatpush.msra.mxu0 %v2599
        %2988 = vmatpush.msra.mxu0 %v2591
        %2989 = vmatmul.f32.gmra.mxu0 %v351
        %v2990 = vpop.f32.mrf.mxu0
        %v2991 = vadd.f32 %v2971, %v2990
        %2992 = vdwg.mxu0
        %2993 = vmatpush.msra.mxu0 %v2584
        %2994 = vmatpush.msra.mxu0 %v2576
        %2995 = vmatpush.msra.mxu0 %v2568
        %2996 = vmatpush.msra.mxu0 %v2560
        %2997 = vmatpush.msra.mxu0 %v2552
        %2998 = vmatpush.msra.mxu0 %v2544
        %2999 = vmatpush.msra.mxu0 %v2536
        %3000 = vmatpush.msra.mxu0 %v2528
        %3001 = vmatpush.msra.mxu0 %v2520
        %3002 = vmatpush.msra.mxu0 %v2512
        %3003 = vmatpush.msra.mxu0 %v2504
        %3004 = vmatpush.msra.mxu0 %v2496
        %3005 = vmatpush.msra.mxu0 %v2488
        %3006 = vmatpush.msra.mxu0 %v2480
        %3007 = vmatpush.msra.mxu0 %v2472
        %3008 = vmatpush.msra.mxu0 %v2464
        %3009 = vmatmul.f32.gmra.mxu0 %v350
        %v3010 = vpop.f32.mrf.mxu0
        %v3011 = vadd.f32 0.0, %v3010
        %3012 = vdwg.mxu0
        %3013 = vmatpush.msra.mxu0 %v2712
        %3014 = vmatpush.msra.mxu0 %v2704
        %3015 = vmatpush.msra.mxu0 %v2696
        %3016 = vmatpush.msra.mxu0 %v2688
        %3017 = vmatpush.msra.mxu0 %v2680
        %3018 = vmatpush.msra.mxu0 %v2672
        %3019 = vmatpush.msra.mxu0 %v2664
        %3020 = vmatpush.msra.mxu0 %v2656
        %3021 = vmatpush.msra.mxu0 %v2648
        %3022 = vmatpush.msra.mxu0 %v2640
        %3023 = vmatpush.msra.mxu0 %v2632
        %3024 = vmatpush.msra.mxu0 %v2624
        %3025 = vmatpush.msra.mxu0 %v2616
        %3026 = vmatpush.msra.mxu0 %v2608
        %3027 = vmatpush.msra.mxu0 %v2600
        %3028 = vmatpush.msra.mxu0 %v2592
        %3029 = vmatmul.f32.gmra.mxu0 %v351
        %v3030 = vpop.f32.mrf.mxu0
        %v3031 = vadd.f32 %v3011, %v3030
        %3032 = vdwg.mxu0
        %v3033 = vmax.f32 %v2751, %v2791
        %v3034 = vmax.f32 %v3033, %v2831
        %v3035 = vmax.f32 %v3034, %v2871
        %v3036 = vmax.f32 %v3035, %v2911
        %v3037 = vmax.f32 %v3036, %v2951
        %v3038 = vmax.f32 %v3037, %v2991
        %v3039 = vmax.f32 %v3038, %v3031
        %v3040 = vld [vmem:[%s3] sm:$0xff]
        %v3041 = vld [vmem:[%s3 + $0x8] sm:$0xff]
        %v3042 = vld [vmem:[%s4] sm:$0xff]
        %v3043 = vld [vmem:[%s4 + $0x8] sm:$0xff]
        %vm3044 = vcmask 64512
        %v3046 = vsel %vm3044, %v3042, 0
        %v3049 = vsel %vm3044, %v3043, 0
        %3051 = vmatpush.msra.mxu0 0.0
        %3052 = vmatpush.msra.mxu0 0.0
        %3053 = vmatpush.msra.mxu0 0.0
        %3054 = vmatpush.msra.mxu0 0.0
        %3055 = vmatpush.msra.mxu0 0.0
        %3056 = vmatpush.msra.mxu0 0.0
        %3057 = vmatpush.msra.mxu0 0.0
        %3058 = vmatpush.msra.mxu0 0.0
        %3059 = vmatpush.msra.mxu0 0.0
        %3060 = vmatpush.msra.mxu0 0.0
        %3061 = vmatpush.msra.mxu0 0.0
        %3062 = vmatpush.msra.mxu0 0.0
        %3063 = vmatpush.msra.mxu0 0.0
        %3064 = vmatpush.msra.mxu0 0.0
        %3065 = vmatpush.msra.mxu0 0.0
        %3066 = vmatpush.msra.mxu0 %v3039
        %3067 = vmatmul.f32.gmra.mxu0 %v3046
        %v3068 = vpop.f32.mrf.mxu0
        %v3069 = vadd.f32 0.0, %v3068
        %3070 = vmatmul.f32.gmra.mxu0 %v3049
        %v3071 = vpop.f32.mrf.mxu0
        %v3072 = vadd.f32 0.0, %v3071
        %3073 = vdwg.mxu0
        %v3075 = vsel %vm3044, %v3040, 0
        %v3078 = vsel %vm3044, %v3041, 0
        %3080 = vmatpush.msra.mxu0 0.0
        %3081 = vmatpush.msra.mxu0 0.0
        %3082 = vmatpush.msra.mxu0 0.0
        %3083 = vmatpush.msra.mxu0 0.0
        %3084 = vmatpush.msra.mxu0 0.0
        %3085 = vmatpush.msra.mxu0 0.0
        %3086 = vmatpush.msra.mxu0 0.0
        %3087 = vmatpush.msra.mxu0 0.0
        %3088 = vmatpush.msra.mxu0 0.0
        %3089 = vmatpush.msra.mxu0 0.0
        %3090 = vmatpush.msra.mxu0 0.0
        %3091 = vmatpush.msra.mxu0 0.0
        %3092 = vmatpush.msra.mxu0 0.0
        %3093 = vmatpush.msra.mxu0 0.0
        %3094 = vmatpush.msra.mxu0 0.0
        %3095 = vmatpush.msra.mxu0 %v357
        %3096 = vmatmul.f32.gmra.mxu0 %v3075
        %v3097 = vpop.f32.mrf.mxu0
        %v3098 = vadd.f32 %v3069, %v3097
        %3099 = vmatmul.f32.gmra.mxu0 %v3078
        %v3100 = vpop.f32.mrf.mxu0
        %v3101 = vadd.f32 %v3072, %v3100
        %3102 = vdwg.mxu0
        %v3103 = vld [vmem:[%s5] sm:$0xff]
        %v3104 = vld [vmem:[%s5 + $0x8] sm:$0xff]
        %3106 = vset.pattern.permute.xlu0 0
        %3107 = vperm.xlu0 %3106, %v3103
        %v3108 = vpop.permute.xlu0 %3107
        %3111 = vset.pattern.permute.xlu0 0
        %3112 = vperm.xlu0 %3111, %v3104
        %v3113 = vpop.permute.xlu0 %3112
        %v3115 = vadd.f32 %v3098, %v3108
        %v3116 = vadd.f32 %v3101, %v3113
        %v3117 = vmax.f32 %v3115, 0.0
        %v3118 = vmax.f32 %v3116, 0.0
        %3119 = vst [vmem:[%s344] sm:$0xff] %v3117
        %3120 = vst [vmem:[%s344 + $0x8] sm:$0xff] %v3118
        %s3121 = sand.u32 %s193, 1
        %s3122 = scalar_lea.sflag [#allocation5], %s3121
        %s3123 = sand.u32 %s193, 1
        %s3124 = smul.addr %s3123, 16
        %s3125 = scalar_lea.vmem [#allocation8], %s3124
        // Predicated region
        $region53: #{tpu_custom_call.1} parent=43 // pred_check
          %p3126 = pneg %p203
        $region54: #{tpu_custom_call.1} parent=43 // pred_check_branch
          %3128 = sbr.rel (%p3126) target = $region56
        $region55: #{tpu_custom_call.1} parent=43 // pred_region
          %3130 = vsyncadd %s3122, 0
          %s3131 = smul.addr %s30, 4
          %s3132 = sadd.s32 %s31, %s3131
          %s3133 = smul.addr %s3132, 8
          %s3134 = scalar_lea.hbm %s6, %s3133
          %s3135 = sshll.u32 %s3125, 4
          %s3136 = int_to_ptr.vmem [resolvable:$true] %s3135
          %s3137 = sshll.u32 %s3134, 4
          %s3138 = int_to_ptr.hbm [resolvable:$true] %s3137
          %3143 = dma.vmem_to_hbm [thread:$0]  %s3136, 256, %s3138, %s3122, 128, 256, 8
        $region56: #{tpu_custom_call.1} parent=43 // pred_fallthru
          _
      $region44: #{tpu_custom_call.1} parent=5 // pred_fallthru
        _
      %p3144 = scmp.le.s32.totalorder 2, %s21
      // Predicated region
      $region57: #{tpu_custom_call.1} parent=5 // pred_check
        %p3145 = pneg %p3144
      $region58: #{tpu_custom_call.1} parent=5 // pred_check_branch
        %3147 = sbr.rel (%p3145) target = $region60
      $region59: #{tpu_custom_call.1} parent=5 // pred_region
        %s3148 = ssub.s32 %s21, 2
        // Predicated region
        $region61: #{tpu_custom_call.1} parent=59 // pred_check
          %p3149 = pneg %p209
        $region62: #{tpu_custom_call.1} parent=59 // pred_check_branch
          %3151 = sbr.rel (%p3149) target = $region64
        $region63: #{tpu_custom_call.1} parent=59 // pred_region
          %s3152 = sand.u32 %s194, 1
          %s3153 = scalar_lea.sflag [#allocation5], %s3152
          %s3154 = sand.u32 %s194, 1
          %s3155 = smul.addr %s3154, 16
          %s3156 = scalar_lea.vmem [#allocation8], %s3155
          %3158 = dma.done %s3153, 256
        $region64: #{tpu_custom_call.1} parent=59 // pred_fallthru
          _
      $region60: #{tpu_custom_call.1} parent=5 // pred_fallthru
        _
    $region6: #{tpu_custom_call.1} parent=1 // loop_footer
      %s25 = sadd.s32 1, %s21
    $region7: #{tpu_custom_call.1} parent=1 // loop_footer_branch
      %20 = sbr.rel target = $region3
    $region8: #{tpu_custom_call.1} parent=1 // loop_exit
      _
    %3159 = vsyncpa [#allocation4], 1
    %s3160 = scalar_lea.sflag [#allocation4], 1
    %3161 = vsyncpa %s3160, 1
    %3162 = vsyncpa [#allocation7], 1
    %s3163 = scalar_lea.sflag [#allocation7], 1
    %3164 = vsyncpa %s3163, 1
    %3165 = vsyncpa [#allocation5], 1
    %s3166 = scalar_lea.sflag [#allocation5], 1
    %3167 = vsyncpa %s3166, 1

</llo_original>
